<compile_context>
chip_gen: v7x
topology: tpu7x:2x2x1
jax: 0.10.0
libtpu: 0.0.40
codegen_flags: <defaults>
</compile_context>

<pallas_src>
import jax
import jax.numpy as jnp
from jax.experimental import pallas as pl
from jax.experimental.pallas import tpu as pltpu

ENCODER_OUTPUT_CHANNELS = 8


# ------------------------------ Pallas kernel -------------------------------
def _fused_encoder_kernel(x_ref, w1_ref, b1_ref, w2_ref, b2_ref, o_ref, h_ref):
    """Fused conv1+ReLU+conv2+sigmoid for one image.

    x_ref : (H+2, W+2, 3)        f32  spatially padded NHWC input (one image)
    w1_ref: (9, 3, 16)           bf16 conv1 weights, tap-major (kh*3+kw, Cin, Cout)
    b1_ref: (1, 16)              f32
    w2_ref: (9, 16, 8)           bf16 conv2 weights, tap-major
    b2_ref: (1, 8)               f32
    o_ref : (8, H//4 * W//4)     f32  channel-major output (lane-dense store)
    h_ref : (H//2+2, W//2+2, 16) f32  VMEM scratch: zero-padded conv1 activation
    """
    Hp, Wp, _ = x_ref.shape
    H1 = (Hp - 3) // 2 + 1
    W1 = (Wp - 3) // 2 + 1
    H2 = (H1 - 1) // 2 + 1
    W2 = (W1 - 1) // 2 + 1
    C1 = w1_ref.shape[-1]
    C2 = w2_ref.shape[-1]

    # ---- conv1 (3->16, k3 s2 p1): 9 shifted stride-2 taps, each a small GEMM.
    # Strides hit the outer (H) and sublane (W) dims only; channels sit on lanes.
    acc1 = jnp.zeros((H1 * W1, C1), jnp.float32)
    for kh in range(3):
        for kw in range(3):
            tap = x_ref[pl.ds(kh, H1, 2), pl.ds(kw, W1, 2), :]       # (H1, W1, 3)
            tap = tap.reshape(H1 * W1, 3).astype(jnp.bfloat16)
            acc1 += jnp.dot(tap, w1_ref[kh * 3 + kw],
                            preferred_element_type=jnp.float32)

    h1 = jnp.maximum(acc1 + b1_ref[...], 0.0)                        # f32 ReLU

    # conv1 activation stays in VMEM (never written to HBM).  Zero only the
    # 1-pixel border (conv2's zero padding); the interior is fully overwritten
    # below, so the scratch is completely (re)defined on every grid step --
    # correct regardless of how the parallel batch axis is split across cores,
    # and cheaper than clearing the whole scratch and rewriting the interior.
    zrow = jnp.zeros((1, W1 + 2, C1), jnp.float32)
    zcol = jnp.zeros((H1 + 2, 1, C1), jnp.float32)
    h_ref[0:1, :, :] = zrow
    h_ref[H1 + 1:H1 + 2, :, :] = zrow
    h_ref[:, 0:1, :] = zcol
    h_ref[:, W1 + 1:W1 + 2, :] = zcol
    h_ref[1:H1 + 1, 1:W1 + 1, :] = h1.reshape(H1, W1, C1)

    # ---- conv2 (16->8, k3 s2 p1): same 9-tap scheme over the VMEM scratch.
    acc2 = jnp.zeros((H2 * W2, C2), jnp.float32)
    for kh in range(3):
        for kw in range(3):
            tap = h_ref[pl.ds(kh, H2, 2), pl.ds(kw, W2, 2), :]       # (H2, W2, 16)
            tap = tap.reshape(H2 * W2, C1).astype(jnp.bfloat16)
            acc2 += jnp.dot(tap, w2_ref[kh * 3 + kw],
                            preferred_element_type=jnp.float32)

    z = acc2 + b2_ref[...]                                           # f32 epilogue
    y = pl.reciprocal(1.0 + jnp.exp(-z), approx=True)                # EUP sigmoid

    # Channel-major store: last dim = H2*W2 is the lane axis (lane-dense for
    # real image sizes) and directly matches the NCHW output layout; the small
    # (H2*W2, 8) -> (8, H2*W2) transpose rides the XLU slot.
    o_ref[...] = y.T.astype(o_ref.dtype)


# --------------------------------- wrapper ----------------------------------
def color_encoder_forward(params, x):
    """ColorEncoder.forward: x (N, 3, H, W) float32 -> (N, 8, H//4, W//4)."""
    N, Cin, H, W = x.shape
    assert Cin == 3 and H % 4 == 0 and W % 4 == 0, (Cin, H, W)
    H1, W1 = H // 2, W // 2
    H2, W2 = H // 4, W // 4
    Hp, Wp = H + 2, W + 2
    Co = ENCODER_OUTPUT_CHANNELS

    # Single boundary transpose to NHWC with conv1's zero padding baked in
    # (XLA fuses transpose+pad into one pass over the input).
    xp = jnp.pad(jnp.transpose(x, (0, 2, 3, 1)),
                 ((0, 0), (1, 1), (1, 1), (0, 0)))

    # Tap-major weights (kh*3+kw, Cin, Cout), bf16 for the MXU; biases stay f32.
    w1t = jnp.transpose(params["w1"], (2, 3, 1, 0)).reshape(9, 3, 16)
    w2t = jnp.transpose(params["w2"], (2, 3, 1, 0)).reshape(9, 16, Co)
    w1t = w1t.astype(jnp.bfloat16)
    w2t = w2t.astype(jnp.bfloat16)
    b1 = params["b1"].reshape(1, 16).astype(jnp.float32)
    b2 = params["b2"].reshape(1, Co).astype(jnp.float32)

    cost = pl.CostEstimate(
        flops=2 * N * (H1 * W1 * 27 * 16 + H2 * W2 * 144 * Co),
        transcendentals=N * H2 * W2 * Co,
        bytes_accessed=(xp.size * 4 + N * Co * H2 * W2 * 4
                        + (w1t.size + w2t.size) * 2 + (b1.size + b2.size) * 4),
    )

    grid_spec = pltpu.PrefetchScalarGridSpec(
        num_scalar_prefetch=0,
        grid=(N,),
        in_specs=[
            pl.BlockSpec((None, Hp, Wp, 3), lambda n: (n, 0, 0, 0)),
            pl.BlockSpec((9, 3, 16), lambda n: (0, 0, 0)),   # resident (const map)
            pl.BlockSpec((1, 16), lambda n: (0, 0)),
            pl.BlockSpec((9, 16, Co), lambda n: (0, 0, 0)),
            pl.BlockSpec((1, Co), lambda n: (0, 0)),
        ],
        out_specs=pl.BlockSpec((None, Co, H2 * W2), lambda n: (n, 0, 0)),
        scratch_shapes=[pltpu.VMEM((H1 + 2, W1 + 2, 16), jnp.float32)],
    )

    out = pl.pallas_call(
        _fused_encoder_kernel,
        out_shape=jax.ShapeDtypeStruct((N, Co, H2 * W2), jnp.float32),
        grid_spec=grid_spec,
        compiler_params=pltpu.CompilerParams(
            dimension_semantics=("parallel",),   # batch axis -> both v7x TCs
            vmem_limit_bytes=32 * 1024 * 1024,
        ),
        cost_estimate=cost,
    )(xp, w1t, b1, w2t, b2)

    # (N, 8, H2*W2) -> (N, 8, H2, W2): free reshape, no output transpose needed.
    # TODO(synk): for megapixel inputs add a spatial row-tile grid axis with a
    # halo (manual DMA) so per-step VMEM stays bounded; batch-only tiling is
    # sufficient at the small shapes exercised here.
    return out.reshape(N, Co, H2, W2)


# --------------------------- parameters / reference -------------------------
def init_color_encoder_params(key):
    """Deterministic init matching nn.Conv2d default shapes (PyTorch uniform-ish)."""
    k1, k2, k3, k4 = jax.random.split(key, 4)
    fan1 = 3 * 3 * 3
    fan2 = 16 * 3 * 3
    bnd1 = 1.0 / (fan1 ** 0.5)
    bnd2 = 1.0 / (fan2 ** 0.5)
    return {
        "w1": jax.random.uniform(k1, (16, 3, 3, 3), jnp.float32, -bnd1, bnd1),
        "b1": jax.random.uniform(k2, (16,), jnp.float32, -bnd1, bnd1),
        "w2": jax.random.uniform(
            k3, (ENCODER_OUTPUT_CHANNELS, 16, 3, 3), jnp.float32, -bnd2, bnd2),
        "b2": jax.random.uniform(
            k4, (ENCODER_OUTPUT_CHANNELS,), jnp.float32, -bnd2, bnd2),
    }


def _reference_forward(params, x):
    def conv(x, w, b):
        y = jax.lax.conv_general_dilated(
            x, w, window_strides=(2, 2), padding=[(1, 1), (1, 1)],
            dimension_numbers=("NCHW", "OIHW", "NCHW"),
        )
        return y + b.reshape(1, -1, 1, 1)

    h = jnp.maximum(conv(x, params["w1"], params["b1"]), 0.0)
    return jax.nn.sigmoid(conv(h, params["w2"], params["b2"]))


# ----------------------------------- main ------------------------------------
if __name__ == "__main__":
    key = jax.random.PRNGKey(0)
    k_param, k_x = jax.random.split(key)
    params = init_color_encoder_params(k_param)

    # Small NCHW input consistent with the module: batch=2, channels=3, spatial=32.
    x = jax.random.normal(k_x, (2, 3, 32, 32), jnp.float32)

    fwd = jax.jit(color_encoder_forward)
    out = jax.block_until_ready(fwd(params, x))
    assert out.shape == (2, ENCODER_OUTPUT_CHANNELS, 8, 8), out.shape

    ref = jax.block_until_ready(_reference_forward(params, x))
    # bf16 MXU operands -> loosened tolerance vs the f32 XLA reference.
    err = float(jnp.max(jnp.abs(out - ref)))
    assert jnp.allclose(out, ref, atol=2e-2, rtol=2e-2), err

    print("KERNEL_OK")
</pallas_src>

<mosaic_0001>
module attributes {stable_mosaic.version = 11 : i64} {
  func.func @_fused_encoder_kernel(%arg0: i32, %arg1: memref<1x34x34x3xf32, #tpu.memory_space<vmem>>, %arg2: memref<9x3x16xbf16, #tpu.memory_space<vmem>>, %arg3: memref<1x16xf32, #tpu.memory_space<vmem>>, %arg4: memref<9x16x8xbf16, #tpu.memory_space<vmem>>, %arg5: memref<1x8xf32, #tpu.memory_space<vmem>>, %arg6: memref<1x8x64xf32, #tpu.memory_space<vmem>>, %arg7: memref<18x18x16xf32, #tpu.memory_space<vmem>>) attributes {dimension_semantics = [#tpu.dimension_semantics<parallel>], iteration_bounds = array<i64: 2>, scalar_prefetch = 0 : i64, scratch_operands = 1 : i64, tpu.core_type = #tpu.core_type<tc>, window_params = [{transform_indices = @transform_0, window_bounds = array<i64: 1, 34, 34, 3>}, {pipeline_mode = #tpu.pipeline_mode<synchronous>, transform_indices = @transform_1, window_bounds = array<i64: 9, 3, 16>}, {pipeline_mode = #tpu.pipeline_mode<synchronous>, transform_indices = @transform_2, window_bounds = array<i64: 1, 16>}, {pipeline_mode = #tpu.pipeline_mode<synchronous>, transform_indices = @transform_3, window_bounds = array<i64: 9, 16, 8>}, {pipeline_mode = #tpu.pipeline_mode<synchronous>, transform_indices = @transform_4, window_bounds = array<i64: 1, 8>}, {transform_indices = @transform_5, window_bounds = array<i64: 1, 8, 64>}]} {
    %cst = arith.constant 0.000000e+00 : f32
    %0 = vector.broadcast %cst : f32 to vector<256x16xf32>
    %c0 = arith.constant 0 : index
    %c0_0 = arith.constant 0 : index
    %c0_1 = arith.constant 0 : index
    %c0_2 = arith.constant 0 : index
    %1 = tpu.strided_load %arg1[%c0, %c0_0, %c0_1, %c0_2] {strides = array<i32: 1, 2, 2, 1>} : memref<1x34x34x3xf32, #tpu.memory_space<vmem>>, vector<1x16x16x3xf32>
    %2 = vector.shape_cast %1 : vector<1x16x16x3xf32> to vector<16x16x3xf32>
    %3 = vector.shape_cast %2 : vector<16x16x3xf32> to vector<256x3xf32>
    %4 = arith.truncf %3 : vector<256x3xf32> to vector<256x3xbf16>
    %c0_3 = arith.constant 0 : index
    %c0_4 = arith.constant 0 : index
    %c0_5 = arith.constant 0 : index
    %5 = vector.load %arg2[%c0_3, %c0_4, %c0_5] : memref<9x3x16xbf16, #tpu.memory_space<vmem>>, vector<1x3x16xbf16>
    %6 = vector.shape_cast %5 : vector<1x3x16xbf16> to vector<3x16xbf16>
    %cst_6 = arith.constant dense<0.000000e+00> : vector<256x16xf32>
    %7 = tpu.matmul %4, %6, %cst_6 {dimension_numbers = #tpu.dot_dimension_numbers<[1], [0], [0], [1], [0, 0, 1, 1], [], []>} : vector<256x3xbf16>, vector<3x16xbf16>, vector<256x16xf32> -> vector<256x16xf32>
    %8 = arith.addf %0, %7 : vector<256x16xf32>
    %c0_7 = arith.constant 0 : index
    %c0_8 = arith.constant 0 : index
    %c1 = arith.constant 1 : index
    %c0_9 = arith.constant 0 : index
    %9 = tpu.strided_load %arg1[%c0_7, %c0_8, %c1, %c0_9] {strides = array<i32: 1, 2, 2, 1>} : memref<1x34x34x3xf32, #tpu.memory_space<vmem>>, vector<1x16x16x3xf32>
    %10 = vector.shape_cast %9 : vector<1x16x16x3xf32> to vector<16x16x3xf32>
    %11 = vector.shape_cast %10 : vector<16x16x3xf32> to vector<256x3xf32>
    %12 = arith.truncf %11 : vector<256x3xf32> to vector<256x3xbf16>
    %c1_10 = arith.constant 1 : index
    %c0_11 = arith.constant 0 : index
    %c0_12 = arith.constant 0 : index
    %13 = vector.load %arg2[%c1_10, %c0_11, %c0_12] : memref<9x3x16xbf16, #tpu.memory_space<vmem>>, vector<1x3x16xbf16>
    %14 = vector.shape_cast %13 : vector<1x3x16xbf16> to vector<3x16xbf16>
    %cst_13 = arith.constant dense<0.000000e+00> : vector<256x16xf32>
    %15 = tpu.matmul %12, %14, %cst_13 {dimension_numbers = #tpu.dot_dimension_numbers<[1], [0], [0], [1], [0, 0, 1, 1], [], []>} : vector<256x3xbf16>, vector<3x16xbf16>, vector<256x16xf32> -> vector<256x16xf32>
    %16 = arith.addf %8, %15 : vector<256x16xf32>
    %c0_14 = arith.constant 0 : index
    %c0_15 = arith.constant 0 : index
    %c2 = arith.constant 2 : index
    %c0_16 = arith.constant 0 : index
    %17 = tpu.strided_load %arg1[%c0_14, %c0_15, %c2, %c0_16] {strides = array<i32: 1, 2, 2, 1>} : memref<1x34x34x3xf32, #tpu.memory_space<vmem>>, vector<1x16x16x3xf32>
    %18 = vector.shape_cast %17 : vector<1x16x16x3xf32> to vector<16x16x3xf32>
    %19 = vector.shape_cast %18 : vector<16x16x3xf32> to vector<256x3xf32>
    %20 = arith.truncf %19 : vector<256x3xf32> to vector<256x3xbf16>
    %c2_17 = arith.constant 2 : index
    %c0_18 = arith.constant 0 : index
    %c0_19 = arith.constant 0 : index
    %21 = vector.load %arg2[%c2_17, %c0_18, %c0_19] : memref<9x3x16xbf16, #tpu.memory_space<vmem>>, vector<1x3x16xbf16>
    %22 = vector.shape_cast %21 : vector<1x3x16xbf16> to vector<3x16xbf16>
    %cst_20 = arith.constant dense<0.000000e+00> : vector<256x16xf32>
    %23 = tpu.matmul %20, %22, %cst_20 {dimension_numbers = #tpu.dot_dimension_numbers<[1], [0], [0], [1], [0, 0, 1, 1], [], []>} : vector<256x3xbf16>, vector<3x16xbf16>, vector<256x16xf32> -> vector<256x16xf32>
    %24 = arith.addf %16, %23 : vector<256x16xf32>
    %c0_21 = arith.constant 0 : index
    %c1_22 = arith.constant 1 : index
    %c0_23 = arith.constant 0 : index
    %c0_24 = arith.constant 0 : index
    %25 = tpu.strided_load %arg1[%c0_21, %c1_22, %c0_23, %c0_24] {strides = array<i32: 1, 2, 2, 1>} : memref<1x34x34x3xf32, #tpu.memory_space<vmem>>, vector<1x16x16x3xf32>
    %26 = vector.shape_cast %25 : vector<1x16x16x3xf32> to vector<16x16x3xf32>
    %27 = vector.shape_cast %26 : vector<16x16x3xf32> to vector<256x3xf32>
    %28 = arith.truncf %27 : vector<256x3xf32> to vector<256x3xbf16>
    %c3 = arith.constant 3 : index
    %c0_25 = arith.constant 0 : index
    %c0_26 = arith.constant 0 : index
    %29 = vector.load %arg2[%c3, %c0_25, %c0_26] : memref<9x3x16xbf16, #tpu.memory_space<vmem>>, vector<1x3x16xbf16>
    %30 = vector.shape_cast %29 : vector<1x3x16xbf16> to vector<3x16xbf16>
    %cst_27 = arith.constant dense<0.000000e+00> : vector<256x16xf32>
    %31 = tpu.matmul %28, %30, %cst_27 {dimension_numbers = #tpu.dot_dimension_numbers<[1], [0], [0], [1], [0, 0, 1, 1], [], []>} : vector<256x3xbf16>, vector<3x16xbf16>, vector<256x16xf32> -> vector<256x16xf32>
    %32 = arith.addf %24, %31 : vector<256x16xf32>
    %c0_28 = arith.constant 0 : index
    %c1_29 = arith.constant 1 : index
    %c1_30 = arith.constant 1 : index
    %c0_31 = arith.constant 0 : index
    %33 = tpu.strided_load %arg1[%c0_28, %c1_29, %c1_30, %c0_31] {strides = array<i32: 1, 2, 2, 1>} : memref<1x34x34x3xf32, #tpu.memory_space<vmem>>, vector<1x16x16x3xf32>
    %34 = vector.shape_cast %33 : vector<1x16x16x3xf32> to vector<16x16x3xf32>
    %35 = vector.shape_cast %34 : vector<16x16x3xf32> to vector<256x3xf32>
    %36 = arith.truncf %35 : vector<256x3xf32> to vector<256x3xbf16>
    %c4 = arith.constant 4 : index
    %c0_32 = arith.constant 0 : index
    %c0_33 = arith.constant 0 : index
    %37 = vector.load %arg2[%c4, %c0_32, %c0_33] : memref<9x3x16xbf16, #tpu.memory_space<vmem>>, vector<1x3x16xbf16>
    %38 = vector.shape_cast %37 : vector<1x3x16xbf16> to vector<3x16xbf16>
    %cst_34 = arith.constant dense<0.000000e+00> : vector<256x16xf32>
    %39 = tpu.matmul %36, %38, %cst_34 {dimension_numbers = #tpu.dot_dimension_numbers<[1], [0], [0], [1], [0, 0, 1, 1], [], []>} : vector<256x3xbf16>, vector<3x16xbf16>, vector<256x16xf32> -> vector<256x16xf32>
    %40 = arith.addf %32, %39 : vector<256x16xf32>
    %c0_35 = arith.constant 0 : index
    %c1_36 = arith.constant 1 : index
    %c2_37 = arith.constant 2 : index
    %c0_38 = arith.constant 0 : index
    %41 = tpu.strided_load %arg1[%c0_35, %c1_36, %c2_37, %c0_38] {strides = array<i32: 1, 2, 2, 1>} : memref<1x34x34x3xf32, #tpu.memory_space<vmem>>, vector<1x16x16x3xf32>
    %42 = vector.shape_cast %41 : vector<1x16x16x3xf32> to vector<16x16x3xf32>
    %43 = vector.shape_cast %42 : vector<16x16x3xf32> to vector<256x3xf32>
    %44 = arith.truncf %43 : vector<256x3xf32> to vector<256x3xbf16>
    %c5 = arith.constant 5 : index
    %c0_39 = arith.constant 0 : index
    %c0_40 = arith.constant 0 : index
    %45 = vector.load %arg2[%c5, %c0_39, %c0_40] : memref<9x3x16xbf16, #tpu.memory_space<vmem>>, vector<1x3x16xbf16>
    %46 = vector.shape_cast %45 : vector<1x3x16xbf16> to vector<3x16xbf16>
    %cst_41 = arith.constant dense<0.000000e+00> : vector<256x16xf32>
    %47 = tpu.matmul %44, %46, %cst_41 {dimension_numbers = #tpu.dot_dimension_numbers<[1], [0], [0], [1], [0, 0, 1, 1], [], []>} : vector<256x3xbf16>, vector<3x16xbf16>, vector<256x16xf32> -> vector<256x16xf32>
    %48 = arith.addf %40, %47 : vector<256x16xf32>
    %c0_42 = arith.constant 0 : index
    %c2_43 = arith.constant 2 : index
    %c0_44 = arith.constant 0 : index
    %c0_45 = arith.constant 0 : index
    %49 = tpu.strided_load %arg1[%c0_42, %c2_43, %c0_44, %c0_45] {strides = array<i32: 1, 2, 2, 1>} : memref<1x34x34x3xf32, #tpu.memory_space<vmem>>, vector<1x16x16x3xf32>
    %50 = vector.shape_cast %49 : vector<1x16x16x3xf32> to vector<16x16x3xf32>
    %51 = vector.shape_cast %50 : vector<16x16x3xf32> to vector<256x3xf32>
    %52 = arith.truncf %51 : vector<256x3xf32> to vector<256x3xbf16>
    %c6 = arith.constant 6 : index
    %c0_46 = arith.constant 0 : index
    %c0_47 = arith.constant 0 : index
    %53 = vector.load %arg2[%c6, %c0_46, %c0_47] : memref<9x3x16xbf16, #tpu.memory_space<vmem>>, vector<1x3x16xbf16>
    %54 = vector.shape_cast %53 : vector<1x3x16xbf16> to vector<3x16xbf16>
    %cst_48 = arith.constant dense<0.000000e+00> : vector<256x16xf32>
    %55 = tpu.matmul %52, %54, %cst_48 {dimension_numbers = #tpu.dot_dimension_numbers<[1], [0], [0], [1], [0, 0, 1, 1], [], []>} : vector<256x3xbf16>, vector<3x16xbf16>, vector<256x16xf32> -> vector<256x16xf32>
    %56 = arith.addf %48, %55 : vector<256x16xf32>
    %c0_49 = arith.constant 0 : index
    %c2_50 = arith.constant 2 : index
    %c1_51 = arith.constant 1 : index
    %c0_52 = arith.constant 0 : index
    %57 = tpu.strided_load %arg1[%c0_49, %c2_50, %c1_51, %c0_52] {strides = array<i32: 1, 2, 2, 1>} : memref<1x34x34x3xf32, #tpu.memory_space<vmem>>, vector<1x16x16x3xf32>
    %58 = vector.shape_cast %57 : vector<1x16x16x3xf32> to vector<16x16x3xf32>
    %59 = vector.shape_cast %58 : vector<16x16x3xf32> to vector<256x3xf32>
    %60 = arith.truncf %59 : vector<256x3xf32> to vector<256x3xbf16>
    %c7 = arith.constant 7 : index
    %c0_53 = arith.constant 0 : index
    %c0_54 = arith.constant 0 : index
    %61 = vector.load %arg2[%c7, %c0_53, %c0_54] : memref<9x3x16xbf16, #tpu.memory_space<vmem>>, vector<1x3x16xbf16>
    %62 = vector.shape_cast %61 : vector<1x3x16xbf16> to vector<3x16xbf16>
    %cst_55 = arith.constant dense<0.000000e+00> : vector<256x16xf32>
    %63 = tpu.matmul %60, %62, %cst_55 {dimension_numbers = #tpu.dot_dimension_numbers<[1], [0], [0], [1], [0, 0, 1, 1], [], []>} : vector<256x3xbf16>, vector<3x16xbf16>, vector<256x16xf32> -> vector<256x16xf32>
    %64 = arith.addf %56, %63 : vector<256x16xf32>
    %c0_56 = arith.constant 0 : index
    %c2_57 = arith.constant 2 : index
    %c2_58 = arith.constant 2 : index
    %c0_59 = arith.constant 0 : index
    %65 = tpu.strided_load %arg1[%c0_56, %c2_57, %c2_58, %c0_59] {strides = array<i32: 1, 2, 2, 1>} : memref<1x34x34x3xf32, #tpu.memory_space<vmem>>, vector<1x16x16x3xf32>
    %66 = vector.shape_cast %65 : vector<1x16x16x3xf32> to vector<16x16x3xf32>
    %67 = vector.shape_cast %66 : vector<16x16x3xf32> to vector<256x3xf32>
    %68 = arith.truncf %67 : vector<256x3xf32> to vector<256x3xbf16>
    %c8 = arith.constant 8 : index
    %c0_60 = arith.constant 0 : index
    %c0_61 = arith.constant 0 : index
    %69 = vector.load %arg2[%c8, %c0_60, %c0_61] : memref<9x3x16xbf16, #tpu.memory_space<vmem>>, vector<1x3x16xbf16>
    %70 = vector.shape_cast %69 : vector<1x3x16xbf16> to vector<3x16xbf16>
    %cst_62 = arith.constant dense<0.000000e+00> : vector<256x16xf32>
    %71 = tpu.matmul %68, %70, %cst_62 {dimension_numbers = #tpu.dot_dimension_numbers<[1], [0], [0], [1], [0, 0, 1, 1], [], []>} : vector<256x3xbf16>, vector<3x16xbf16>, vector<256x16xf32> -> vector<256x16xf32>
    %72 = arith.addf %64, %71 : vector<256x16xf32>
    %c0_63 = arith.constant 0 : index
    %c0_64 = arith.constant 0 : index
    %73 = vector.load %arg3[%c0_63, %c0_64] : memref<1x16xf32, #tpu.memory_space<vmem>>, vector<1x16xf32>
    %74 = vector.broadcast %73 : vector<1x16xf32> to vector<256x16xf32>
    %75 = arith.addf %72, %74 : vector<256x16xf32>
    %cst_65 = arith.constant 0.000000e+00 : f32
    %76 = vector.broadcast %cst_65 : f32 to vector<256x16xf32>
    %77 = arith.maximumf %75, %76 : vector<256x16xf32>
    %cst_66 = arith.constant 0.000000e+00 : f32
    %78 = vector.broadcast %cst_66 : f32 to vector<1x18x16xf32>
    %cst_67 = arith.constant 0.000000e+00 : f32
    %79 = vector.broadcast %cst_67 : f32 to vector<18x1x16xf32>
    %c0_68 = arith.constant 0 : index
    %c0_69 = arith.constant 0 : index
    %c0_70 = arith.constant 0 : index
    %80 = vector.load %arg7[%c0_68, %c0_69, %c0_70] : memref<18x18x16xf32, #tpu.memory_space<vmem>>, vector<1x18x16xf32>
    tpu.vector_store %arg7[%c0_68, %c0_69, %c0_70], %78 {strides = array<i32>} : memref<18x18x16xf32, #tpu.memory_space<vmem>>, vector<1x18x16xf32>,
    %c17 = arith.constant 17 : index
    %c0_71 = arith.constant 0 : index
    %c0_72 = arith.constant 0 : index
    %81 = vector.load %arg7[%c17, %c0_71, %c0_72] : memref<18x18x16xf32, #tpu.memory_space<vmem>>, vector<1x18x16xf32>
    tpu.vector_store %arg7[%c17, %c0_71, %c0_72], %78 {strides = array<i32>} : memref<18x18x16xf32, #tpu.memory_space<vmem>>, vector<1x18x16xf32>,
    %c0_73 = arith.constant 0 : index
    %c0_74 = arith.constant 0 : index
    %c0_75 = arith.constant 0 : index
    %82 = vector.load %arg7[%c0_73, %c0_74, %c0_75] : memref<18x18x16xf32, #tpu.memory_space<vmem>>, vector<18x1x16xf32>
    tpu.vector_store %arg7[%c0_73, %c0_74, %c0_75], %79 {strides = array<i32>} : memref<18x18x16xf32, #tpu.memory_space<vmem>>, vector<18x1x16xf32>,
    %c0_76 = arith.constant 0 : index
    %c17_77 = arith.constant 17 : index
    %c0_78 = arith.constant 0 : index
    %83 = vector.load %arg7[%c0_76, %c17_77, %c0_78] : memref<18x18x16xf32, #tpu.memory_space<vmem>>, vector<18x1x16xf32>
    tpu.vector_store %arg7[%c0_76, %c17_77, %c0_78], %79 {strides = array<i32>} : memref<18x18x16xf32, #tpu.memory_space<vmem>>, vector<18x1x16xf32>,
    %84 = vector.shape_cast %77 : vector<256x16xf32> to vector<16x16x16xf32>
    %c1_79 = arith.constant 1 : index
    %c1_80 = arith.constant 1 : index
    %c0_81 = arith.constant 0 : index
    %85 = vector.load %arg7[%c1_79, %c1_80, %c0_81] : memref<18x18x16xf32, #tpu.memory_space<vmem>>, vector<16x16x16xf32>
    tpu.vector_store %arg7[%c1_79, %c1_80, %c0_81], %84 {strides = array<i32>} : memref<18x18x16xf32, #tpu.memory_space<vmem>>, vector<16x16x16xf32>,
    %cst_82 = arith.constant 0.000000e+00 : f32
    %86 = vector.broadcast %cst_82 : f32 to vector<64x8xf32>
    %c0_83 = arith.constant 0 : index
    %c0_84 = arith.constant 0 : index
    %c0_85 = arith.constant 0 : index
    %87 = tpu.strided_load %arg7[%c0_83, %c0_84, %c0_85] {strides = array<i32: 2, 2, 1>} : memref<18x18x16xf32, #tpu.memory_space<vmem>>, vector<8x8x16xf32>
    %88 = vector.shape_cast %87 : vector<8x8x16xf32> to vector<64x16xf32>
    %89 = arith.truncf %88 : vector<64x16xf32> to vector<64x16xbf16>
    %c0_86 = arith.constant 0 : index
    %c0_87 = arith.constant 0 : index
    %c0_88 = arith.constant 0 : index
    %90 = vector.load %arg4[%c0_86, %c0_87, %c0_88] : memref<9x16x8xbf16, #tpu.memory_space<vmem>>, vector<1x16x8xbf16>
    %91 = vector.shape_cast %90 : vector<1x16x8xbf16> to vector<16x8xbf16>
    %cst_89 = arith.constant dense<0.000000e+00> : vector<64x8xf32>
    %92 = tpu.matmul %89, %91, %cst_89 {dimension_numbers = #tpu.dot_dimension_numbers<[1], [0], [0], [1], [0, 0, 1, 1], [], []>} : vector<64x16xbf16>, vector<16x8xbf16>, vector<64x8xf32> -> vector<64x8xf32>
    %93 = arith.addf %86, %92 : vector<64x8xf32>
    %c0_90 = arith.constant 0 : index
    %c1_91 = arith.constant 1 : index
    %c0_92 = arith.constant 0 : index
    %94 = tpu.strided_load %arg7[%c0_90, %c1_91, %c0_92] {strides = array<i32: 2, 2, 1>} : memref<18x18x16xf32, #tpu.memory_space<vmem>>, vector<8x8x16xf32>
    %95 = vector.shape_cast %94 : vector<8x8x16xf32> to vector<64x16xf32>
    %96 = arith.truncf %95 : vector<64x16xf32> to vector<64x16xbf16>
    %c1_93 = arith.constant 1 : index
    %c0_94 = arith.constant 0 : index
    %c0_95 = arith.constant 0 : index
    %97 = vector.load %arg4[%c1_93, %c0_94, %c0_95] : memref<9x16x8xbf16, #tpu.memory_space<vmem>>, vector<1x16x8xbf16>
    %98 = vector.shape_cast %97 : vector<1x16x8xbf16> to vector<16x8xbf16>
    %cst_96 = arith.constant dense<0.000000e+00> : vector<64x8xf32>
    %99 = tpu.matmul %96, %98, %cst_96 {dimension_numbers = #tpu.dot_dimension_numbers<[1], [0], [0], [1], [0, 0, 1, 1], [], []>} : vector<64x16xbf16>, vector<16x8xbf16>, vector<64x8xf32> -> vector<64x8xf32>
    %100 = arith.addf %93, %99 : vector<64x8xf32>
    %c0_97 = arith.constant 0 : index
    %c2_98 = arith.constant 2 : index
    %c0_99 = arith.constant 0 : index
    %101 = tpu.strided_load %arg7[%c0_97, %c2_98, %c0_99] {strides = array<i32: 2, 2, 1>} : memref<18x18x16xf32, #tpu.memory_space<vmem>>, vector<8x8x16xf32>
    %102 = vector.shape_cast %101 : vector<8x8x16xf32> to vector<64x16xf32>
    %103 = arith.truncf %102 : vector<64x16xf32> to vector<64x16xbf16>
    %c2_100 = arith.constant 2 : index
    %c0_101 = arith.constant 0 : index
    %c0_102 = arith.constant 0 : index
    %104 = vector.load %arg4[%c2_100, %c0_101, %c0_102] : memref<9x16x8xbf16, #tpu.memory_space<vmem>>, vector<1x16x8xbf16>
    %105 = vector.shape_cast %104 : vector<1x16x8xbf16> to vector<16x8xbf16>
    %cst_103 = arith.constant dense<0.000000e+00> : vector<64x8xf32>
    %106 = tpu.matmul %103, %105, %cst_103 {dimension_numbers = #tpu.dot_dimension_numbers<[1], [0], [0], [1], [0, 0, 1, 1], [], []>} : vector<64x16xbf16>, vector<16x8xbf16>, vector<64x8xf32> -> vector<64x8xf32>
    %107 = arith.addf %100, %106 : vector<64x8xf32>
    %c1_104 = arith.constant 1 : index
    %c0_105 = arith.constant 0 : index
    %c0_106 = arith.constant 0 : index
    %108 = tpu.strided_load %arg7[%c1_104, %c0_105, %c0_106] {strides = array<i32: 2, 2, 1>} : memref<18x18x16xf32, #tpu.memory_space<vmem>>, vector<8x8x16xf32>
    %109 = vector.shape_cast %108 : vector<8x8x16xf32> to vector<64x16xf32>
    %110 = arith.truncf %109 : vector<64x16xf32> to vector<64x16xbf16>
    %c3_107 = arith.constant 3 : index
    %c0_108 = arith.constant 0 : index
    %c0_109 = arith.constant 0 : index
    %111 = vector.load %arg4[%c3_107, %c0_108, %c0_109] : memref<9x16x8xbf16, #tpu.memory_space<vmem>>, vector<1x16x8xbf16>
    %112 = vector.shape_cast %111 : vector<1x16x8xbf16> to vector<16x8xbf16>
    %cst_110 = arith.constant dense<0.000000e+00> : vector<64x8xf32>
    %113 = tpu.matmul %110, %112, %cst_110 {dimension_numbers = #tpu.dot_dimension_numbers<[1], [0], [0], [1], [0, 0, 1, 1], [], []>} : vector<64x16xbf16>, vector<16x8xbf16>, vector<64x8xf32> -> vector<64x8xf32>
    %114 = arith.addf %107, %113 : vector<64x8xf32>
    %c1_111 = arith.constant 1 : index
    %c1_112 = arith.constant 1 : index
    %c0_113 = arith.constant 0 : index
    %115 = tpu.strided_load %arg7[%c1_111, %c1_112, %c0_113] {strides = array<i32: 2, 2, 1>} : memref<18x18x16xf32, #tpu.memory_space<vmem>>, vector<8x8x16xf32>
    %116 = vector.shape_cast %115 : vector<8x8x16xf32> to vector<64x16xf32>
    %117 = arith.truncf %116 : vector<64x16xf32> to vector<64x16xbf16>
    %c4_114 = arith.constant 4 : index
    %c0_115 = arith.constant 0 : index
    %c0_116 = arith.constant 0 : index
    %118 = vector.load %arg4[%c4_114, %c0_115, %c0_116] : memref<9x16x8xbf16, #tpu.memory_space<vmem>>, vector<1x16x8xbf16>
    %119 = vector.shape_cast %118 : vector<1x16x8xbf16> to vector<16x8xbf16>
    %cst_117 = arith.constant dense<0.000000e+00> : vector<64x8xf32>
    %120 = tpu.matmul %117, %119, %cst_117 {dimension_numbers = #tpu.dot_dimension_numbers<[1], [0], [0], [1], [0, 0, 1, 1], [], []>} : vector<64x16xbf16>, vector<16x8xbf16>, vector<64x8xf32> -> vector<64x8xf32>
    %121 = arith.addf %114, %120 : vector<64x8xf32>
    %c1_118 = arith.constant 1 : index
    %c2_119 = arith.constant 2 : index
    %c0_120 = arith.constant 0 : index
    %122 = tpu.strided_load %arg7[%c1_118, %c2_119, %c0_120] {strides = array<i32: 2, 2, 1>} : memref<18x18x16xf32, #tpu.memory_space<vmem>>, vector<8x8x16xf32>
    %123 = vector.shape_cast %122 : vector<8x8x16xf32> to vector<64x16xf32>
    %124 = arith.truncf %123 : vector<64x16xf32> to vector<64x16xbf16>
    %c5_121 = arith.constant 5 : index
    %c0_122 = arith.constant 0 : index
    %c0_123 = arith.constant 0 : index
    %125 = vector.load %arg4[%c5_121, %c0_122, %c0_123] : memref<9x16x8xbf16, #tpu.memory_space<vmem>>, vector<1x16x8xbf16>
    %126 = vector.shape_cast %125 : vector<1x16x8xbf16> to vector<16x8xbf16>
    %cst_124 = arith.constant dense<0.000000e+00> : vector<64x8xf32>
    %127 = tpu.matmul %124, %126, %cst_124 {dimension_numbers = #tpu.dot_dimension_numbers<[1], [0], [0], [1], [0, 0, 1, 1], [], []>} : vector<64x16xbf16>, vector<16x8xbf16>, vector<64x8xf32> -> vector<64x8xf32>
    %128 = arith.addf %121, %127 : vector<64x8xf32>
    %c2_125 = arith.constant 2 : index
    %c0_126 = arith.constant 0 : index
    %c0_127 = arith.constant 0 : index
    %129 = tpu.strided_load %arg7[%c2_125, %c0_126, %c0_127] {strides = array<i32: 2, 2, 1>} : memref<18x18x16xf32, #tpu.memory_space<vmem>>, vector<8x8x16xf32>
    %130 = vector.shape_cast %129 : vector<8x8x16xf32> to vector<64x16xf32>
    %131 = arith.truncf %130 : vector<64x16xf32> to vector<64x16xbf16>
    %c6_128 = arith.constant 6 : index
    %c0_129 = arith.constant 0 : index
    %c0_130 = arith.constant 0 : index
    %132 = vector.load %arg4[%c6_128, %c0_129, %c0_130] : memref<9x16x8xbf16, #tpu.memory_space<vmem>>, vector<1x16x8xbf16>
    %133 = vector.shape_cast %132 : vector<1x16x8xbf16> to vector<16x8xbf16>
    %cst_131 = arith.constant dense<0.000000e+00> : vector<64x8xf32>
    %134 = tpu.matmul %131, %133, %cst_131 {dimension_numbers = #tpu.dot_dimension_numbers<[1], [0], [0], [1], [0, 0, 1, 1], [], []>} : vector<64x16xbf16>, vector<16x8xbf16>, vector<64x8xf32> -> vector<64x8xf32>
    %135 = arith.addf %128, %134 : vector<64x8xf32>
    %c2_132 = arith.constant 2 : index
    %c1_133 = arith.constant 1 : index
    %c0_134 = arith.constant 0 : index
    %136 = tpu.strided_load %arg7[%c2_132, %c1_133, %c0_134] {strides = array<i32: 2, 2, 1>} : memref<18x18x16xf32, #tpu.memory_space<vmem>>, vector<8x8x16xf32>
    %137 = vector.shape_cast %136 : vector<8x8x16xf32> to vector<64x16xf32>
    %138 = arith.truncf %137 : vector<64x16xf32> to vector<64x16xbf16>
    %c7_135 = arith.constant 7 : index
    %c0_136 = arith.constant 0 : index
    %c0_137 = arith.constant 0 : index
    %139 = vector.load %arg4[%c7_135, %c0_136, %c0_137] : memref<9x16x8xbf16, #tpu.memory_space<vmem>>, vector<1x16x8xbf16>
    %140 = vector.shape_cast %139 : vector<1x16x8xbf16> to vector<16x8xbf16>
    %cst_138 = arith.constant dense<0.000000e+00> : vector<64x8xf32>
    %141 = tpu.matmul %138, %140, %cst_138 {dimension_numbers = #tpu.dot_dimension_numbers<[1], [0], [0], [1], [0, 0, 1, 1], [], []>} : vector<64x16xbf16>, vector<16x8xbf16>, vector<64x8xf32> -> vector<64x8xf32>
    %142 = arith.addf %135, %141 : vector<64x8xf32>
    %c2_139 = arith.constant 2 : index
    %c2_140 = arith.constant 2 : index
    %c0_141 = arith.constant 0 : index
    %143 = tpu.strided_load %arg7[%c2_139, %c2_140, %c0_141] {strides = array<i32: 2, 2, 1>} : memref<18x18x16xf32, #tpu.memory_space<vmem>>, vector<8x8x16xf32>
    %144 = vector.shape_cast %143 : vector<8x8x16xf32> to vector<64x16xf32>
    %145 = arith.truncf %144 : vector<64x16xf32> to vector<64x16xbf16>
    %c8_142 = arith.constant 8 : index
    %c0_143 = arith.constant 0 : index
    %c0_144 = arith.constant 0 : index
    %146 = vector.load %arg4[%c8_142, %c0_143, %c0_144] : memref<9x16x8xbf16, #tpu.memory_space<vmem>>, vector<1x16x8xbf16>
    %147 = vector.shape_cast %146 : vector<1x16x8xbf16> to vector<16x8xbf16>
    %cst_145 = arith.constant dense<0.000000e+00> : vector<64x8xf32>
    %148 = tpu.matmul %145, %147, %cst_145 {dimension_numbers = #tpu.dot_dimension_numbers<[1], [0], [0], [1], [0, 0, 1, 1], [], []>} : vector<64x16xbf16>, vector<16x8xbf16>, vector<64x8xf32> -> vector<64x8xf32>
    %149 = arith.addf %142, %148 : vector<64x8xf32>
    %c0_146 = arith.constant 0 : index
    %c0_147 = arith.constant 0 : index
    %150 = vector.load %arg5[%c0_146, %c0_147] : memref<1x8xf32, #tpu.memory_space<vmem>>, vector<1x8xf32>
    %151 = vector.broadcast %150 : vector<1x8xf32> to vector<64x8xf32>
    %152 = arith.addf %149, %151 : vector<64x8xf32>
    %cst_148 = arith.constant 0.000000e+00 : f32
    %153 = vector.broadcast %cst_148 : f32 to vector<64x8xf32>
    %154 = arith.subf %153, %152 : vector<64x8xf32>
    %155 = math.exp %154 : vector<64x8xf32>
    %cst_149 = arith.constant 1.000000e+00 : f32
    %156 = vector.broadcast %cst_149 : f32 to vector<64x8xf32>
    %157 = arith.addf %156, %155 : vector<64x8xf32>
    %158 = tpu.reciprocal %157 {approx = true} : vector<64x8xf32> -> vector<64x8xf32>
    %159 = tpu.transpose %158, [1, 0] : vector<64x8xf32> -> vector<8x64xf32>
    %c0_150 = arith.constant 0 : index
    %c0_151 = arith.constant 0 : index
    %c0_152 = arith.constant 0 : index
    %160 = vector.load %arg6[%c0_150, %c0_151, %c0_152] : memref<1x8x64xf32, #tpu.memory_space<vmem>>, vector<1x8x64xf32>
    %161 = vector.shape_cast %160 : vector<1x8x64xf32> to vector<8x64xf32>
    %162 = vector.shape_cast %159 : vector<8x64xf32> to vector<1x8x64xf32>
    tpu.vector_store %arg6[%c0_150, %c0_151, %c0_152], %162 {strides = array<i32>} : memref<1x8x64xf32, #tpu.memory_space<vmem>>, vector<1x8x64xf32>,
    return
  }
  func.func @transform_0(%arg0: i32) -> (i32, i32, i32, i32) {
    %c0_i32 = arith.constant 0 : i32
    %c0_i32_0 = arith.constant 0 : i32
    %c0_i32_1 = arith.constant 0 : i32
    %c0_i32_2 = arith.constant 0 : i32
    return %arg0, %c0_i32, %c0_i32_0, %c0_i32_1 : i32, i32, i32, i32
  }
  func.func @transform_1(%arg0: i32) -> (i32, i32, i32) {
    %c0_i32 = arith.constant 0 : i32
    %c0_i32_0 = arith.constant 0 : i32
    %c0_i32_1 = arith.constant 0 : i32
    %c0_i32_2 = arith.constant 0 : i32
    return %c0_i32, %c0_i32_0, %c0_i32_1 : i32, i32, i32
  }
  func.func @transform_2(%arg0: i32) -> (i32, i32) {
    %c0_i32 = arith.constant 0 : i32
    %c0_i32_0 = arith.constant 0 : i32
    %c0_i32_1 = arith.constant 0 : i32
    return %c0_i32, %c0_i32_0 : i32, i32
  }
  func.func @transform_3(%arg0: i32) -> (i32, i32, i32) {
    %c0_i32 = arith.constant 0 : i32
    %c0_i32_0 = arith.constant 0 : i32
    %c0_i32_1 = arith.constant 0 : i32
    %c0_i32_2 = arith.constant 0 : i32
    return %c0_i32, %c0_i32_0, %c0_i32_1 : i32, i32, i32
  }
  func.func @transform_4(%arg0: i32) -> (i32, i32) {
    %c0_i32 = arith.constant 0 : i32
    %c0_i32_0 = arith.constant 0 : i32
    %c0_i32_1 = arith.constant 0 : i32
    return %c0_i32, %c0_i32_0 : i32, i32
  }
  func.func @transform_5(%arg0: i32) -> (i32, i32, i32) {
    %c0_i32 = arith.constant 0 : i32
    %c0_i32_0 = arith.constant 0 : i32
    %c0_i32_1 = arith.constant 0 : i32
    return %arg0, %c0_i32, %c0_i32_0 : i32, i32, i32
  }
}

</mosaic_0001>

<llo_original>
// kernel: color_encoder_forward.1
$region0: #{color_encoder_forward.1}
  #allocation0 [shape = 'u32[]', space=smem, size = 0x4, offset = 0x4, fixed_abs, tag = 'smem constant byte address 0x4 - core index']
  #allocation1 [shape = 'u32[144,128]{1,0:T(1,128)}', space=vmem, size = 0x12000, scoped, tag = 'internal scratch']
  #allocation2 [shape = 'f32[18,18,16]{2,1,0:T(8,128)}', space=vmem, size = 0x36000, scoped, tag = 'scratch operand']
  %s0 = inlined_call_operand.vmem [shape: f32[2,34,34,3], index: 0, kind: input, shape index: {}]
  %s1 = inlined_call_operand.vmem [shape: bf16[9,3,16], index: 1, kind: input, shape index: {}]
  %s2 = inlined_call_operand.vmem [shape: f32[1,16], index: 2, kind: input, shape index: {}]
  %s3 = inlined_call_operand.vmem [shape: bf16[9,16,8], index: 3, kind: input, shape index: {}]
  %s4 = inlined_call_operand.vmem [shape: f32[1,8], index: 4, kind: input, shape index: {}]
  %s5 = inlined_call_operand.vmem [shape: f32[2,8,64], index: 5, kind: output, shape index: {}]
  %s6 = sld [smem:[#allocation0]]
  $region53: #{color_encoder_forward.1} parent=0
    _
  %s8 = ssub.s32 1, %s6
  %s9 = scalar_select 0, %s8, %s6
  loop: start=0, step=1, limit=4
  $region2: #{color_encoder_forward.1} parent=0 // loop_pre_header
    _
  $region3: #{color_encoder_forward.1} parent=0 // loop_header
    %s11 = sphi 0, %s15
    %p12 = scmp.ge.s32.totalorder %s11, 4
    %s21 = sphi 0, %s23
    %s24 = sphi 0, %s21
    %s25 = sphi 0, %s24
    %s41 = sphi 0, %s25
    %s45 = sphi 0, %s45
    %s47 = sphi 0, %s45
    %s48 = sphi 0, %s47
    %s62 = sphi 0, %s48
    %s66 = sphi 0, %s66
    %s68 = sphi 0, %s66
    %s69 = sphi 0, %s68
    %s83 = sphi 0, %s69
    %s87 = sphi 0, %s87
    %s89 = sphi 0, %s87
    %s90 = sphi 0, %s89
    %s104 = sphi 0, %s90
    %s108 = sphi 0, %s108
    %s110 = sphi 0, %s108
    %s111 = sphi 0, %s110
    %s125 = sphi 0, %s111
    %s131 = sphi 0, %s133
    %s134 = sphi 0, %s131
    %s135 = sphi 0, %s134
    %s151 = sphi 0, %s135
  $region4: #{color_encoder_forward.1} parent=0 // loop_header_branch
    %14 = sbr.rel (%p12) target = $region8
  $region5: #{color_encoder_forward.1} parent=0 // loop_body
    %s16 = ssub.s32 %s11, 1
    %s17 = ssub.s32 %s11, 2
    %s18 = sadd.s32 %s11, 1
    %s19 = ssub.s32 %s11, %s18
    %p20 = scmp.eq.s32.totalorder %s19, 0
    %s22 = sadd.s32 %s21, 1
    %s23 = scalar_select %p20, %s21, %s22
    %p26 = pneg %p20
    %p27 = scmp.eq.s32.totalorder %s11, 1
    %p28 = por %p26, %p27
    %p29 = scmp.ne.s32.totalorder %s21, %s24
    %p30 = scmp.eq.s32.totalorder %s11, 0
    %p31 = por %p29, %p30
    %p32 = scmp.ne.s32.totalorder %s21, %s24
    %p33 = scmp.eq.s32.totalorder %s16, 1
    %p34 = por %p32, %p33
    %p35 = scmp.ne.s32.totalorder %s24, %s25
    %p36 = scmp.eq.s32.totalorder %s16, 0
    %p37 = por %p35, %p36
    %p38 = scmp.ne.s32.totalorder %s24, %s25
    %p39 = scmp.eq.s32.totalorder %s17, 1
    %p40 = por %p38, %p39
    %p42 = scmp.ne.s32.totalorder %s25, %s41
    %p43 = scmp.eq.s32.totalorder %s17, 0
    %p44 = por %p42, %p43
    %s46 = sadd.s32 %s45, 1
    %p49 = scmp.eq.s32.totalorder %s11, 1
    %p50 = scmp.ne.s32.totalorder %s45, %s47
    %p51 = scmp.eq.s32.totalorder %s11, 0
    %p52 = por %p50, %p51
    %p53 = scmp.ne.s32.totalorder %s45, %s47
    %p54 = scmp.eq.s32.totalorder %s16, 1
    %p55 = por %p53, %p54
    %p56 = scmp.ne.s32.totalorder %s47, %s48
    %p57 = scmp.eq.s32.totalorder %s16, 0
    %p58 = por %p56, %p57
    %p59 = scmp.ne.s32.totalorder %s47, %s48
    %p60 = scmp.eq.s32.totalorder %s17, 1
    %p61 = por %p59, %p60
    %p63 = scmp.ne.s32.totalorder %s48, %s62
    %p64 = scmp.eq.s32.totalorder %s17, 0
    %p65 = por %p63, %p64
    %s67 = sadd.s32 %s66, 1
    %p70 = scmp.eq.s32.totalorder %s11, 1
    %p71 = scmp.ne.s32.totalorder %s66, %s68
    %p72 = scmp.eq.s32.totalorder %s11, 0
    %p73 = por %p71, %p72
    %p74 = scmp.ne.s32.totalorder %s66, %s68
    %p75 = scmp.eq.s32.totalorder %s16, 1
    %p76 = por %p74, %p75
    %p77 = scmp.ne.s32.totalorder %s68, %s69
    %p78 = scmp.eq.s32.totalorder %s16, 0
    %p79 = por %p77, %p78
    %p80 = scmp.ne.s32.totalorder %s68, %s69
    %p81 = scmp.eq.s32.totalorder %s17, 1
    %p82 = por %p80, %p81
    %p84 = scmp.ne.s32.totalorder %s69, %s83
    %p85 = scmp.eq.s32.totalorder %s17, 0
    %p86 = por %p84, %p85
    %s88 = sadd.s32 %s87, 1
    %p91 = scmp.eq.s32.totalorder %s11, 1
    %p92 = scmp.ne.s32.totalorder %s87, %s89
    %p93 = scmp.eq.s32.totalorder %s11, 0
    %p94 = por %p92, %p93
    %p95 = scmp.ne.s32.totalorder %s87, %s89
    %p96 = scmp.eq.s32.totalorder %s16, 1
    %p97 = por %p95, %p96
    %p98 = scmp.ne.s32.totalorder %s89, %s90
    %p99 = scmp.eq.s32.totalorder %s16, 0
    %p100 = por %p98, %p99
    %p101 = scmp.ne.s32.totalorder %s89, %s90
    %p102 = scmp.eq.s32.totalorder %s17, 1
    %p103 = por %p101, %p102
    %p105 = scmp.ne.s32.totalorder %s90, %s104
    %p106 = scmp.eq.s32.totalorder %s17, 0
    %p107 = por %p105, %p106
    %s109 = sadd.s32 %s108, 1
    %p112 = scmp.eq.s32.totalorder %s11, 1
    %p113 = scmp.ne.s32.totalorder %s108, %s110
    %p114 = scmp.eq.s32.totalorder %s11, 0
    %p115 = por %p113, %p114
    %p116 = scmp.ne.s32.totalorder %s108, %s110
    %p117 = scmp.eq.s32.totalorder %s16, 1
    %p118 = por %p116, %p117
    %p119 = scmp.ne.s32.totalorder %s110, %s111
    %p120 = scmp.eq.s32.totalorder %s16, 0
    %p121 = por %p119, %p120
    %p122 = scmp.ne.s32.totalorder %s110, %s111
    %p123 = scmp.eq.s32.totalorder %s17, 1
    %p124 = por %p122, %p123
    %p126 = scmp.ne.s32.totalorder %s111, %s125
    %p127 = scmp.eq.s32.totalorder %s17, 0
    %p128 = por %p126, %p127
    %s129 = ssub.s32 %s11, %s18
    %p130 = scmp.eq.s32.totalorder %s129, 0
    %s132 = sadd.s32 %s131, 1
    %s133 = scalar_select %p130, %s131, %s132
    %p136 = pneg %p130
    %p137 = scmp.eq.s32.totalorder %s11, 1
    %p138 = por %p136, %p137
    %p139 = scmp.ne.s32.totalorder %s131, %s134
    %p140 = scmp.eq.s32.totalorder %s11, 0
    %p141 = por %p139, %p140
    %p142 = scmp.ne.s32.totalorder %s131, %s134
    %p143 = scmp.eq.s32.totalorder %s16, 1
    %p144 = por %p142, %p143
    %p145 = scmp.ne.s32.totalorder %s134, %s135
    %p146 = scmp.eq.s32.totalorder %s16, 0
    %p147 = por %p145, %p146
    %p148 = scmp.ne.s32.totalorder %s134, %s135
    %p149 = scmp.eq.s32.totalorder %s17, 1
    %p150 = por %p148, %p149
    %p152 = scmp.ne.s32.totalorder %s135, %s151
    %p153 = scmp.eq.s32.totalorder %s17, 0
    %p154 = por %p152, %p153
    %p155 = scmp.le.s32.totalorder 1, %s11
    %p156 = scmp.lt.s32.totalorder %s11, 3
    %p157 = pnand %p155, %p156
    %p158 = pneg %p157
    // Predicated region
    $region9: #{color_encoder_forward.1} parent=5 // pred_check
      _
    $region10: #{color_encoder_forward.1} parent=5 // pred_check_branch
      %160 = sbr.rel (%p157) target = $region12
    $region11: #{color_encoder_forward.1} parent=5 // pred_region
      %s161 = ssub.s32 %s11, 1
      // Predicated region
      $region13: #{color_encoder_forward.1} parent=11 // pred_check
        %p162 = pneg %p58
      $region14: #{color_encoder_forward.1} parent=11 // pred_check_branch
        %164 = sbr.rel (%p162) target = $region16
      $region15: #{color_encoder_forward.1} parent=11 // pred_region
        _
      $region16: #{color_encoder_forward.1} parent=11 // pred_fallthru
        _
      // Predicated region
      $region17: #{color_encoder_forward.1} parent=11 // pred_check
        %p165 = pneg %p79
      $region18: #{color_encoder_forward.1} parent=11 // pred_check_branch
        %167 = sbr.rel (%p165) target = $region20
      $region19: #{color_encoder_forward.1} parent=11 // pred_region
        _
      $region20: #{color_encoder_forward.1} parent=11 // pred_fallthru
        _
      // Predicated region
      $region21: #{color_encoder_forward.1} parent=11 // pred_check
        %p168 = pneg %p100
      $region22: #{color_encoder_forward.1} parent=11 // pred_check_branch
        %170 = sbr.rel (%p168) target = $region24
      $region23: #{color_encoder_forward.1} parent=11 // pred_region
        _
      $region24: #{color_encoder_forward.1} parent=11 // pred_fallthru
        _
      // Predicated region
      $region25: #{color_encoder_forward.1} parent=11 // pred_check
        %p171 = pneg %p121
      $region26: #{color_encoder_forward.1} parent=11 // pred_check_branch
        %173 = sbr.rel (%p171) target = $region28
      $region27: #{color_encoder_forward.1} parent=11 // pred_region
        _
      $region28: #{color_encoder_forward.1} parent=11 // pred_fallthru
        _
    $region12: #{color_encoder_forward.1} parent=5 // pred_fallthru
      _
    %p174 = scmp.lt.s32.totalorder %s11, 2
    // Predicated region
    $region29: #{color_encoder_forward.1} parent=5 // pred_check
      %p175 = pneg %p174
    $region30: #{color_encoder_forward.1} parent=5 // pred_check_branch
      %177 = sbr.rel (%p175) target = $region32
    $region31: #{color_encoder_forward.1} parent=5 // pred_region
      // Predicated region
      $region33: #{color_encoder_forward.1} parent=31 // pred_check
        %p178 = pneg %p31
      $region34: #{color_encoder_forward.1} parent=31 // pred_check_branch
        %180 = sbr.rel (%p178) target = $region36
      $region35: #{color_encoder_forward.1} parent=31 // pred_region
        %p181 = scmp.lt.s32.totalorder %s11, 1
        %s182 = scalar_select %p181, %s11, 1
        %s183 = smul.addr %s182, 170
        %s184 = smul.addr %s183, 8
        %s185 = scalar_lea.vmem %s0, %s184
      $region36: #{color_encoder_forward.1} parent=31 // pred_fallthru
        _
    $region32: #{color_encoder_forward.1} parent=5 // pred_fallthru
      _
    %p186 = scmp.le.s32.totalorder 1, %s11
    %p187 = scmp.lt.s32.totalorder %s11, 3
    %p188 = pnand %p186, %p187
    %p189 = pneg %p188
    // Predicated region
    $region37: #{color_encoder_forward.1} parent=5 // pred_check
      _
    $region38: #{color_encoder_forward.1} parent=5 // pred_check_branch
      %191 = sbr.rel (%p188) target = $region40
    $region39: #{color_encoder_forward.1} parent=5 // pred_region
      %s192 = ssub.s32 %s11, 1
      %p193 = scmp.lt.s32.totalorder %s16, 1
      %s194 = scalar_select %p193, %s16, 1
      %s195 = smul.addr %s194, 170
      %s196 = smul.addr %s195, 8
      %s197 = scalar_lea.vmem %s0, %s196
      %p198 = pneg %p37
      %p199 = pneg %p34
      %p200 = pneg %p58
      %p201 = pneg %p55
      %p202 = pneg %p79
      %p203 = pneg %p76
      %p204 = pneg %p100
      %p205 = pneg %p97
      %p206 = pneg %p121
      %p207 = pneg %p118
      %p208 = pneg %p147
      %p209 = pneg %p144
      %p210 = scmp.lt.s32.totalorder %s16, 1
      %s211 = scalar_select %p210, %s16, 1
      %s212 = smul.addr %s211, 8
      %s213 = scalar_lea.vmem %s5, %s212
      %p214 = scmp.lt.s32.totalorder %s16, 1
      %s215 = scalar_select %p214, %s16, 1
      %s216 = smul.addr %s215, 170
      %s217 = smul.addr %s216, 8
      %s218 = scalar_lea.vmem %s0, %s217
      %p219 = scmp.lt.s32.totalorder %s16, 1
      %s220 = scalar_select %p219, %s16, 1
      %s221 = smul.addr %s220, 8
      %s222 = scalar_lea.vmem %s5, %s221
      %v224 = vld [vmem:[%s218] ss:$2 sm:$0xff]
      %s225 = scalar_lea.vmem %s218, 16
      %v226 = vld [vmem:[%s225] ss:$2 sm:$0xff]
      %s227 = scalar_lea.vmem %s218, 80
      %v228 = vld [vmem:[%s227] ss:$2 sm:$0xff]
      %s229 = scalar_lea.vmem %s218, 96
      %v230 = vld [vmem:[%s229] ss:$2 sm:$0xff]
      %s231 = scalar_lea.vmem %s218, 160
      %v232 = vld [vmem:[%s231] ss:$2 sm:$0xff]
      %s233 = scalar_lea.vmem %s218, 176
      %v234 = vld [vmem:[%s233] ss:$2 sm:$0xff]
      %s235 = scalar_lea.vmem %s218, 240
      %v236 = vld [vmem:[%s235] ss:$2 sm:$0xff]
      %s237 = scalar_lea.vmem %s218, 256
      %v238 = vld [vmem:[%s237] ss:$2 sm:$0xff]
      %s239 = scalar_lea.vmem %s218, 320
      %v240 = vld [vmem:[%s239] ss:$2 sm:$0xff]
      %s241 = scalar_lea.vmem %s218, 336
      %v242 = vld [vmem:[%s241] ss:$2 sm:$0xff]
      %s243 = scalar_lea.vmem %s218, 400
      %v244 = vld [vmem:[%s243] ss:$2 sm:$0xff]
      %s245 = scalar_lea.vmem %s218, 416
      %v246 = vld [vmem:[%s245] ss:$2 sm:$0xff]
      %s247 = scalar_lea.vmem %s218, 480
      %v248 = vld [vmem:[%s247] ss:$2 sm:$0xff]
      %s249 = scalar_lea.vmem %s218, 496
      %v250 = vld [vmem:[%s249] ss:$2 sm:$0xff]
      %s251 = scalar_lea.vmem %s218, 560
      %v252 = vld [vmem:[%s251] ss:$2 sm:$0xff]
      %s253 = scalar_lea.vmem %s218, 576
      %v254 = vld [vmem:[%s253] ss:$2 sm:$0xff]
      %s255 = scalar_lea.vmem %s218, 640
      %v256 = vld [vmem:[%s255] ss:$2 sm:$0xff]
      %s257 = scalar_lea.vmem %s218, 656
      %v258 = vld [vmem:[%s257] ss:$2 sm:$0xff]
      %s259 = scalar_lea.vmem %s218, 720
      %v260 = vld [vmem:[%s259] ss:$2 sm:$0xff]
      %s261 = scalar_lea.vmem %s218, 736
      %v262 = vld [vmem:[%s261] ss:$2 sm:$0xff]
      %s263 = scalar_lea.vmem %s218, 800
      %v264 = vld [vmem:[%s263] ss:$2 sm:$0xff]
      %s265 = scalar_lea.vmem %s218, 816
      %v266 = vld [vmem:[%s265] ss:$2 sm:$0xff]
      %s267 = scalar_lea.vmem %s218, 880
      %v268 = vld [vmem:[%s267] ss:$2 sm:$0xff]
      %s269 = scalar_lea.vmem %s218, 896
      %v270 = vld [vmem:[%s269] ss:$2 sm:$0xff]
      %s271 = scalar_lea.vmem %s218, 960
      %v272 = vld [vmem:[%s271] ss:$2 sm:$0xff]
      %s273 = scalar_lea.vmem %s218, 976
      %v274 = vld [vmem:[%s273] ss:$2 sm:$0xff]
      %s275 = scalar_lea.vmem %s218, 1040
      %v276 = vld [vmem:[%s275] ss:$2 sm:$0xff]
      %s277 = scalar_lea.vmem %s218, 1056
      %v278 = vld [vmem:[%s277] ss:$2 sm:$0xff]
      %s279 = scalar_lea.vmem %s218, 1120
      %v280 = vld [vmem:[%s279] ss:$2 sm:$0xff]
      %s281 = scalar_lea.vmem %s218, 1136
      %v282 = vld [vmem:[%s281] ss:$2 sm:$0xff]
      %s283 = scalar_lea.vmem %s218, 1200
      %v284 = vld [vmem:[%s283] ss:$2 sm:$0xff]
      %s285 = scalar_lea.vmem %s218, 1216
      %v286 = vld [vmem:[%s285] ss:$2 sm:$0xff]
      %v287 = vpack.c.bf16 %v226, %v224
      %v288 = vpack.c.bf16 %v230, %v228
      %v289 = vpack.c.bf16 %v234, %v232
      %v290 = vpack.c.bf16 %v238, %v236
      %v291 = vpack.c.bf16 %v242, %v240
      %v292 = vpack.c.bf16 %v246, %v244
      %v293 = vpack.c.bf16 %v250, %v248
      %v294 = vpack.c.bf16 %v254, %v252
      %v295 = vpack.c.bf16 %v258, %v256
      %v296 = vpack.c.bf16 %v262, %v260
      %v297 = vpack.c.bf16 %v266, %v264
      %v298 = vpack.c.bf16 %v270, %v268
      %v299 = vpack.c.bf16 %v274, %v272
      %v300 = vpack.c.bf16 %v278, %v276
      %v301 = vpack.c.bf16 %v282, %v280
      %v302 = vpack.c.bf16 %v286, %v284
      %v303 = vld [vmem:[%s1] sm:$0x3]
      %s304 = scalar_lea.vmem %s218, 1
      %v305 = vld [vmem:[%s304] ss:$2 sm:$0xff]
      %s306 = scalar_lea.vmem %s218, 17
      %v307 = vld [vmem:[%s306] ss:$2 sm:$0xff]
      %s308 = scalar_lea.vmem %s218, 81
      %v309 = vld [vmem:[%s308] ss:$2 sm:$0xff]
      %s310 = scalar_lea.vmem %s218, 97
      %v311 = vld [vmem:[%s310] ss:$2 sm:$0xff]
      %s312 = scalar_lea.vmem %s218, 161
      %v313 = vld [vmem:[%s312] ss:$2 sm:$0xff]
      %s314 = scalar_lea.vmem %s218, 177
      %v315 = vld [vmem:[%s314] ss:$2 sm:$0xff]
      %s316 = scalar_lea.vmem %s218, 241
      %v317 = vld [vmem:[%s316] ss:$2 sm:$0xff]
      %s318 = scalar_lea.vmem %s218, 257
      %v319 = vld [vmem:[%s318] ss:$2 sm:$0xff]
      %s320 = scalar_lea.vmem %s218, 321
      %v321 = vld [vmem:[%s320] ss:$2 sm:$0xff]
      %s322 = scalar_lea.vmem %s218, 337
      %v323 = vld [vmem:[%s322] ss:$2 sm:$0xff]
      %s324 = scalar_lea.vmem %s218, 401
      %v325 = vld [vmem:[%s324] ss:$2 sm:$0xff]
      %s326 = scalar_lea.vmem %s218, 417
      %v327 = vld [vmem:[%s326] ss:$2 sm:$0xff]
      %s328 = scalar_lea.vmem %s218, 481
      %v329 = vld [vmem:[%s328] ss:$2 sm:$0xff]
      %s330 = scalar_lea.vmem %s218, 497
      %v331 = vld [vmem:[%s330] ss:$2 sm:$0xff]
      %s332 = scalar_lea.vmem %s218, 561
      %v333 = vld [vmem:[%s332] ss:$2 sm:$0xff]
      %s334 = scalar_lea.vmem %s218, 577
      %v335 = vld [vmem:[%s334] ss:$2 sm:$0xff]
      %s336 = scalar_lea.vmem %s218, 641
      %v337 = vld [vmem:[%s336] ss:$2 sm:$0xff]
      %s338 = scalar_lea.vmem %s218, 657
      %v339 = vld [vmem:[%s338] ss:$2 sm:$0xff]
      %s340 = scalar_lea.vmem %s218, 721
      %v341 = vld [vmem:[%s340] ss:$2 sm:$0xff]
      %s342 = scalar_lea.vmem %s218, 737
      %v343 = vld [vmem:[%s342] ss:$2 sm:$0xff]
      %s344 = scalar_lea.vmem %s218, 801
      %v345 = vld [vmem:[%s344] ss:$2 sm:$0xff]
      %s346 = scalar_lea.vmem %s218, 817
      %v347 = vld [vmem:[%s346] ss:$2 sm:$0xff]
      %s348 = scalar_lea.vmem %s218, 881
      %v349 = vld [vmem:[%s348] ss:$2 sm:$0xff]
      %s350 = scalar_lea.vmem %s218, 897
      %v351 = vld [vmem:[%s350] ss:$2 sm:$0xff]
      %s352 = scalar_lea.vmem %s218, 961
      %v353 = vld [vmem:[%s352] ss:$2 sm:$0xff]
      %s354 = scalar_lea.vmem %s218, 977
      %v355 = vld [vmem:[%s354] ss:$2 sm:$0xff]
      %s356 = scalar_lea.vmem %s218, 1041
      %v357 = vld [vmem:[%s356] ss:$2 sm:$0xff]
      %s358 = scalar_lea.vmem %s218, 1057
      %v359 = vld [vmem:[%s358] ss:$2 sm:$0xff]
      %s360 = scalar_lea.vmem %s218, 1121
      %v361 = vld [vmem:[%s360] ss:$2 sm:$0xff]
      %s362 = scalar_lea.vmem %s218, 1137
      %v363 = vld [vmem:[%s362] ss:$2 sm:$0xff]
      %s364 = scalar_lea.vmem %s218, 1201
      %v365 = vld [vmem:[%s364] ss:$2 sm:$0xff]
      %s366 = scalar_lea.vmem %s218, 1217
      %v367 = vld [vmem:[%s366] ss:$2 sm:$0xff]
      %v368 = vpack.c.bf16 %v307, %v305
      %v369 = vpack.c.bf16 %v311, %v309
      %v370 = vpack.c.bf16 %v315, %v313
      %v371 = vpack.c.bf16 %v319, %v317
      %v372 = vpack.c.bf16 %v323, %v321
      %v373 = vpack.c.bf16 %v327, %v325
      %v374 = vpack.c.bf16 %v331, %v329
      %v375 = vpack.c.bf16 %v335, %v333
      %v376 = vpack.c.bf16 %v339, %v337
      %v377 = vpack.c.bf16 %v343, %v341
      %v378 = vpack.c.bf16 %v347, %v345
      %v379 = vpack.c.bf16 %v351, %v349
      %v380 = vpack.c.bf16 %v355, %v353
      %v381 = vpack.c.bf16 %v359, %v357
      %v382 = vpack.c.bf16 %v363, %v361
      %v383 = vpack.c.bf16 %v367, %v365
      %s384 = scalar_lea.vmem %s1, 2
      %v385 = vld [vmem:[%s384] sm:$0x3]
      %vm386 = vcmask 23552
      %v388 = vsel %vm386, %v368, 0
      %v391 = vsel %vm386, %v369, 0
      %v394 = vsel %vm386, %v370, 0
      %v397 = vsel %vm386, %v371, 0
      %v400 = vsel %vm386, %v372, 0
      %v403 = vsel %vm386, %v373, 0
      %v406 = vsel %vm386, %v374, 0
      %v409 = vsel %vm386, %v375, 0
      %v412 = vsel %vm386, %v376, 0
      %v415 = vsel %vm386, %v377, 0
      %v418 = vsel %vm386, %v378, 0
      %v421 = vsel %vm386, %v379, 0
      %v424 = vsel %vm386, %v380, 0
      %v427 = vsel %vm386, %v381, 0
      %v430 = vsel %vm386, %v382, 0
      %v433 = vsel %vm386, %v383, 0
      %vm435 = vcmask 1040384
      %vm436 = vcmask 1041408
      %v437 = vsel %vm435, 4294967295, 65535
      %v438 = vsel %vm436, %v437, 0
      %v440 = vand.u32 %v385, %v438
      %442 = vmatprep.subr.bf16.mxu0 0
      %443 = vmatpush1.bf16.msra.mxu0 %v440
      %444 = vmatprep.subr.bf16.mxu0 0
      %445 = vmatpush1.bf16.msra.mxu0 0
      %446 = vmatprep.subr.bf16.mxu0 0
      %447 = vmatpush1.bf16.msra.mxu0 0
      %448 = vmatprep.subr.bf16.mxu0 0
      %449 = vmatpush1.bf16.msra.mxu0 0
      %450 = vmatprep.subr.bf16.mxu0 0
      %451 = vmatpush1.bf16.msra.mxu0 0
      %452 = vmatprep.subr.bf16.mxu0 0
      %453 = vmatpush1.bf16.msra.mxu0 0
      %454 = vmatprep.subr.bf16.mxu0 0
      %455 = vmatpush1.bf16.msra.mxu0 0
      %456 = vmatprep.subr.bf16.mxu0 0
      %457 = vmatpush1.bf16.msra.mxu0 0
      %458 = vmatprep.subr.bf16.mxu0 0
      %459 = vmatpush1.bf16.msra.mxu0 0
      %460 = vmatprep.subr.bf16.mxu0 0
      %461 = vmatpush1.bf16.msra.mxu0 0
      %462 = vmatprep.subr.bf16.mxu0 0
      %463 = vmatpush1.bf16.msra.mxu0 0
      %464 = vmatprep.subr.bf16.mxu0 0
      %465 = vmatpush1.bf16.msra.mxu0 0
      %466 = vmatprep.subr.bf16.mxu0 0
      %467 = vmatpush1.bf16.msra.mxu0 0
      %468 = vmatprep.subr.bf16.mxu0 0
      %469 = vmatpush1.bf16.msra.mxu0 0
      %470 = vmatprep.subr.bf16.mxu0 0
      %471 = vmatpush1.bf16.msra.mxu0 0
      %472 = vmatprep.subr.bf16.mxu0 0
      %473 = vmatpush1.bf16.msra.mxu0 0
      %474 = vmatprep.mubr.bf16.mxu0 0
      %475 = vmatmul.mubr.bf16.gmra.mrb[0].mxu0 %v388
      %v476 = vpop.f32.mrb[0].mxu0
      %v477 = vadd.f32 0.0, %v476
      %v478 = vpop.f32.mrb[0].mxu0
      %v479 = vpop.f32.mrb[0].mxu0
      %v480 = vadd.f32 0.0, %v479
      %v481 = vpop.f32.mrb[0].mxu0
      %482 = vmatprep.mubr.bf16.mxu0 0
      %483 = vmatmul.mubr.bf16.gmra.mrb[0].mxu0 %v391
      %v484 = vpop.f32.mrb[0].mxu0
      %v485 = vadd.f32 0.0, %v484
      %v486 = vpop.f32.mrb[0].mxu0
      %v487 = vpop.f32.mrb[0].mxu0
      %v488 = vadd.f32 0.0, %v487
      %v489 = vpop.f32.mrb[0].mxu0
      %490 = vmatprep.mubr.bf16.mxu0 0
      %491 = vmatmul.mubr.bf16.gmra.mrb[0].mxu0 %v394
      %v492 = vpop.f32.mrb[0].mxu0
      %v493 = vadd.f32 0.0, %v492
      %v494 = vpop.f32.mrb[0].mxu0
      %v495 = vpop.f32.mrb[0].mxu0
      %v496 = vadd.f32 0.0, %v495
      %v497 = vpop.f32.mrb[0].mxu0
      %498 = vmatprep.mubr.bf16.mxu0 0
      %499 = vmatmul.mubr.bf16.gmra.mrb[0].mxu0 %v397
      %v500 = vpop.f32.mrb[0].mxu0
      %v501 = vadd.f32 0.0, %v500
      %v502 = vpop.f32.mrb[0].mxu0
      %v503 = vpop.f32.mrb[0].mxu0
      %v504 = vadd.f32 0.0, %v503
      %v505 = vpop.f32.mrb[0].mxu0
      %506 = vmatprep.mubr.bf16.mxu0 0
      %507 = vmatmul.mubr.bf16.gmra.mrb[0].mxu0 %v400
      %v508 = vpop.f32.mrb[0].mxu0
      %v509 = vadd.f32 0.0, %v508
      %v510 = vpop.f32.mrb[0].mxu0
      %v511 = vpop.f32.mrb[0].mxu0
      %v512 = vadd.f32 0.0, %v511
      %v513 = vpop.f32.mrb[0].mxu0
      %514 = vmatprep.mubr.bf16.mxu0 0
      %515 = vmatmul.mubr.bf16.gmra.mrb[0].mxu0 %v403
      %v516 = vpop.f32.mrb[0].mxu0
      %v517 = vadd.f32 0.0, %v516
      %v518 = vpop.f32.mrb[0].mxu0
      %v519 = vpop.f32.mrb[0].mxu0
      %v520 = vadd.f32 0.0, %v519
      %v521 = vpop.f32.mrb[0].mxu0
      %522 = vmatprep.mubr.bf16.mxu0 0
      %523 = vmatmul.mubr.bf16.gmra.mrb[0].mxu0 %v406
      %v524 = vpop.f32.mrb[0].mxu0
      %v525 = vadd.f32 0.0, %v524
      %v526 = vpop.f32.mrb[0].mxu0
      %v527 = vpop.f32.mrb[0].mxu0
      %v528 = vadd.f32 0.0, %v527
      %v529 = vpop.f32.mrb[0].mxu0
      %530 = vmatprep.mubr.bf16.mxu0 0
      %531 = vmatmul.mubr.bf16.gmra.mrb[0].mxu0 %v409
      %v532 = vpop.f32.mrb[0].mxu0
      %v533 = vadd.f32 0.0, %v532
      %v534 = vpop.f32.mrb[0].mxu0
      %v535 = vpop.f32.mrb[0].mxu0
      %v536 = vadd.f32 0.0, %v535
      %v537 = vpop.f32.mrb[0].mxu0
      %538 = vmatprep.mubr.bf16.mxu0 0
      %539 = vmatmul.mubr.bf16.gmra.mrb[0].mxu0 %v412
      %v540 = vpop.f32.mrb[0].mxu0
      %v541 = vadd.f32 0.0, %v540
      %v542 = vpop.f32.mrb[0].mxu0
      %v543 = vpop.f32.mrb[0].mxu0
      %v544 = vadd.f32 0.0, %v543
      %v545 = vpop.f32.mrb[0].mxu0
      %546 = vmatprep.mubr.bf16.mxu0 0
      %547 = vmatmul.mubr.bf16.gmra.mrb[0].mxu0 %v415
      %v548 = vpop.f32.mrb[0].mxu0
      %v549 = vadd.f32 0.0, %v548
      %v550 = vpop.f32.mrb[0].mxu0
      %v551 = vpop.f32.mrb[0].mxu0
      %v552 = vadd.f32 0.0, %v551
      %v553 = vpop.f32.mrb[0].mxu0
      %554 = vmatprep.mubr.bf16.mxu0 0
      %555 = vmatmul.mubr.bf16.gmra.mrb[0].mxu0 %v418
      %v556 = vpop.f32.mrb[0].mxu0
      %v557 = vadd.f32 0.0, %v556
      %v558 = vpop.f32.mrb[0].mxu0
      %v559 = vpop.f32.mrb[0].mxu0
      %v560 = vadd.f32 0.0, %v559
      %v561 = vpop.f32.mrb[0].mxu0
      %562 = vmatprep.mubr.bf16.mxu0 0
      %563 = vmatmul.mubr.bf16.gmra.mrb[0].mxu0 %v421
      %v564 = vpop.f32.mrb[0].mxu0
      %v565 = vadd.f32 0.0, %v564
      %v566 = vpop.f32.mrb[0].mxu0
      %v567 = vpop.f32.mrb[0].mxu0
      %v568 = vadd.f32 0.0, %v567
      %v569 = vpop.f32.mrb[0].mxu0
      %570 = vmatprep.mubr.bf16.mxu0 0
      %571 = vmatmul.mubr.bf16.gmra.mrb[0].mxu0 %v424
      %v572 = vpop.f32.mrb[0].mxu0
      %v573 = vadd.f32 0.0, %v572
      %v574 = vpop.f32.mrb[0].mxu0
      %v575 = vpop.f32.mrb[0].mxu0
      %v576 = vadd.f32 0.0, %v575
      %v577 = vpop.f32.mrb[0].mxu0
      %578 = vmatprep.mubr.bf16.mxu0 0
      %579 = vmatmul.mubr.bf16.gmra.mrb[0].mxu0 %v427
      %v580 = vpop.f32.mrb[0].mxu0
      %v581 = vadd.f32 0.0, %v580
      %v582 = vpop.f32.mrb[0].mxu0
      %v583 = vpop.f32.mrb[0].mxu0
      %v584 = vadd.f32 0.0, %v583
      %v585 = vpop.f32.mrb[0].mxu0
      %586 = vmatprep.mubr.bf16.mxu0 0
      %587 = vmatmul.mubr.bf16.gmra.mrb[0].mxu0 %v430
      %v588 = vpop.f32.mrb[0].mxu0
      %v589 = vadd.f32 0.0, %v588
      %v590 = vpop.f32.mrb[0].mxu0
      %v591 = vpop.f32.mrb[0].mxu0
      %v592 = vadd.f32 0.0, %v591
      %v593 = vpop.f32.mrb[0].mxu0
      %594 = vmatprep.mubr.bf16.mxu0 0
      %595 = vmatmul.mubr.bf16.gmra.mrb[0].mxu0 %v433
      %v596 = vpop.f32.mrb[0].mxu0
      %v597 = vadd.f32 0.0, %v596
      %v598 = vpop.f32.mrb[0].mxu0
      %v599 = vpop.f32.mrb[0].mxu0
      %v600 = vadd.f32 0.0, %v599
      %v601 = vpop.f32.mrb[0].mxu0
      %602 = vdwg.mxu0
      %v604 = vsel %vm386, %v287, 0
      %v607 = vsel %vm386, %v288, 0
      %v610 = vsel %vm386, %v289, 0
      %v613 = vsel %vm386, %v290, 0
      %v616 = vsel %vm386, %v291, 0
      %v619 = vsel %vm386, %v292, 0
      %v622 = vsel %vm386, %v293, 0
      %v625 = vsel %vm386, %v294, 0
      %v628 = vsel %vm386, %v295, 0
      %v631 = vsel %vm386, %v296, 0
      %v634 = vsel %vm386, %v297, 0
      %v637 = vsel %vm386, %v298, 0
      %v640 = vsel %vm386, %v299, 0
      %v643 = vsel %vm386, %v300, 0
      %v646 = vsel %vm386, %v301, 0
      %v649 = vsel %vm386, %v302, 0
      %v652 = vand.u32 %v303, %v438
      %654 = vmatprep.subr.bf16.mxu0 0
      %655 = vmatpush1.bf16.msra.mxu0 %v652
      %656 = vmatprep.subr.bf16.mxu0 0
      %657 = vmatpush1.bf16.msra.mxu0 0
      %658 = vmatprep.subr.bf16.mxu0 0
      %659 = vmatpush1.bf16.msra.mxu0 0
      %660 = vmatprep.subr.bf16.mxu0 0
      %661 = vmatpush1.bf16.msra.mxu0 0
      %662 = vmatprep.subr.bf16.mxu0 0
      %663 = vmatpush1.bf16.msra.mxu0 0
      %664 = vmatprep.subr.bf16.mxu0 0
      %665 = vmatpush1.bf16.msra.mxu0 0
      %666 = vmatprep.subr.bf16.mxu0 0
      %667 = vmatpush1.bf16.msra.mxu0 0
      %668 = vmatprep.subr.bf16.mxu0 0
      %669 = vmatpush1.bf16.msra.mxu0 0
      %670 = vmatprep.subr.bf16.mxu0 0
      %671 = vmatpush1.bf16.msra.mxu0 0
      %672 = vmatprep.subr.bf16.mxu0 0
      %673 = vmatpush1.bf16.msra.mxu0 0
      %674 = vmatprep.subr.bf16.mxu0 0
      %675 = vmatpush1.bf16.msra.mxu0 0
      %676 = vmatprep.subr.bf16.mxu0 0
      %677 = vmatpush1.bf16.msra.mxu0 0
      %678 = vmatprep.subr.bf16.mxu0 0
      %679 = vmatpush1.bf16.msra.mxu0 0
      %680 = vmatprep.subr.bf16.mxu0 0
      %681 = vmatpush1.bf16.msra.mxu0 0
      %682 = vmatprep.subr.bf16.mxu0 0
      %683 = vmatpush1.bf16.msra.mxu0 0
      %684 = vmatprep.subr.bf16.mxu0 0
      %685 = vmatpush1.bf16.msra.mxu0 0
      %686 = vmatprep.mubr.bf16.mxu0 0
      %687 = vmatmul.mubr.bf16.gmra.mrb[0].mxu0 %v604
      %v688 = vpop.f32.mrb[0].mxu0
      %v689 = vadd.f32 %v477, %v688
      %v690 = vpop.f32.mrb[0].mxu0
      %v691 = vpop.f32.mrb[0].mxu0
      %v692 = vadd.f32 %v480, %v691
      %v693 = vpop.f32.mrb[0].mxu0
      %694 = vmatprep.mubr.bf16.mxu0 0
      %695 = vmatmul.mubr.bf16.gmra.mrb[0].mxu0 %v607
      %v696 = vpop.f32.mrb[0].mxu0
      %v697 = vadd.f32 %v485, %v696
      %v698 = vpop.f32.mrb[0].mxu0
      %v699 = vpop.f32.mrb[0].mxu0
      %v700 = vadd.f32 %v488, %v699
      %v701 = vpop.f32.mrb[0].mxu0
      %702 = vmatprep.mubr.bf16.mxu0 0
      %703 = vmatmul.mubr.bf16.gmra.mrb[0].mxu0 %v610
      %v704 = vpop.f32.mrb[0].mxu0
      %v705 = vadd.f32 %v493, %v704
      %v706 = vpop.f32.mrb[0].mxu0
      %v707 = vpop.f32.mrb[0].mxu0
      %v708 = vadd.f32 %v496, %v707
      %v709 = vpop.f32.mrb[0].mxu0
      %710 = vmatprep.mubr.bf16.mxu0 0
      %711 = vmatmul.mubr.bf16.gmra.mrb[0].mxu0 %v613
      %v712 = vpop.f32.mrb[0].mxu0
      %v713 = vadd.f32 %v501, %v712
      %v714 = vpop.f32.mrb[0].mxu0
      %v715 = vpop.f32.mrb[0].mxu0
      %v716 = vadd.f32 %v504, %v715
      %v717 = vpop.f32.mrb[0].mxu0
      %718 = vmatprep.mubr.bf16.mxu0 0
      %719 = vmatmul.mubr.bf16.gmra.mrb[0].mxu0 %v616
      %v720 = vpop.f32.mrb[0].mxu0
      %v721 = vadd.f32 %v509, %v720
      %v722 = vpop.f32.mrb[0].mxu0
      %v723 = vpop.f32.mrb[0].mxu0
      %v724 = vadd.f32 %v512, %v723
      %v725 = vpop.f32.mrb[0].mxu0
      %726 = vmatprep.mubr.bf16.mxu0 0
      %727 = vmatmul.mubr.bf16.gmra.mrb[0].mxu0 %v619
      %v728 = vpop.f32.mrb[0].mxu0
      %v729 = vadd.f32 %v517, %v728
      %v730 = vpop.f32.mrb[0].mxu0
      %v731 = vpop.f32.mrb[0].mxu0
      %v732 = vadd.f32 %v520, %v731
      %v733 = vpop.f32.mrb[0].mxu0
      %734 = vmatprep.mubr.bf16.mxu0 0
      %735 = vmatmul.mubr.bf16.gmra.mrb[0].mxu0 %v622
      %v736 = vpop.f32.mrb[0].mxu0
      %v737 = vadd.f32 %v525, %v736
      %v738 = vpop.f32.mrb[0].mxu0
      %v739 = vpop.f32.mrb[0].mxu0
      %v740 = vadd.f32 %v528, %v739
      %v741 = vpop.f32.mrb[0].mxu0
      %742 = vmatprep.mubr.bf16.mxu0 0
      %743 = vmatmul.mubr.bf16.gmra.mrb[0].mxu0 %v625
      %v744 = vpop.f32.mrb[0].mxu0
      %v745 = vadd.f32 %v533, %v744
      %v746 = vpop.f32.mrb[0].mxu0
      %v747 = vpop.f32.mrb[0].mxu0
      %v748 = vadd.f32 %v536, %v747
      %v749 = vpop.f32.mrb[0].mxu0
      %750 = vmatprep.mubr.bf16.mxu0 0
      %751 = vmatmul.mubr.bf16.gmra.mrb[0].mxu0 %v628
      %v752 = vpop.f32.mrb[0].mxu0
      %v753 = vadd.f32 %v541, %v752
      %v754 = vpop.f32.mrb[0].mxu0
      %v755 = vpop.f32.mrb[0].mxu0
      %v756 = vadd.f32 %v544, %v755
      %v757 = vpop.f32.mrb[0].mxu0
      %758 = vmatprep.mubr.bf16.mxu0 0
      %759 = vmatmul.mubr.bf16.gmra.mrb[0].mxu0 %v631
      %v760 = vpop.f32.mrb[0].mxu0
      %v761 = vadd.f32 %v549, %v760
      %v762 = vpop.f32.mrb[0].mxu0
      %v763 = vpop.f32.mrb[0].mxu0
      %v764 = vadd.f32 %v552, %v763
      %v765 = vpop.f32.mrb[0].mxu0
      %766 = vmatprep.mubr.bf16.mxu0 0
      %767 = vmatmul.mubr.bf16.gmra.mrb[0].mxu0 %v634
      %v768 = vpop.f32.mrb[0].mxu0
      %v769 = vadd.f32 %v557, %v768
      %v770 = vpop.f32.mrb[0].mxu0
      %v771 = vpop.f32.mrb[0].mxu0
      %v772 = vadd.f32 %v560, %v771
      %v773 = vpop.f32.mrb[0].mxu0
      %774 = vmatprep.mubr.bf16.mxu0 0
      %775 = vmatmul.mubr.bf16.gmra.mrb[0].mxu0 %v637
      %v776 = vpop.f32.mrb[0].mxu0
      %v777 = vadd.f32 %v565, %v776
      %v778 = vpop.f32.mrb[0].mxu0
      %v779 = vpop.f32.mrb[0].mxu0
      %v780 = vadd.f32 %v568, %v779
      %v781 = vpop.f32.mrb[0].mxu0
      %782 = vmatprep.mubr.bf16.mxu0 0
      %783 = vmatmul.mubr.bf16.gmra.mrb[0].mxu0 %v640
      %v784 = vpop.f32.mrb[0].mxu0
      %v785 = vadd.f32 %v573, %v784
      %v786 = vpop.f32.mrb[0].mxu0
      %v787 = vpop.f32.mrb[0].mxu0
      %v788 = vadd.f32 %v576, %v787
      %v789 = vpop.f32.mrb[0].mxu0
      %790 = vmatprep.mubr.bf16.mxu0 0
      %791 = vmatmul.mubr.bf16.gmra.mrb[0].mxu0 %v643
      %v792 = vpop.f32.mrb[0].mxu0
      %v793 = vadd.f32 %v581, %v792
      %v794 = vpop.f32.mrb[0].mxu0
      %v795 = vpop.f32.mrb[0].mxu0
      %v796 = vadd.f32 %v584, %v795
      %v797 = vpop.f32.mrb[0].mxu0
      %798 = vmatprep.mubr.bf16.mxu0 0
      %799 = vmatmul.mubr.bf16.gmra.mrb[0].mxu0 %v646
      %v800 = vpop.f32.mrb[0].mxu0
      %v801 = vadd.f32 %v589, %v800
      %v802 = vpop.f32.mrb[0].mxu0
      %v803 = vpop.f32.mrb[0].mxu0
      %v804 = vadd.f32 %v592, %v803
      %v805 = vpop.f32.mrb[0].mxu0
      %806 = vmatprep.mubr.bf16.mxu0 0
      %807 = vmatmul.mubr.bf16.gmra.mrb[0].mxu0 %v649
      %v808 = vpop.f32.mrb[0].mxu0
      %v809 = vadd.f32 %v597, %v808
      %v810 = vpop.f32.mrb[0].mxu0
      %v811 = vpop.f32.mrb[0].mxu0
      %v812 = vadd.f32 %v600, %v811
      %v813 = vpop.f32.mrb[0].mxu0
      %814 = vdwg.mxu0
      %s815 = scalar_lea.vmem %s218, 2
      %v816 = vld [vmem:[%s815] ss:$2 sm:$0xff]
      %s817 = scalar_lea.vmem %s218, 18
      %v818 = vld [vmem:[%s817] ss:$2 sm:$0xff]
      %s819 = scalar_lea.vmem %s218, 82
      %v820 = vld [vmem:[%s819] ss:$2 sm:$0xff]
      %s821 = scalar_lea.vmem %s218, 98
      %v822 = vld [vmem:[%s821] ss:$2 sm:$0xff]
      %s823 = scalar_lea.vmem %s218, 162
      %v824 = vld [vmem:[%s823] ss:$2 sm:$0xff]
      %s825 = scalar_lea.vmem %s218, 178
      %v826 = vld [vmem:[%s825] ss:$2 sm:$0xff]
      %s827 = scalar_lea.vmem %s218, 242
      %v828 = vld [vmem:[%s827] ss:$2 sm:$0xff]
      %s829 = scalar_lea.vmem %s218, 258
      %v830 = vld [vmem:[%s829] ss:$2 sm:$0xff]
      %s831 = scalar_lea.vmem %s218, 322
      %v832 = vld [vmem:[%s831] ss:$2 sm:$0xff]
      %s833 = scalar_lea.vmem %s218, 338
      %v834 = vld [vmem:[%s833] ss:$2 sm:$0xff]
      %s835 = scalar_lea.vmem %s218, 402
      %v836 = vld [vmem:[%s835] ss:$2 sm:$0xff]
      %s837 = scalar_lea.vmem %s218, 418
      %v838 = vld [vmem:[%s837] ss:$2 sm:$0xff]
      %s839 = scalar_lea.vmem %s218, 482
      %v840 = vld [vmem:[%s839] ss:$2 sm:$0xff]
      %s841 = scalar_lea.vmem %s218, 498
      %v842 = vld [vmem:[%s841] ss:$2 sm:$0xff]
      %s843 = scalar_lea.vmem %s218, 562
      %v844 = vld [vmem:[%s843] ss:$2 sm:$0xff]
      %s845 = scalar_lea.vmem %s218, 578
      %v846 = vld [vmem:[%s845] ss:$2 sm:$0xff]
      %s847 = scalar_lea.vmem %s218, 642
      %v848 = vld [vmem:[%s847] ss:$2 sm:$0xff]
      %s849 = scalar_lea.vmem %s218, 658
      %v850 = vld [vmem:[%s849] ss:$2 sm:$0xff]
      %s851 = scalar_lea.vmem %s218, 722
      %v852 = vld [vmem:[%s851] ss:$2 sm:$0xff]
      %s853 = scalar_lea.vmem %s218, 738
      %v854 = vld [vmem:[%s853] ss:$2 sm:$0xff]
      %s855 = scalar_lea.vmem %s218, 802
      %v856 = vld [vmem:[%s855] ss:$2 sm:$0xff]
      %s857 = scalar_lea.vmem %s218, 818
      %v858 = vld [vmem:[%s857] ss:$2 sm:$0xff]
      %s859 = scalar_lea.vmem %s218, 882
      %v860 = vld [vmem:[%s859] ss:$2 sm:$0xff]
      %s861 = scalar_lea.vmem %s218, 898
      %v862 = vld [vmem:[%s861] ss:$2 sm:$0xff]
      %s863 = scalar_lea.vmem %s218, 962
      %v864 = vld [vmem:[%s863] ss:$2 sm:$0xff]
      %s865 = scalar_lea.vmem %s218, 978
      %v866 = vld [vmem:[%s865] ss:$2 sm:$0xff]
      %s867 = scalar_lea.vmem %s218, 1042
      %v868 = vld [vmem:[%s867] ss:$2 sm:$0xff]
      %s869 = scalar_lea.vmem %s218, 1058
      %v870 = vld [vmem:[%s869] ss:$2 sm:$0xff]
      %s871 = scalar_lea.vmem %s218, 1122
      %v872 = vld [vmem:[%s871] ss:$2 sm:$0xff]
      %s873 = scalar_lea.vmem %s218, 1138
      %v874 = vld [vmem:[%s873] ss:$2 sm:$0xff]
      %s875 = scalar_lea.vmem %s218, 1202
      %v876 = vld [vmem:[%s875] ss:$2 sm:$0xff]
      %s877 = scalar_lea.vmem %s218, 1218
      %v878 = vld [vmem:[%s877] ss:$2 sm:$0xff]
      %v879 = vpack.c.bf16 %v818, %v816
      %v880 = vpack.c.bf16 %v822, %v820
      %v881 = vpack.c.bf16 %v826, %v824
      %v882 = vpack.c.bf16 %v830, %v828
      %v883 = vpack.c.bf16 %v834, %v832
      %v884 = vpack.c.bf16 %v838, %v836
      %v885 = vpack.c.bf16 %v842, %v840
      %v886 = vpack.c.bf16 %v846, %v844
      %v887 = vpack.c.bf16 %v850, %v848
      %v888 = vpack.c.bf16 %v854, %v852
      %v889 = vpack.c.bf16 %v858, %v856
      %v890 = vpack.c.bf16 %v862, %v860
      %v891 = vpack.c.bf16 %v866, %v864
      %v892 = vpack.c.bf16 %v870, %v868
      %v893 = vpack.c.bf16 %v874, %v872
      %v894 = vpack.c.bf16 %v878, %v876
      %s895 = scalar_lea.vmem %s1, 4
      %v896 = vld [vmem:[%s895] sm:$0x3]
      %v898 = vsel %vm386, %v879, 0
      %v901 = vsel %vm386, %v880, 0
      %v904 = vsel %vm386, %v881, 0
      %v907 = vsel %vm386, %v882, 0
      %v910 = vsel %vm386, %v883, 0
      %v913 = vsel %vm386, %v884, 0
      %v916 = vsel %vm386, %v885, 0
      %v919 = vsel %vm386, %v886, 0
      %v922 = vsel %vm386, %v887, 0
      %v925 = vsel %vm386, %v888, 0
      %v928 = vsel %vm386, %v889, 0
      %v931 = vsel %vm386, %v890, 0
      %v934 = vsel %vm386, %v891, 0
      %v937 = vsel %vm386, %v892, 0
      %v940 = vsel %vm386, %v893, 0
      %v943 = vsel %vm386, %v894, 0
      %v946 = vand.u32 %v896, %v438
      %948 = vmatprep.subr.bf16.mxu0 0
      %949 = vmatpush1.bf16.msra.mxu0 %v946
      %950 = vmatprep.subr.bf16.mxu0 0
      %951 = vmatpush1.bf16.msra.mxu0 0
      %952 = vmatprep.subr.bf16.mxu0 0
      %953 = vmatpush1.bf16.msra.mxu0 0
      %954 = vmatprep.subr.bf16.mxu0 0
      %955 = vmatpush1.bf16.msra.mxu0 0
      %956 = vmatprep.subr.bf16.mxu0 0
      %957 = vmatpush1.bf16.msra.mxu0 0
      %958 = vmatprep.subr.bf16.mxu0 0
      %959 = vmatpush1.bf16.msra.mxu0 0
      %960 = vmatprep.subr.bf16.mxu0 0
      %961 = vmatpush1.bf16.msra.mxu0 0
      %962 = vmatprep.subr.bf16.mxu0 0
      %963 = vmatpush1.bf16.msra.mxu0 0
      %964 = vmatprep.subr.bf16.mxu0 0
      %965 = vmatpush1.bf16.msra.mxu0 0
      %966 = vmatprep.subr.bf16.mxu0 0
      %967 = vmatpush1.bf16.msra.mxu0 0
      %968 = vmatprep.subr.bf16.mxu0 0
      %969 = vmatpush1.bf16.msra.mxu0 0
      %970 = vmatprep.subr.bf16.mxu0 0
      %971 = vmatpush1.bf16.msra.mxu0 0
      %972 = vmatprep.subr.bf16.mxu0 0
      %973 = vmatpush1.bf16.msra.mxu0 0
      %974 = vmatprep.subr.bf16.mxu0 0
      %975 = vmatpush1.bf16.msra.mxu0 0
      %976 = vmatprep.subr.bf16.mxu0 0
      %977 = vmatpush1.bf16.msra.mxu0 0
      %978 = vmatprep.subr.bf16.mxu0 0
      %979 = vmatpush1.bf16.msra.mxu0 0
      %980 = vmatprep.mubr.bf16.mxu0 0
      %981 = vmatmul.mubr.bf16.gmra.mrb[0].mxu0 %v898
      %v982 = vpop.f32.mrb[0].mxu0
      %v983 = vadd.f32 0.0, %v982
      %v984 = vpop.f32.mrb[0].mxu0
      %v985 = vpop.f32.mrb[0].mxu0
      %v986 = vadd.f32 0.0, %v985
      %v987 = vpop.f32.mrb[0].mxu0
      %988 = vmatprep.mubr.bf16.mxu0 0
      %989 = vmatmul.mubr.bf16.gmra.mrb[0].mxu0 %v901
      %v990 = vpop.f32.mrb[0].mxu0
      %v991 = vadd.f32 0.0, %v990
      %v992 = vpop.f32.mrb[0].mxu0
      %v993 = vpop.f32.mrb[0].mxu0
      %v994 = vadd.f32 0.0, %v993
      %v995 = vpop.f32.mrb[0].mxu0
      %996 = vmatprep.mubr.bf16.mxu0 0
      %997 = vmatmul.mubr.bf16.gmra.mrb[0].mxu0 %v904
      %v998 = vpop.f32.mrb[0].mxu0
      %v999 = vadd.f32 0.0, %v998
      %v1000 = vpop.f32.mrb[0].mxu0
      %v1001 = vpop.f32.mrb[0].mxu0
      %v1002 = vadd.f32 0.0, %v1001
      %v1003 = vpop.f32.mrb[0].mxu0
      %1004 = vmatprep.mubr.bf16.mxu0 0
      %1005 = vmatmul.mubr.bf16.gmra.mrb[0].mxu0 %v907
      %v1006 = vpop.f32.mrb[0].mxu0
      %v1007 = vadd.f32 0.0, %v1006
      %v1008 = vpop.f32.mrb[0].mxu0
      %v1009 = vpop.f32.mrb[0].mxu0
      %v1010 = vadd.f32 0.0, %v1009
      %v1011 = vpop.f32.mrb[0].mxu0
      %1012 = vmatprep.mubr.bf16.mxu0 0
      %1013 = vmatmul.mubr.bf16.gmra.mrb[0].mxu0 %v910
      %v1014 = vpop.f32.mrb[0].mxu0
      %v1015 = vadd.f32 0.0, %v1014
      %v1016 = vpop.f32.mrb[0].mxu0
      %v1017 = vpop.f32.mrb[0].mxu0
      %v1018 = vadd.f32 0.0, %v1017
      %v1019 = vpop.f32.mrb[0].mxu0
      %1020 = vmatprep.mubr.bf16.mxu0 0
      %1021 = vmatmul.mubr.bf16.gmra.mrb[0].mxu0 %v913
      %v1022 = vpop.f32.mrb[0].mxu0
      %v1023 = vadd.f32 0.0, %v1022
      %v1024 = vpop.f32.mrb[0].mxu0
      %v1025 = vpop.f32.mrb[0].mxu0
      %v1026 = vadd.f32 0.0, %v1025
      %v1027 = vpop.f32.mrb[0].mxu0
      %1028 = vmatprep.mubr.bf16.mxu0 0
      %1029 = vmatmul.mubr.bf16.gmra.mrb[0].mxu0 %v916
      %v1030 = vpop.f32.mrb[0].mxu0
      %v1031 = vadd.f32 0.0, %v1030
      %v1032 = vpop.f32.mrb[0].mxu0
      %v1033 = vpop.f32.mrb[0].mxu0
      %v1034 = vadd.f32 0.0, %v1033
      %v1035 = vpop.f32.mrb[0].mxu0
      %1036 = vmatprep.mubr.bf16.mxu0 0
      %1037 = vmatmul.mubr.bf16.gmra.mrb[0].mxu0 %v919
      %v1038 = vpop.f32.mrb[0].mxu0
      %v1039 = vadd.f32 0.0, %v1038
      %v1040 = vpop.f32.mrb[0].mxu0
      %v1041 = vpop.f32.mrb[0].mxu0
      %v1042 = vadd.f32 0.0, %v1041
      %v1043 = vpop.f32.mrb[0].mxu0
      %1044 = vmatprep.mubr.bf16.mxu0 0
      %1045 = vmatmul.mubr.bf16.gmra.mrb[0].mxu0 %v922
      %v1046 = vpop.f32.mrb[0].mxu0
      %v1047 = vadd.f32 0.0, %v1046
      %v1048 = vpop.f32.mrb[0].mxu0
      %v1049 = vpop.f32.mrb[0].mxu0
      %v1050 = vadd.f32 0.0, %v1049
      %v1051 = vpop.f32.mrb[0].mxu0
      %1052 = vmatprep.mubr.bf16.mxu0 0
      %1053 = vmatmul.mubr.bf16.gmra.mrb[0].mxu0 %v925
      %v1054 = vpop.f32.mrb[0].mxu0
      %v1055 = vadd.f32 0.0, %v1054
      %v1056 = vpop.f32.mrb[0].mxu0
      %v1057 = vpop.f32.mrb[0].mxu0
      %v1058 = vadd.f32 0.0, %v1057
      %v1059 = vpop.f32.mrb[0].mxu0
      %1060 = vmatprep.mubr.bf16.mxu0 0
      %1061 = vmatmul.mubr.bf16.gmra.mrb[0].mxu0 %v928
      %v1062 = vpop.f32.mrb[0].mxu0
      %v1063 = vadd.f32 0.0, %v1062
      %v1064 = vpop.f32.mrb[0].mxu0
      %v1065 = vpop.f32.mrb[0].mxu0
      %v1066 = vadd.f32 0.0, %v1065
      %v1067 = vpop.f32.mrb[0].mxu0
      %1068 = vmatprep.mubr.bf16.mxu0 0
      %1069 = vmatmul.mubr.bf16.gmra.mrb[0].mxu0 %v931
      %v1070 = vpop.f32.mrb[0].mxu0
      %v1071 = vadd.f32 0.0, %v1070
      %v1072 = vpop.f32.mrb[0].mxu0
      %v1073 = vpop.f32.mrb[0].mxu0
      %v1074 = vadd.f32 0.0, %v1073
      %v1075 = vpop.f32.mrb[0].mxu0
      %1076 = vmatprep.mubr.bf16.mxu0 0
      %1077 = vmatmul.mubr.bf16.gmra.mrb[0].mxu0 %v934
      %v1078 = vpop.f32.mrb[0].mxu0
      %v1079 = vadd.f32 0.0, %v1078
      %v1080 = vpop.f32.mrb[0].mxu0
      %v1081 = vpop.f32.mrb[0].mxu0
      %v1082 = vadd.f32 0.0, %v1081
      %v1083 = vpop.f32.mrb[0].mxu0
      %1084 = vmatprep.mubr.bf16.mxu0 0
      %1085 = vmatmul.mubr.bf16.gmra.mrb[0].mxu0 %v937
      %v1086 = vpop.f32.mrb[0].mxu0
      %v1087 = vadd.f32 0.0, %v1086
      %v1088 = vpop.f32.mrb[0].mxu0
      %v1089 = vpop.f32.mrb[0].mxu0
      %v1090 = vadd.f32 0.0, %v1089
      %v1091 = vpop.f32.mrb[0].mxu0
      %1092 = vmatprep.mubr.bf16.mxu0 0
      %1093 = vmatmul.mubr.bf16.gmra.mrb[0].mxu0 %v940
      %v1094 = vpop.f32.mrb[0].mxu0
      %v1095 = vadd.f32 0.0, %v1094
      %v1096 = vpop.f32.mrb[0].mxu0
      %v1097 = vpop.f32.mrb[0].mxu0
      %v1098 = vadd.f32 0.0, %v1097
      %v1099 = vpop.f32.mrb[0].mxu0
      %1100 = vmatprep.mubr.bf16.mxu0 0
      %1101 = vmatmul.mubr.bf16.gmra.mrb[0].mxu0 %v943
      %v1102 = vpop.f32.mrb[0].mxu0
      %v1103 = vadd.f32 0.0, %v1102
      %v1104 = vpop.f32.mrb[0].mxu0
      %v1105 = vpop.f32.mrb[0].mxu0
      %v1106 = vadd.f32 0.0, %v1105
      %v1107 = vpop.f32.mrb[0].mxu0
      %1108 = vdwg.mxu0
      %v1109 = vadd.f32 %v689, %v983
      %v1110 = vadd.f32 %v692, %v986
      %v1111 = vadd.f32 %v697, %v991
      %v1112 = vadd.f32 %v700, %v994
      %v1113 = vadd.f32 %v705, %v999
      %v1114 = vadd.f32 %v708, %v1002
      %v1115 = vadd.f32 %v713, %v1007
      %v1116 = vadd.f32 %v716, %v1010
      %v1117 = vadd.f32 %v721, %v1015
      %v1118 = vadd.f32 %v724, %v1018
      %v1119 = vadd.f32 %v729, %v1023
      %v1120 = vadd.f32 %v732, %v1026
      %v1121 = vadd.f32 %v737, %v1031
      %v1122 = vadd.f32 %v740, %v1034
      %v1123 = vadd.f32 %v745, %v1039
      %v1124 = vadd.f32 %v748, %v1042
      %v1125 = vadd.f32 %v753, %v1047
      %v1126 = vadd.f32 %v756, %v1050
      %v1127 = vadd.f32 %v761, %v1055
      %v1128 = vadd.f32 %v764, %v1058
      %v1129 = vadd.f32 %v769, %v1063
      %v1130 = vadd.f32 %v772, %v1066
      %v1131 = vadd.f32 %v777, %v1071
      %v1132 = vadd.f32 %v780, %v1074
      %v1133 = vadd.f32 %v785, %v1079
      %v1134 = vadd.f32 %v788, %v1082
      %v1135 = vadd.f32 %v793, %v1087
      %v1136 = vadd.f32 %v796, %v1090
      %v1137 = vadd.f32 %v801, %v1095
      %v1138 = vadd.f32 %v804, %v1098
      %v1139 = vadd.f32 %v809, %v1103
      %v1140 = vadd.f32 %v812, %v1106
      %s1141 = scalar_lea.vmem %s218, 40
      %v1142 = vld [vmem:[%s1141] ss:$2 sm:$0xff]
      %s1143 = scalar_lea.vmem %s1141, 16
      %v1144 = vld [vmem:[%s1143] ss:$2 sm:$0xff]
      %s1145 = scalar_lea.vmem %s1141, 80
      %v1146 = vld [vmem:[%s1145] ss:$2 sm:$0xff]
      %s1147 = scalar_lea.vmem %s1141, 96
      %v1148 = vld [vmem:[%s1147] ss:$2 sm:$0xff]
      %s1149 = scalar_lea.vmem %s1141, 160
      %v1150 = vld [vmem:[%s1149] ss:$2 sm:$0xff]
      %s1151 = scalar_lea.vmem %s1141, 176
      %v1152 = vld [vmem:[%s1151] ss:$2 sm:$0xff]
      %s1153 = scalar_lea.vmem %s1141, 240
      %v1154 = vld [vmem:[%s1153] ss:$2 sm:$0xff]
      %s1155 = scalar_lea.vmem %s1141, 256
      %v1156 = vld [vmem:[%s1155] ss:$2 sm:$0xff]
      %s1157 = scalar_lea.vmem %s1141, 320
      %v1158 = vld [vmem:[%s1157] ss:$2 sm:$0xff]
      %s1159 = scalar_lea.vmem %s1141, 336
      %v1160 = vld [vmem:[%s1159] ss:$2 sm:$0xff]
      %s1161 = scalar_lea.vmem %s1141, 400
      %v1162 = vld [vmem:[%s1161] ss:$2 sm:$0xff]
      %s1163 = scalar_lea.vmem %s1141, 416
      %v1164 = vld [vmem:[%s1163] ss:$2 sm:$0xff]
      %s1165 = scalar_lea.vmem %s1141, 480
      %v1166 = vld [vmem:[%s1165] ss:$2 sm:$0xff]
      %s1167 = scalar_lea.vmem %s1141, 496
      %v1168 = vld [vmem:[%s1167] ss:$2 sm:$0xff]
      %s1169 = scalar_lea.vmem %s1141, 560
      %v1170 = vld [vmem:[%s1169] ss:$2 sm:$0xff]
      %s1171 = scalar_lea.vmem %s1141, 576
      %v1172 = vld [vmem:[%s1171] ss:$2 sm:$0xff]
      %s1173 = scalar_lea.vmem %s1141, 640
      %v1174 = vld [vmem:[%s1173] ss:$2 sm:$0xff]
      %s1175 = scalar_lea.vmem %s1141, 656
      %v1176 = vld [vmem:[%s1175] ss:$2 sm:$0xff]
      %s1177 = scalar_lea.vmem %s1141, 720
      %v1178 = vld [vmem:[%s1177] ss:$2 sm:$0xff]
      %s1179 = scalar_lea.vmem %s1141, 736
      %v1180 = vld [vmem:[%s1179] ss:$2 sm:$0xff]
      %s1181 = scalar_lea.vmem %s1141, 800
      %v1182 = vld [vmem:[%s1181] ss:$2 sm:$0xff]
      %s1183 = scalar_lea.vmem %s1141, 816
      %v1184 = vld [vmem:[%s1183] ss:$2 sm:$0xff]
      %s1185 = scalar_lea.vmem %s1141, 880
      %v1186 = vld [vmem:[%s1185] ss:$2 sm:$0xff]
      %s1187 = scalar_lea.vmem %s1141, 896
      %v1188 = vld [vmem:[%s1187] ss:$2 sm:$0xff]
      %s1189 = scalar_lea.vmem %s1141, 960
      %v1190 = vld [vmem:[%s1189] ss:$2 sm:$0xff]
      %s1191 = scalar_lea.vmem %s1141, 976
      %v1192 = vld [vmem:[%s1191] ss:$2 sm:$0xff]
      %s1193 = scalar_lea.vmem %s1141, 1040
      %v1194 = vld [vmem:[%s1193] ss:$2 sm:$0xff]
      %s1195 = scalar_lea.vmem %s1141, 1056
      %v1196 = vld [vmem:[%s1195] ss:$2 sm:$0xff]
      %s1197 = scalar_lea.vmem %s1141, 1120
      %v1198 = vld [vmem:[%s1197] ss:$2 sm:$0xff]
      %s1199 = scalar_lea.vmem %s1141, 1136
      %v1200 = vld [vmem:[%s1199] ss:$2 sm:$0xff]
      %s1201 = scalar_lea.vmem %s1141, 1200
      %v1202 = vld [vmem:[%s1201] ss:$2 sm:$0xff]
      %s1203 = scalar_lea.vmem %s1141, 1216
      %v1204 = vld [vmem:[%s1203] ss:$2 sm:$0xff]
      %v1205 = vpack.c.bf16 %v1144, %v1142
      %v1206 = vpack.c.bf16 %v1148, %v1146
      %v1207 = vpack.c.bf16 %v1152, %v1150
      %v1208 = vpack.c.bf16 %v1156, %v1154
      %v1209 = vpack.c.bf16 %v1160, %v1158
      %v1210 = vpack.c.bf16 %v1164, %v1162
      %v1211 = vpack.c.bf16 %v1168, %v1166
      %v1212 = vpack.c.bf16 %v1172, %v1170
      %v1213 = vpack.c.bf16 %v1176, %v1174
      %v1214 = vpack.c.bf16 %v1180, %v1178
      %v1215 = vpack.c.bf16 %v1184, %v1182
      %v1216 = vpack.c.bf16 %v1188, %v1186
      %v1217 = vpack.c.bf16 %v1192, %v1190
      %v1218 = vpack.c.bf16 %v1196, %v1194
      %v1219 = vpack.c.bf16 %v1200, %v1198
      %v1220 = vpack.c.bf16 %v1204, %v1202
      %s1221 = scalar_lea.vmem %s1, 6
      %v1222 = vld [vmem:[%s1221] sm:$0x3]
      %v1224 = vsel %vm386, %v1205, 0
      %v1227 = vsel %vm386, %v1206, 0
      %v1230 = vsel %vm386, %v1207, 0
      %v1233 = vsel %vm386, %v1208, 0
      %v1236 = vsel %vm386, %v1209, 0
      %v1239 = vsel %vm386, %v1210, 0
      %v1242 = vsel %vm386, %v1211, 0
      %v1245 = vsel %vm386, %v1212, 0
      %v1248 = vsel %vm386, %v1213, 0
      %v1251 = vsel %vm386, %v1214, 0
      %v1254 = vsel %vm386, %v1215, 0
      %v1257 = vsel %vm386, %v1216, 0
      %v1260 = vsel %vm386, %v1217, 0
      %v1263 = vsel %vm386, %v1218, 0
      %v1266 = vsel %vm386, %v1219, 0
      %v1269 = vsel %vm386, %v1220, 0
      %v1272 = vand.u32 %v1222, %v438
      %1274 = vmatprep.subr.bf16.mxu0 0
      %1275 = vmatpush1.bf16.msra.mxu0 %v1272
      %1276 = vmatprep.subr.bf16.mxu0 0
      %1277 = vmatpush1.bf16.msra.mxu0 0
      %1278 = vmatprep.subr.bf16.mxu0 0
      %1279 = vmatpush1.bf16.msra.mxu0 0
      %1280 = vmatprep.subr.bf16.mxu0 0
      %1281 = vmatpush1.bf16.msra.mxu0 0
      %1282 = vmatprep.subr.bf16.mxu0 0
      %1283 = vmatpush1.bf16.msra.mxu0 0
      %1284 = vmatprep.subr.bf16.mxu0 0
      %1285 = vmatpush1.bf16.msra.mxu0 0
      %1286 = vmatprep.subr.bf16.mxu0 0
      %1287 = vmatpush1.bf16.msra.mxu0 0
      %1288 = vmatprep.subr.bf16.mxu0 0
      %1289 = vmatpush1.bf16.msra.mxu0 0
      %1290 = vmatprep.subr.bf16.mxu0 0
      %1291 = vmatpush1.bf16.msra.mxu0 0
      %1292 = vmatprep.subr.bf16.mxu0 0
      %1293 = vmatpush1.bf16.msra.mxu0 0
      %1294 = vmatprep.subr.bf16.mxu0 0
      %1295 = vmatpush1.bf16.msra.mxu0 0
      %1296 = vmatprep.subr.bf16.mxu0 0
      %1297 = vmatpush1.bf16.msra.mxu0 0
      %1298 = vmatprep.subr.bf16.mxu0 0
      %1299 = vmatpush1.bf16.msra.mxu0 0
      %1300 = vmatprep.subr.bf16.mxu0 0
      %1301 = vmatpush1.bf16.msra.mxu0 0
      %1302 = vmatprep.subr.bf16.mxu0 0
      %1303 = vmatpush1.bf16.msra.mxu0 0
      %1304 = vmatprep.subr.bf16.mxu0 0
      %1305 = vmatpush1.bf16.msra.mxu0 0
      %1306 = vmatprep.mubr.bf16.mxu0 0
      %1307 = vmatmul.mubr.bf16.gmra.mrb[0].mxu0 %v1224
      %v1308 = vpop.f32.mrb[0].mxu0
      %v1309 = vadd.f32 0.0, %v1308
      %v1310 = vpop.f32.mrb[0].mxu0
      %v1311 = vpop.f32.mrb[0].mxu0
      %v1312 = vadd.f32 0.0, %v1311
      %v1313 = vpop.f32.mrb[0].mxu0
      %1314 = vmatprep.mubr.bf16.mxu0 0
      %1315 = vmatmul.mubr.bf16.gmra.mrb[0].mxu0 %v1227
      %v1316 = vpop.f32.mrb[0].mxu0
      %v1317 = vadd.f32 0.0, %v1316
      %v1318 = vpop.f32.mrb[0].mxu0
      %v1319 = vpop.f32.mrb[0].mxu0
      %v1320 = vadd.f32 0.0, %v1319
      %v1321 = vpop.f32.mrb[0].mxu0
      %1322 = vmatprep.mubr.bf16.mxu0 0
      %1323 = vmatmul.mubr.bf16.gmra.mrb[0].mxu0 %v1230
      %v1324 = vpop.f32.mrb[0].mxu0
      %v1325 = vadd.f32 0.0, %v1324
      %v1326 = vpop.f32.mrb[0].mxu0
      %v1327 = vpop.f32.mrb[0].mxu0
      %v1328 = vadd.f32 0.0, %v1327
      %v1329 = vpop.f32.mrb[0].mxu0
      %1330 = vmatprep.mubr.bf16.mxu0 0
      %1331 = vmatmul.mubr.bf16.gmra.mrb[0].mxu0 %v1233
      %v1332 = vpop.f32.mrb[0].mxu0
      %v1333 = vadd.f32 0.0, %v1332
      %v1334 = vpop.f32.mrb[0].mxu0
      %v1335 = vpop.f32.mrb[0].mxu0
      %v1336 = vadd.f32 0.0, %v1335
      %v1337 = vpop.f32.mrb[0].mxu0
      %1338 = vmatprep.mubr.bf16.mxu0 0
      %1339 = vmatmul.mubr.bf16.gmra.mrb[0].mxu0 %v1236
      %v1340 = vpop.f32.mrb[0].mxu0
      %v1341 = vadd.f32 0.0, %v1340
      %v1342 = vpop.f32.mrb[0].mxu0
      %v1343 = vpop.f32.mrb[0].mxu0
      %v1344 = vadd.f32 0.0, %v1343
      %v1345 = vpop.f32.mrb[0].mxu0
      %1346 = vmatprep.mubr.bf16.mxu0 0
      %1347 = vmatmul.mubr.bf16.gmra.mrb[0].mxu0 %v1239
      %v1348 = vpop.f32.mrb[0].mxu0
      %v1349 = vadd.f32 0.0, %v1348
      %v1350 = vpop.f32.mrb[0].mxu0
      %v1351 = vpop.f32.mrb[0].mxu0
      %v1352 = vadd.f32 0.0, %v1351
      %v1353 = vpop.f32.mrb[0].mxu0
      %1354 = vmatprep.mubr.bf16.mxu0 0
      %1355 = vmatmul.mubr.bf16.gmra.mrb[0].mxu0 %v1242
      %v1356 = vpop.f32.mrb[0].mxu0
      %v1357 = vadd.f32 0.0, %v1356
      %v1358 = vpop.f32.mrb[0].mxu0
      %v1359 = vpop.f32.mrb[0].mxu0
      %v1360 = vadd.f32 0.0, %v1359
      %v1361 = vpop.f32.mrb[0].mxu0
      %1362 = vmatprep.mubr.bf16.mxu0 0
      %1363 = vmatmul.mubr.bf16.gmra.mrb[0].mxu0 %v1245
      %v1364 = vpop.f32.mrb[0].mxu0
      %v1365 = vadd.f32 0.0, %v1364
      %v1366 = vpop.f32.mrb[0].mxu0
      %v1367 = vpop.f32.mrb[0].mxu0
      %v1368 = vadd.f32 0.0, %v1367
      %v1369 = vpop.f32.mrb[0].mxu0
      %1370 = vmatprep.mubr.bf16.mxu0 0
      %1371 = vmatmul.mubr.bf16.gmra.mrb[0].mxu0 %v1248
      %v1372 = vpop.f32.mrb[0].mxu0
      %v1373 = vadd.f32 0.0, %v1372
      %v1374 = vpop.f32.mrb[0].mxu0
      %v1375 = vpop.f32.mrb[0].mxu0
      %v1376 = vadd.f32 0.0, %v1375
      %v1377 = vpop.f32.mrb[0].mxu0
      %1378 = vmatprep.mubr.bf16.mxu0 0
      %1379 = vmatmul.mubr.bf16.gmra.mrb[0].mxu0 %v1251
      %v1380 = vpop.f32.mrb[0].mxu0
      %v1381 = vadd.f32 0.0, %v1380
      %v1382 = vpop.f32.mrb[0].mxu0
      %v1383 = vpop.f32.mrb[0].mxu0
      %v1384 = vadd.f32 0.0, %v1383
      %v1385 = vpop.f32.mrb[0].mxu0
      %1386 = vmatprep.mubr.bf16.mxu0 0
      %1387 = vmatmul.mubr.bf16.gmra.mrb[0].mxu0 %v1254
      %v1388 = vpop.f32.mrb[0].mxu0
      %v1389 = vadd.f32 0.0, %v1388
      %v1390 = vpop.f32.mrb[0].mxu0
      %v1391 = vpop.f32.mrb[0].mxu0
      %v1392 = vadd.f32 0.0, %v1391
      %v1393 = vpop.f32.mrb[0].mxu0
      %1394 = vmatprep.mubr.bf16.mxu0 0
      %1395 = vmatmul.mubr.bf16.gmra.mrb[0].mxu0 %v1257
      %v1396 = vpop.f32.mrb[0].mxu0
      %v1397 = vadd.f32 0.0, %v1396
      %v1398 = vpop.f32.mrb[0].mxu0
      %v1399 = vpop.f32.mrb[0].mxu0
      %v1400 = vadd.f32 0.0, %v1399
      %v1401 = vpop.f32.mrb[0].mxu0
      %1402 = vmatprep.mubr.bf16.mxu0 0
      %1403 = vmatmul.mubr.bf16.gmra.mrb[0].mxu0 %v1260
      %v1404 = vpop.f32.mrb[0].mxu0
      %v1405 = vadd.f32 0.0, %v1404
      %v1406 = vpop.f32.mrb[0].mxu0
      %v1407 = vpop.f32.mrb[0].mxu0
      %v1408 = vadd.f32 0.0, %v1407
      %v1409 = vpop.f32.mrb[0].mxu0
      %1410 = vmatprep.mubr.bf16.mxu0 0
      %1411 = vmatmul.mubr.bf16.gmra.mrb[0].mxu0 %v1263
      %v1412 = vpop.f32.mrb[0].mxu0
      %v1413 = vadd.f32 0.0, %v1412
      %v1414 = vpop.f32.mrb[0].mxu0
      %v1415 = vpop.f32.mrb[0].mxu0
      %v1416 = vadd.f32 0.0, %v1415
      %v1417 = vpop.f32.mrb[0].mxu0
      %1418 = vmatprep.mubr.bf16.mxu0 0
      %1419 = vmatmul.mubr.bf16.gmra.mrb[0].mxu0 %v1266
      %v1420 = vpop.f32.mrb[0].mxu0
      %v1421 = vadd.f32 0.0, %v1420
      %v1422 = vpop.f32.mrb[0].mxu0
      %v1423 = vpop.f32.mrb[0].mxu0
      %v1424 = vadd.f32 0.0, %v1423
      %v1425 = vpop.f32.mrb[0].mxu0
      %1426 = vmatprep.mubr.bf16.mxu0 0
      %1427 = vmatmul.mubr.bf16.gmra.mrb[0].mxu0 %v1269
      %v1428 = vpop.f32.mrb[0].mxu0
      %v1429 = vadd.f32 0.0, %v1428
      %v1430 = vpop.f32.mrb[0].mxu0
      %v1431 = vpop.f32.mrb[0].mxu0
      %v1432 = vadd.f32 0.0, %v1431
      %v1433 = vpop.f32.mrb[0].mxu0
      %1434 = vdwg.mxu0
      %v1435 = vadd.f32 %v1109, %v1309
      %v1436 = vadd.f32 %v1110, %v1312
      %v1437 = vadd.f32 %v1111, %v1317
      %v1438 = vadd.f32 %v1112, %v1320
      %v1439 = vadd.f32 %v1113, %v1325
      %v1440 = vadd.f32 %v1114, %v1328
      %v1441 = vadd.f32 %v1115, %v1333
      %v1442 = vadd.f32 %v1116, %v1336
      %v1443 = vadd.f32 %v1117, %v1341
      %v1444 = vadd.f32 %v1118, %v1344
      %v1445 = vadd.f32 %v1119, %v1349
      %v1446 = vadd.f32 %v1120, %v1352
      %v1447 = vadd.f32 %v1121, %v1357
      %v1448 = vadd.f32 %v1122, %v1360
      %v1449 = vadd.f32 %v1123, %v1365
      %v1450 = vadd.f32 %v1124, %v1368
      %v1451 = vadd.f32 %v1125, %v1373
      %v1452 = vadd.f32 %v1126, %v1376
      %v1453 = vadd.f32 %v1127, %v1381
      %v1454 = vadd.f32 %v1128, %v1384
      %v1455 = vadd.f32 %v1129, %v1389
      %v1456 = vadd.f32 %v1130, %v1392
      %v1457 = vadd.f32 %v1131, %v1397
      %v1458 = vadd.f32 %v1132, %v1400
      %v1459 = vadd.f32 %v1133, %v1405
      %v1460 = vadd.f32 %v1134, %v1408
      %v1461 = vadd.f32 %v1135, %v1413
      %v1462 = vadd.f32 %v1136, %v1416
      %v1463 = vadd.f32 %v1137, %v1421
      %v1464 = vadd.f32 %v1138, %v1424
      %v1465 = vadd.f32 %v1139, %v1429
      %v1466 = vadd.f32 %v1140, %v1432
      %s1467 = scalar_lea.vmem %s1141, 1
      %v1468 = vld [vmem:[%s1467] ss:$2 sm:$0xff]
      %s1469 = scalar_lea.vmem %s1141, 17
      %v1470 = vld [vmem:[%s1469] ss:$2 sm:$0xff]
      %s1471 = scalar_lea.vmem %s1141, 81
      %v1472 = vld [vmem:[%s1471] ss:$2 sm:$0xff]
      %s1473 = scalar_lea.vmem %s1141, 97
      %v1474 = vld [vmem:[%s1473] ss:$2 sm:$0xff]
      %s1475 = scalar_lea.vmem %s1141, 161
      %v1476 = vld [vmem:[%s1475] ss:$2 sm:$0xff]
      %s1477 = scalar_lea.vmem %s1141, 177
      %v1478 = vld [vmem:[%s1477] ss:$2 sm:$0xff]
      %s1479 = scalar_lea.vmem %s1141, 241
      %v1480 = vld [vmem:[%s1479] ss:$2 sm:$0xff]
      %s1481 = scalar_lea.vmem %s1141, 257
      %v1482 = vld [vmem:[%s1481] ss:$2 sm:$0xff]
      %s1483 = scalar_lea.vmem %s1141, 321
      %v1484 = vld [vmem:[%s1483] ss:$2 sm:$0xff]
      %s1485 = scalar_lea.vmem %s1141, 337
      %v1486 = vld [vmem:[%s1485] ss:$2 sm:$0xff]
      %s1487 = scalar_lea.vmem %s1141, 401
      %v1488 = vld [vmem:[%s1487] ss:$2 sm:$0xff]
      %s1489 = scalar_lea.vmem %s1141, 417
      %v1490 = vld [vmem:[%s1489] ss:$2 sm:$0xff]
      %s1491 = scalar_lea.vmem %s1141, 481
      %v1492 = vld [vmem:[%s1491] ss:$2 sm:$0xff]
      %s1493 = scalar_lea.vmem %s1141, 497
      %v1494 = vld [vmem:[%s1493] ss:$2 sm:$0xff]
      %s1495 = scalar_lea.vmem %s1141, 561
      %v1496 = vld [vmem:[%s1495] ss:$2 sm:$0xff]
      %s1497 = scalar_lea.vmem %s1141, 577
      %v1498 = vld [vmem:[%s1497] ss:$2 sm:$0xff]
      %s1499 = scalar_lea.vmem %s1141, 641
      %v1500 = vld [vmem:[%s1499] ss:$2 sm:$0xff]
      %s1501 = scalar_lea.vmem %s1141, 657
      %v1502 = vld [vmem:[%s1501] ss:$2 sm:$0xff]
      %s1503 = scalar_lea.vmem %s1141, 721
      %v1504 = vld [vmem:[%s1503] ss:$2 sm:$0xff]
      %s1505 = scalar_lea.vmem %s1141, 737
      %v1506 = vld [vmem:[%s1505] ss:$2 sm:$0xff]
      %s1507 = scalar_lea.vmem %s1141, 801
      %v1508 = vld [vmem:[%s1507] ss:$2 sm:$0xff]
      %s1509 = scalar_lea.vmem %s1141, 817
      %v1510 = vld [vmem:[%s1509] ss:$2 sm:$0xff]
      %s1511 = scalar_lea.vmem %s1141, 881
      %v1512 = vld [vmem:[%s1511] ss:$2 sm:$0xff]
      %s1513 = scalar_lea.vmem %s1141, 897
      %v1514 = vld [vmem:[%s1513] ss:$2 sm:$0xff]
      %s1515 = scalar_lea.vmem %s1141, 961
      %v1516 = vld [vmem:[%s1515] ss:$2 sm:$0xff]
      %s1517 = scalar_lea.vmem %s1141, 977
      %v1518 = vld [vmem:[%s1517] ss:$2 sm:$0xff]
      %s1519 = scalar_lea.vmem %s1141, 1041
      %v1520 = vld [vmem:[%s1519] ss:$2 sm:$0xff]
      %s1521 = scalar_lea.vmem %s1141, 1057
      %v1522 = vld [vmem:[%s1521] ss:$2 sm:$0xff]
      %s1523 = scalar_lea.vmem %s1141, 1121
      %v1524 = vld [vmem:[%s1523] ss:$2 sm:$0xff]
      %s1525 = scalar_lea.vmem %s1141, 1137
      %v1526 = vld [vmem:[%s1525] ss:$2 sm:$0xff]
      %s1527 = scalar_lea.vmem %s1141, 1201
      %v1528 = vld [vmem:[%s1527] ss:$2 sm:$0xff]
      %s1529 = scalar_lea.vmem %s1141, 1217
      %v1530 = vld [vmem:[%s1529] ss:$2 sm:$0xff]
      %v1531 = vpack.c.bf16 %v1470, %v1468
      %v1532 = vpack.c.bf16 %v1474, %v1472
      %v1533 = vpack.c.bf16 %v1478, %v1476
      %v1534 = vpack.c.bf16 %v1482, %v1480
      %v1535 = vpack.c.bf16 %v1486, %v1484
      %v1536 = vpack.c.bf16 %v1490, %v1488
      %v1537 = vpack.c.bf16 %v1494, %v1492
      %v1538 = vpack.c.bf16 %v1498, %v1496
      %v1539 = vpack.c.bf16 %v1502, %v1500
      %v1540 = vpack.c.bf16 %v1506, %v1504
      %v1541 = vpack.c.bf16 %v1510, %v1508
      %v1542 = vpack.c.bf16 %v1514, %v1512
      %v1543 = vpack.c.bf16 %v1518, %v1516
      %v1544 = vpack.c.bf16 %v1522, %v1520
      %v1545 = vpack.c.bf16 %v1526, %v1524
      %v1546 = vpack.c.bf16 %v1530, %v1528
      %s1547 = scalar_lea.vmem %s1, 8
      %v1548 = vld [vmem:[%s1547] sm:$0x3]
      %v1550 = vsel %vm386, %v1531, 0
      %v1553 = vsel %vm386, %v1532, 0
      %v1556 = vsel %vm386, %v1533, 0
      %v1559 = vsel %vm386, %v1534, 0
      %v1562 = vsel %vm386, %v1535, 0
      %v1565 = vsel %vm386, %v1536, 0
      %v1568 = vsel %vm386, %v1537, 0
      %v1571 = vsel %vm386, %v1538, 0
      %v1574 = vsel %vm386, %v1539, 0
      %v1577 = vsel %vm386, %v1540, 0
      %v1580 = vsel %vm386, %v1541, 0
      %v1583 = vsel %vm386, %v1542, 0
      %v1586 = vsel %vm386, %v1543, 0
      %v1589 = vsel %vm386, %v1544, 0
      %v1592 = vsel %vm386, %v1545, 0
      %v1595 = vsel %vm386, %v1546, 0
      %v1598 = vand.u32 %v1548, %v438
      %1600 = vmatprep.subr.bf16.mxu0 0
      %1601 = vmatpush1.bf16.msra.mxu0 %v1598
      %1602 = vmatprep.subr.bf16.mxu0 0
      %1603 = vmatpush1.bf16.msra.mxu0 0
      %1604 = vmatprep.subr.bf16.mxu0 0
      %1605 = vmatpush1.bf16.msra.mxu0 0
      %1606 = vmatprep.subr.bf16.mxu0 0
      %1607 = vmatpush1.bf16.msra.mxu0 0
      %1608 = vmatprep.subr.bf16.mxu0 0
      %1609 = vmatpush1.bf16.msra.mxu0 0
      %1610 = vmatprep.subr.bf16.mxu0 0
      %1611 = vmatpush1.bf16.msra.mxu0 0
      %1612 = vmatprep.subr.bf16.mxu0 0
      %1613 = vmatpush1.bf16.msra.mxu0 0
      %1614 = vmatprep.subr.bf16.mxu0 0
      %1615 = vmatpush1.bf16.msra.mxu0 0
      %1616 = vmatprep.subr.bf16.mxu0 0
      %1617 = vmatpush1.bf16.msra.mxu0 0
      %1618 = vmatprep.subr.bf16.mxu0 0
      %1619 = vmatpush1.bf16.msra.mxu0 0
      %1620 = vmatprep.subr.bf16.mxu0 0
      %1621 = vmatpush1.bf16.msra.mxu0 0
      %1622 = vmatprep.subr.bf16.mxu0 0
      %1623 = vmatpush1.bf16.msra.mxu0 0
      %1624 = vmatprep.subr.bf16.mxu0 0
      %1625 = vmatpush1.bf16.msra.mxu0 0
      %1626 = vmatprep.subr.bf16.mxu0 0
      %1627 = vmatpush1.bf16.msra.mxu0 0
      %1628 = vmatprep.subr.bf16.mxu0 0
      %1629 = vmatpush1.bf16.msra.mxu0 0
      %1630 = vmatprep.subr.bf16.mxu0 0
      %1631 = vmatpush1.bf16.msra.mxu0 0
      %1632 = vmatprep.mubr.bf16.mxu0 0
      %1633 = vmatmul.mubr.bf16.gmra.mrb[0].mxu0 %v1550
      %v1634 = vpop.f32.mrb[0].mxu0
      %v1635 = vadd.f32 0.0, %v1634
      %v1636 = vpop.f32.mrb[0].mxu0
      %v1637 = vpop.f32.mrb[0].mxu0
      %v1638 = vadd.f32 0.0, %v1637
      %v1639 = vpop.f32.mrb[0].mxu0
      %1640 = vmatprep.mubr.bf16.mxu0 0
      %1641 = vmatmul.mubr.bf16.gmra.mrb[0].mxu0 %v1553
      %v1642 = vpop.f32.mrb[0].mxu0
      %v1643 = vadd.f32 0.0, %v1642
      %v1644 = vpop.f32.mrb[0].mxu0
      %v1645 = vpop.f32.mrb[0].mxu0
      %v1646 = vadd.f32 0.0, %v1645
      %v1647 = vpop.f32.mrb[0].mxu0
      %1648 = vmatprep.mubr.bf16.mxu0 0
      %1649 = vmatmul.mubr.bf16.gmra.mrb[0].mxu0 %v1556
      %v1650 = vpop.f32.mrb[0].mxu0
      %v1651 = vadd.f32 0.0, %v1650
      %v1652 = vpop.f32.mrb[0].mxu0
      %v1653 = vpop.f32.mrb[0].mxu0
      %v1654 = vadd.f32 0.0, %v1653
      %v1655 = vpop.f32.mrb[0].mxu0
      %1656 = vmatprep.mubr.bf16.mxu0 0
      %1657 = vmatmul.mubr.bf16.gmra.mrb[0].mxu0 %v1559
      %v1658 = vpop.f32.mrb[0].mxu0
      %v1659 = vadd.f32 0.0, %v1658
      %v1660 = vpop.f32.mrb[0].mxu0
      %v1661 = vpop.f32.mrb[0].mxu0
      %v1662 = vadd.f32 0.0, %v1661
      %v1663 = vpop.f32.mrb[0].mxu0
      %1664 = vmatprep.mubr.bf16.mxu0 0
      %1665 = vmatmul.mubr.bf16.gmra.mrb[0].mxu0 %v1562
      %v1666 = vpop.f32.mrb[0].mxu0
      %v1667 = vadd.f32 0.0, %v1666
      %v1668 = vpop.f32.mrb[0].mxu0
      %v1669 = vpop.f32.mrb[0].mxu0
      %v1670 = vadd.f32 0.0, %v1669
      %v1671 = vpop.f32.mrb[0].mxu0
      %1672 = vmatprep.mubr.bf16.mxu0 0
      %1673 = vmatmul.mubr.bf16.gmra.mrb[0].mxu0 %v1565
      %v1674 = vpop.f32.mrb[0].mxu0
      %v1675 = vadd.f32 0.0, %v1674
      %v1676 = vpop.f32.mrb[0].mxu0
      %v1677 = vpop.f32.mrb[0].mxu0
      %v1678 = vadd.f32 0.0, %v1677
      %v1679 = vpop.f32.mrb[0].mxu0
      %1680 = vmatprep.mubr.bf16.mxu0 0
      %1681 = vmatmul.mubr.bf16.gmra.mrb[0].mxu0 %v1568
      %v1682 = vpop.f32.mrb[0].mxu0
      %v1683 = vadd.f32 0.0, %v1682
      %v1684 = vpop.f32.mrb[0].mxu0
      %v1685 = vpop.f32.mrb[0].mxu0
      %v1686 = vadd.f32 0.0, %v1685
      %v1687 = vpop.f32.mrb[0].mxu0
      %1688 = vmatprep.mubr.bf16.mxu0 0
      %1689 = vmatmul.mubr.bf16.gmra.mrb[0].mxu0 %v1571
      %v1690 = vpop.f32.mrb[0].mxu0
      %v1691 = vadd.f32 0.0, %v1690
      %v1692 = vpop.f32.mrb[0].mxu0
      %v1693 = vpop.f32.mrb[0].mxu0
      %v1694 = vadd.f32 0.0, %v1693
      %v1695 = vpop.f32.mrb[0].mxu0
      %1696 = vmatprep.mubr.bf16.mxu0 0
      %1697 = vmatmul.mubr.bf16.gmra.mrb[0].mxu0 %v1574
      %v1698 = vpop.f32.mrb[0].mxu0
      %v1699 = vadd.f32 0.0, %v1698
      %v1700 = vpop.f32.mrb[0].mxu0
      %v1701 = vpop.f32.mrb[0].mxu0
      %v1702 = vadd.f32 0.0, %v1701
      %v1703 = vpop.f32.mrb[0].mxu0
      %1704 = vmatprep.mubr.bf16.mxu0 0
      %1705 = vmatmul.mubr.bf16.gmra.mrb[0].mxu0 %v1577
      %v1706 = vpop.f32.mrb[0].mxu0
      %v1707 = vadd.f32 0.0, %v1706
      %v1708 = vpop.f32.mrb[0].mxu0
      %v1709 = vpop.f32.mrb[0].mxu0
      %v1710 = vadd.f32 0.0, %v1709
      %v1711 = vpop.f32.mrb[0].mxu0
      %1712 = vmatprep.mubr.bf16.mxu0 0
      %1713 = vmatmul.mubr.bf16.gmra.mrb[0].mxu0 %v1580
      %v1714 = vpop.f32.mrb[0].mxu0
      %v1715 = vadd.f32 0.0, %v1714
      %v1716 = vpop.f32.mrb[0].mxu0
      %v1717 = vpop.f32.mrb[0].mxu0
      %v1718 = vadd.f32 0.0, %v1717
      %v1719 = vpop.f32.mrb[0].mxu0
      %1720 = vmatprep.mubr.bf16.mxu0 0
      %1721 = vmatmul.mubr.bf16.gmra.mrb[0].mxu0 %v1583
      %v1722 = vpop.f32.mrb[0].mxu0
      %v1723 = vadd.f32 0.0, %v1722
      %v1724 = vpop.f32.mrb[0].mxu0
      %v1725 = vpop.f32.mrb[0].mxu0
      %v1726 = vadd.f32 0.0, %v1725
      %v1727 = vpop.f32.mrb[0].mxu0
      %1728 = vmatprep.mubr.bf16.mxu0 0
      %1729 = vmatmul.mubr.bf16.gmra.mrb[0].mxu0 %v1586
      %v1730 = vpop.f32.mrb[0].mxu0
      %v1731 = vadd.f32 0.0, %v1730
      %v1732 = vpop.f32.mrb[0].mxu0
      %v1733 = vpop.f32.mrb[0].mxu0
      %v1734 = vadd.f32 0.0, %v1733
      %v1735 = vpop.f32.mrb[0].mxu0
      %1736 = vmatprep.mubr.bf16.mxu0 0
      %1737 = vmatmul.mubr.bf16.gmra.mrb[0].mxu0 %v1589
      %v1738 = vpop.f32.mrb[0].mxu0
      %v1739 = vadd.f32 0.0, %v1738
      %v1740 = vpop.f32.mrb[0].mxu0
      %v1741 = vpop.f32.mrb[0].mxu0
      %v1742 = vadd.f32 0.0, %v1741
      %v1743 = vpop.f32.mrb[0].mxu0
      %1744 = vmatprep.mubr.bf16.mxu0 0
      %1745 = vmatmul.mubr.bf16.gmra.mrb[0].mxu0 %v1592
      %v1746 = vpop.f32.mrb[0].mxu0
      %v1747 = vadd.f32 0.0, %v1746
      %v1748 = vpop.f32.mrb[0].mxu0
      %v1749 = vpop.f32.mrb[0].mxu0
      %v1750 = vadd.f32 0.0, %v1749
      %v1751 = vpop.f32.mrb[0].mxu0
      %1752 = vmatprep.mubr.bf16.mxu0 0
      %1753 = vmatmul.mubr.bf16.gmra.mrb[0].mxu0 %v1595
      %v1754 = vpop.f32.mrb[0].mxu0
      %v1755 = vadd.f32 0.0, %v1754
      %v1756 = vpop.f32.mrb[0].mxu0
      %v1757 = vpop.f32.mrb[0].mxu0
      %v1758 = vadd.f32 0.0, %v1757
      %v1759 = vpop.f32.mrb[0].mxu0
      %1760 = vdwg.mxu0
      %v1761 = vadd.f32 %v1435, %v1635
      %v1762 = vadd.f32 %v1436, %v1638
      %v1763 = vadd.f32 %v1437, %v1643
      %v1764 = vadd.f32 %v1438, %v1646
      %v1765 = vadd.f32 %v1439, %v1651
      %v1766 = vadd.f32 %v1440, %v1654
      %v1767 = vadd.f32 %v1441, %v1659
      %v1768 = vadd.f32 %v1442, %v1662
      %v1769 = vadd.f32 %v1443, %v1667
      %v1770 = vadd.f32 %v1444, %v1670
      %v1771 = vadd.f32 %v1445, %v1675
      %v1772 = vadd.f32 %v1446, %v1678
      %v1773 = vadd.f32 %v1447, %v1683
      %v1774 = vadd.f32 %v1448, %v1686
      %v1775 = vadd.f32 %v1449, %v1691
      %v1776 = vadd.f32 %v1450, %v1694
      %v1777 = vadd.f32 %v1451, %v1699
      %v1778 = vadd.f32 %v1452, %v1702
      %v1779 = vadd.f32 %v1453, %v1707
      %v1780 = vadd.f32 %v1454, %v1710
      %v1781 = vadd.f32 %v1455, %v1715
      %v1782 = vadd.f32 %v1456, %v1718
      %v1783 = vadd.f32 %v1457, %v1723
      %v1784 = vadd.f32 %v1458, %v1726
      %v1785 = vadd.f32 %v1459, %v1731
      %v1786 = vadd.f32 %v1460, %v1734
      %v1787 = vadd.f32 %v1461, %v1739
      %v1788 = vadd.f32 %v1462, %v1742
      %v1789 = vadd.f32 %v1463, %v1747
      %v1790 = vadd.f32 %v1464, %v1750
      %v1791 = vadd.f32 %v1465, %v1755
      %v1792 = vadd.f32 %v1466, %v1758
      %s1793 = scalar_lea.vmem %s1141, 2
      %v1794 = vld [vmem:[%s1793] ss:$2 sm:$0xff]
      %s1795 = scalar_lea.vmem %s1141, 18
      %v1796 = vld [vmem:[%s1795] ss:$2 sm:$0xff]
      %s1797 = scalar_lea.vmem %s1141, 82
      %v1798 = vld [vmem:[%s1797] ss:$2 sm:$0xff]
      %s1799 = scalar_lea.vmem %s1141, 98
      %v1800 = vld [vmem:[%s1799] ss:$2 sm:$0xff]
      %s1801 = scalar_lea.vmem %s1141, 162
      %v1802 = vld [vmem:[%s1801] ss:$2 sm:$0xff]
      %s1803 = scalar_lea.vmem %s1141, 178
      %v1804 = vld [vmem:[%s1803] ss:$2 sm:$0xff]
      %s1805 = scalar_lea.vmem %s1141, 242
      %v1806 = vld [vmem:[%s1805] ss:$2 sm:$0xff]
      %s1807 = scalar_lea.vmem %s1141, 258
      %v1808 = vld [vmem:[%s1807] ss:$2 sm:$0xff]
      %s1809 = scalar_lea.vmem %s1141, 322
      %v1810 = vld [vmem:[%s1809] ss:$2 sm:$0xff]
      %s1811 = scalar_lea.vmem %s1141, 338
      %v1812 = vld [vmem:[%s1811] ss:$2 sm:$0xff]
      %s1813 = scalar_lea.vmem %s1141, 402
      %v1814 = vld [vmem:[%s1813] ss:$2 sm:$0xff]
      %s1815 = scalar_lea.vmem %s1141, 418
      %v1816 = vld [vmem:[%s1815] ss:$2 sm:$0xff]
      %s1817 = scalar_lea.vmem %s1141, 482
      %v1818 = vld [vmem:[%s1817] ss:$2 sm:$0xff]
      %s1819 = scalar_lea.vmem %s1141, 498
      %v1820 = vld [vmem:[%s1819] ss:$2 sm:$0xff]
      %s1821 = scalar_lea.vmem %s1141, 562
      %v1822 = vld [vmem:[%s1821] ss:$2 sm:$0xff]
      %s1823 = scalar_lea.vmem %s1141, 578
      %v1824 = vld [vmem:[%s1823] ss:$2 sm:$0xff]
      %s1825 = scalar_lea.vmem %s1141, 642
      %v1826 = vld [vmem:[%s1825] ss:$2 sm:$0xff]
      %s1827 = scalar_lea.vmem %s1141, 658
      %v1828 = vld [vmem:[%s1827] ss:$2 sm:$0xff]
      %s1829 = scalar_lea.vmem %s1141, 722
      %v1830 = vld [vmem:[%s1829] ss:$2 sm:$0xff]
      %s1831 = scalar_lea.vmem %s1141, 738
      %v1832 = vld [vmem:[%s1831] ss:$2 sm:$0xff]
      %s1833 = scalar_lea.vmem %s1141, 802
      %v1834 = vld [vmem:[%s1833] ss:$2 sm:$0xff]
      %s1835 = scalar_lea.vmem %s1141, 818
      %v1836 = vld [vmem:[%s1835] ss:$2 sm:$0xff]
      %s1837 = scalar_lea.vmem %s1141, 882
      %v1838 = vld [vmem:[%s1837] ss:$2 sm:$0xff]
      %s1839 = scalar_lea.vmem %s1141, 898
      %v1840 = vld [vmem:[%s1839] ss:$2 sm:$0xff]
      %s1841 = scalar_lea.vmem %s1141, 962
      %v1842 = vld [vmem:[%s1841] ss:$2 sm:$0xff]
      %s1843 = scalar_lea.vmem %s1141, 978
      %v1844 = vld [vmem:[%s1843] ss:$2 sm:$0xff]
      %s1845 = scalar_lea.vmem %s1141, 1042
      %v1846 = vld [vmem:[%s1845] ss:$2 sm:$0xff]
      %s1847 = scalar_lea.vmem %s1141, 1058
      %v1848 = vld [vmem:[%s1847] ss:$2 sm:$0xff]
      %s1849 = scalar_lea.vmem %s1141, 1122
      %v1850 = vld [vmem:[%s1849] ss:$2 sm:$0xff]
      %s1851 = scalar_lea.vmem %s1141, 1138
      %v1852 = vld [vmem:[%s1851] ss:$2 sm:$0xff]
      %s1853 = scalar_lea.vmem %s1141, 1202
      %v1854 = vld [vmem:[%s1853] ss:$2 sm:$0xff]
      %s1855 = scalar_lea.vmem %s1141, 1218
      %v1856 = vld [vmem:[%s1855] ss:$2 sm:$0xff]
      %v1857 = vpack.c.bf16 %v1796, %v1794
      %v1858 = vpack.c.bf16 %v1800, %v1798
      %v1859 = vpack.c.bf16 %v1804, %v1802
      %v1860 = vpack.c.bf16 %v1808, %v1806
      %v1861 = vpack.c.bf16 %v1812, %v1810
      %v1862 = vpack.c.bf16 %v1816, %v1814
      %v1863 = vpack.c.bf16 %v1820, %v1818
      %v1864 = vpack.c.bf16 %v1824, %v1822
      %v1865 = vpack.c.bf16 %v1828, %v1826
      %v1866 = vpack.c.bf16 %v1832, %v1830
      %v1867 = vpack.c.bf16 %v1836, %v1834
      %v1868 = vpack.c.bf16 %v1840, %v1838
      %v1869 = vpack.c.bf16 %v1844, %v1842
      %v1870 = vpack.c.bf16 %v1848, %v1846
      %v1871 = vpack.c.bf16 %v1852, %v1850
      %v1872 = vpack.c.bf16 %v1856, %v1854
      %s1873 = scalar_lea.vmem %s1, 10
      %v1874 = vld [vmem:[%s1873] sm:$0x3]
      %v1876 = vsel %vm386, %v1857, 0
      %v1879 = vsel %vm386, %v1858, 0
      %v1882 = vsel %vm386, %v1859, 0
      %v1885 = vsel %vm386, %v1860, 0
      %v1888 = vsel %vm386, %v1861, 0
      %v1891 = vsel %vm386, %v1862, 0
      %v1894 = vsel %vm386, %v1863, 0
      %v1897 = vsel %vm386, %v1864, 0
      %v1900 = vsel %vm386, %v1865, 0
      %v1903 = vsel %vm386, %v1866, 0
      %v1906 = vsel %vm386, %v1867, 0
      %v1909 = vsel %vm386, %v1868, 0
      %v1912 = vsel %vm386, %v1869, 0
      %v1915 = vsel %vm386, %v1870, 0
      %v1918 = vsel %vm386, %v1871, 0
      %v1921 = vsel %vm386, %v1872, 0
      %v1924 = vand.u32 %v1874, %v438
      %1926 = vmatprep.subr.bf16.mxu0 0
      %1927 = vmatpush1.bf16.msra.mxu0 %v1924
      %1928 = vmatprep.subr.bf16.mxu0 0
      %1929 = vmatpush1.bf16.msra.mxu0 0
      %1930 = vmatprep.subr.bf16.mxu0 0
      %1931 = vmatpush1.bf16.msra.mxu0 0
      %1932 = vmatprep.subr.bf16.mxu0 0
      %1933 = vmatpush1.bf16.msra.mxu0 0
      %1934 = vmatprep.subr.bf16.mxu0 0
      %1935 = vmatpush1.bf16.msra.mxu0 0
      %1936 = vmatprep.subr.bf16.mxu0 0
      %1937 = vmatpush1.bf16.msra.mxu0 0
      %1938 = vmatprep.subr.bf16.mxu0 0
      %1939 = vmatpush1.bf16.msra.mxu0 0
      %1940 = vmatprep.subr.bf16.mxu0 0
      %1941 = vmatpush1.bf16.msra.mxu0 0
      %1942 = vmatprep.subr.bf16.mxu0 0
      %1943 = vmatpush1.bf16.msra.mxu0 0
      %1944 = vmatprep.subr.bf16.mxu0 0
      %1945 = vmatpush1.bf16.msra.mxu0 0
      %1946 = vmatprep.subr.bf16.mxu0 0
      %1947 = vmatpush1.bf16.msra.mxu0 0
      %1948 = vmatprep.subr.bf16.mxu0 0
      %1949 = vmatpush1.bf16.msra.mxu0 0
      %1950 = vmatprep.subr.bf16.mxu0 0
      %1951 = vmatpush1.bf16.msra.mxu0 0
      %1952 = vmatprep.subr.bf16.mxu0 0
      %1953 = vmatpush1.bf16.msra.mxu0 0
      %1954 = vmatprep.subr.bf16.mxu0 0
      %1955 = vmatpush1.bf16.msra.mxu0 0
      %1956 = vmatprep.subr.bf16.mxu0 0
      %1957 = vmatpush1.bf16.msra.mxu0 0
      %1958 = vmatprep.mubr.bf16.mxu0 0
      %1959 = vmatmul.mubr.bf16.gmra.mrb[0].mxu0 %v1876
      %v1960 = vpop.f32.mrb[0].mxu0
      %v1961 = vadd.f32 0.0, %v1960
      %v1962 = vpop.f32.mrb[0].mxu0
      %v1963 = vpop.f32.mrb[0].mxu0
      %v1964 = vadd.f32 0.0, %v1963
      %v1965 = vpop.f32.mrb[0].mxu0
      %1966 = vmatprep.mubr.bf16.mxu0 0
      %1967 = vmatmul.mubr.bf16.gmra.mrb[0].mxu0 %v1879
      %v1968 = vpop.f32.mrb[0].mxu0
      %v1969 = vadd.f32 0.0, %v1968
      %v1970 = vpop.f32.mrb[0].mxu0
      %v1971 = vpop.f32.mrb[0].mxu0
      %v1972 = vadd.f32 0.0, %v1971
      %v1973 = vpop.f32.mrb[0].mxu0
      %1974 = vmatprep.mubr.bf16.mxu0 0
      %1975 = vmatmul.mubr.bf16.gmra.mrb[0].mxu0 %v1882
      %v1976 = vpop.f32.mrb[0].mxu0
      %v1977 = vadd.f32 0.0, %v1976
      %v1978 = vpop.f32.mrb[0].mxu0
      %v1979 = vpop.f32.mrb[0].mxu0
      %v1980 = vadd.f32 0.0, %v1979
      %v1981 = vpop.f32.mrb[0].mxu0
      %1982 = vmatprep.mubr.bf16.mxu0 0
      %1983 = vmatmul.mubr.bf16.gmra.mrb[0].mxu0 %v1885
      %v1984 = vpop.f32.mrb[0].mxu0
      %v1985 = vadd.f32 0.0, %v1984
      %v1986 = vpop.f32.mrb[0].mxu0
      %v1987 = vpop.f32.mrb[0].mxu0
      %v1988 = vadd.f32 0.0, %v1987
      %v1989 = vpop.f32.mrb[0].mxu0
      %1990 = vmatprep.mubr.bf16.mxu0 0
      %1991 = vmatmul.mubr.bf16.gmra.mrb[0].mxu0 %v1888
      %v1992 = vpop.f32.mrb[0].mxu0
      %v1993 = vadd.f32 0.0, %v1992
      %v1994 = vpop.f32.mrb[0].mxu0
      %v1995 = vpop.f32.mrb[0].mxu0
      %v1996 = vadd.f32 0.0, %v1995
      %v1997 = vpop.f32.mrb[0].mxu0
      %1998 = vmatprep.mubr.bf16.mxu0 0
      %1999 = vmatmul.mubr.bf16.gmra.mrb[0].mxu0 %v1891
      %v2000 = vpop.f32.mrb[0].mxu0
      %v2001 = vadd.f32 0.0, %v2000
      %v2002 = vpop.f32.mrb[0].mxu0
      %v2003 = vpop.f32.mrb[0].mxu0
      %v2004 = vadd.f32 0.0, %v2003
      %v2005 = vpop.f32.mrb[0].mxu0
      %2006 = vmatprep.mubr.bf16.mxu0 0
      %2007 = vmatmul.mubr.bf16.gmra.mrb[0].mxu0 %v1894
      %v2008 = vpop.f32.mrb[0].mxu0
      %v2009 = vadd.f32 0.0, %v2008
      %v2010 = vpop.f32.mrb[0].mxu0
      %v2011 = vpop.f32.mrb[0].mxu0
      %v2012 = vadd.f32 0.0, %v2011
      %v2013 = vpop.f32.mrb[0].mxu0
      %2014 = vmatprep.mubr.bf16.mxu0 0
      %2015 = vmatmul.mubr.bf16.gmra.mrb[0].mxu0 %v1897
      %v2016 = vpop.f32.mrb[0].mxu0
      %v2017 = vadd.f32 0.0, %v2016
      %v2018 = vpop.f32.mrb[0].mxu0
      %v2019 = vpop.f32.mrb[0].mxu0
      %v2020 = vadd.f32 0.0, %v2019
      %v2021 = vpop.f32.mrb[0].mxu0
      %2022 = vmatprep.mubr.bf16.mxu0 0
      %2023 = vmatmul.mubr.bf16.gmra.mrb[0].mxu0 %v1900
      %v2024 = vpop.f32.mrb[0].mxu0
      %v2025 = vadd.f32 0.0, %v2024
      %v2026 = vpop.f32.mrb[0].mxu0
      %v2027 = vpop.f32.mrb[0].mxu0
      %v2028 = vadd.f32 0.0, %v2027
      %v2029 = vpop.f32.mrb[0].mxu0
      %2030 = vmatprep.mubr.bf16.mxu0 0
      %2031 = vmatmul.mubr.bf16.gmra.mrb[0].mxu0 %v1903
      %v2032 = vpop.f32.mrb[0].mxu0
      %v2033 = vadd.f32 0.0, %v2032
      %v2034 = vpop.f32.mrb[0].mxu0
      %v2035 = vpop.f32.mrb[0].mxu0
      %v2036 = vadd.f32 0.0, %v2035
      %v2037 = vpop.f32.mrb[0].mxu0
      %2038 = vmatprep.mubr.bf16.mxu0 0
      %2039 = vmatmul.mubr.bf16.gmra.mrb[0].mxu0 %v1906
      %v2040 = vpop.f32.mrb[0].mxu0
      %v2041 = vadd.f32 0.0, %v2040
      %v2042 = vpop.f32.mrb[0].mxu0
      %v2043 = vpop.f32.mrb[0].mxu0
      %v2044 = vadd.f32 0.0, %v2043
      %v2045 = vpop.f32.mrb[0].mxu0
      %2046 = vmatprep.mubr.bf16.mxu0 0
      %2047 = vmatmul.mubr.bf16.gmra.mrb[0].mxu0 %v1909
      %v2048 = vpop.f32.mrb[0].mxu0
      %v2049 = vadd.f32 0.0, %v2048
      %v2050 = vpop.f32.mrb[0].mxu0
      %v2051 = vpop.f32.mrb[0].mxu0
      %v2052 = vadd.f32 0.0, %v2051
      %v2053 = vpop.f32.mrb[0].mxu0
      %2054 = vmatprep.mubr.bf16.mxu0 0
      %2055 = vmatmul.mubr.bf16.gmra.mrb[0].mxu0 %v1912
      %v2056 = vpop.f32.mrb[0].mxu0
      %v2057 = vadd.f32 0.0, %v2056
      %v2058 = vpop.f32.mrb[0].mxu0
      %v2059 = vpop.f32.mrb[0].mxu0
      %v2060 = vadd.f32 0.0, %v2059
      %v2061 = vpop.f32.mrb[0].mxu0
      %2062 = vmatprep.mubr.bf16.mxu0 0
      %2063 = vmatmul.mubr.bf16.gmra.mrb[0].mxu0 %v1915
      %v2064 = vpop.f32.mrb[0].mxu0
      %v2065 = vadd.f32 0.0, %v2064
      %v2066 = vpop.f32.mrb[0].mxu0
      %v2067 = vpop.f32.mrb[0].mxu0
      %v2068 = vadd.f32 0.0, %v2067
      %v2069 = vpop.f32.mrb[0].mxu0
      %2070 = vmatprep.mubr.bf16.mxu0 0
      %2071 = vmatmul.mubr.bf16.gmra.mrb[0].mxu0 %v1918
      %v2072 = vpop.f32.mrb[0].mxu0
      %v2073 = vadd.f32 0.0, %v2072
      %v2074 = vpop.f32.mrb[0].mxu0
      %v2075 = vpop.f32.mrb[0].mxu0
      %v2076 = vadd.f32 0.0, %v2075
      %v2077 = vpop.f32.mrb[0].mxu0
      %2078 = vmatprep.mubr.bf16.mxu0 0
      %2079 = vmatmul.mubr.bf16.gmra.mrb[0].mxu0 %v1921
      %v2080 = vpop.f32.mrb[0].mxu0
      %v2081 = vadd.f32 0.0, %v2080
      %v2082 = vpop.f32.mrb[0].mxu0
      %v2083 = vpop.f32.mrb[0].mxu0
      %v2084 = vadd.f32 0.0, %v2083
      %v2085 = vpop.f32.mrb[0].mxu0
      %2086 = vdwg.mxu0
      %v2087 = vadd.f32 %v1761, %v1961
      %v2088 = vadd.f32 %v1762, %v1964
      %v2089 = vadd.f32 %v1763, %v1969
      %v2090 = vadd.f32 %v1764, %v1972
      %v2091 = vadd.f32 %v1765, %v1977
      %v2092 = vadd.f32 %v1766, %v1980
      %v2093 = vadd.f32 %v1767, %v1985
      %v2094 = vadd.f32 %v1768, %v1988
      %v2095 = vadd.f32 %v1769, %v1993
      %v2096 = vadd.f32 %v1770, %v1996
      %v2097 = vadd.f32 %v1771, %v2001
      %v2098 = vadd.f32 %v1772, %v2004
      %v2099 = vadd.f32 %v1773, %v2009
      %v2100 = vadd.f32 %v1774, %v2012
      %v2101 = vadd.f32 %v1775, %v2017
      %v2102 = vadd.f32 %v1776, %v2020
      %v2103 = vadd.f32 %v1777, %v2025
      %v2104 = vadd.f32 %v1778, %v2028
      %v2105 = vadd.f32 %v1779, %v2033
      %v2106 = vadd.f32 %v1780, %v2036
      %v2107 = vadd.f32 %v1781, %v2041
      %v2108 = vadd.f32 %v1782, %v2044
      %v2109 = vadd.f32 %v1783, %v2049
      %v2110 = vadd.f32 %v1784, %v2052
      %v2111 = vadd.f32 %v1785, %v2057
      %v2112 = vadd.f32 %v1786, %v2060
      %v2113 = vadd.f32 %v1787, %v2065
      %v2114 = vadd.f32 %v1788, %v2068
      %v2115 = vadd.f32 %v1789, %v2073
      %v2116 = vadd.f32 %v1790, %v2076
      %v2117 = vadd.f32 %v1791, %v2081
      %v2118 = vadd.f32 %v1792, %v2084
      %s2119 = scalar_lea.vmem %s218, 80
      %v2120 = vld [vmem:[%s2119] ss:$2 sm:$0xff]
      %s2121 = scalar_lea.vmem %s2119, 16
      %v2122 = vld [vmem:[%s2121] ss:$2 sm:$0xff]
      %s2123 = scalar_lea.vmem %s2119, 80
      %v2124 = vld [vmem:[%s2123] ss:$2 sm:$0xff]
      %s2125 = scalar_lea.vmem %s2119, 96
      %v2126 = vld [vmem:[%s2125] ss:$2 sm:$0xff]
      %s2127 = scalar_lea.vmem %s2119, 160
      %v2128 = vld [vmem:[%s2127] ss:$2 sm:$0xff]
      %s2129 = scalar_lea.vmem %s2119, 176
      %v2130 = vld [vmem:[%s2129] ss:$2 sm:$0xff]
      %s2131 = scalar_lea.vmem %s2119, 240
      %v2132 = vld [vmem:[%s2131] ss:$2 sm:$0xff]
      %s2133 = scalar_lea.vmem %s2119, 256
      %v2134 = vld [vmem:[%s2133] ss:$2 sm:$0xff]
      %s2135 = scalar_lea.vmem %s2119, 320
      %v2136 = vld [vmem:[%s2135] ss:$2 sm:$0xff]
      %s2137 = scalar_lea.vmem %s2119, 336
      %v2138 = vld [vmem:[%s2137] ss:$2 sm:$0xff]
      %s2139 = scalar_lea.vmem %s2119, 400
      %v2140 = vld [vmem:[%s2139] ss:$2 sm:$0xff]
      %s2141 = scalar_lea.vmem %s2119, 416
      %v2142 = vld [vmem:[%s2141] ss:$2 sm:$0xff]
      %s2143 = scalar_lea.vmem %s2119, 480
      %v2144 = vld [vmem:[%s2143] ss:$2 sm:$0xff]
      %s2145 = scalar_lea.vmem %s2119, 496
      %v2146 = vld [vmem:[%s2145] ss:$2 sm:$0xff]
      %s2147 = scalar_lea.vmem %s2119, 560
      %v2148 = vld [vmem:[%s2147] ss:$2 sm:$0xff]
      %s2149 = scalar_lea.vmem %s2119, 576
      %v2150 = vld [vmem:[%s2149] ss:$2 sm:$0xff]
      %s2151 = scalar_lea.vmem %s2119, 640
      %v2152 = vld [vmem:[%s2151] ss:$2 sm:$0xff]
      %s2153 = scalar_lea.vmem %s2119, 656
      %v2154 = vld [vmem:[%s2153] ss:$2 sm:$0xff]
      %s2155 = scalar_lea.vmem %s2119, 720
      %v2156 = vld [vmem:[%s2155] ss:$2 sm:$0xff]
      %s2157 = scalar_lea.vmem %s2119, 736
      %v2158 = vld [vmem:[%s2157] ss:$2 sm:$0xff]
      %s2159 = scalar_lea.vmem %s2119, 800
      %v2160 = vld [vmem:[%s2159] ss:$2 sm:$0xff]
      %s2161 = scalar_lea.vmem %s2119, 816
      %v2162 = vld [vmem:[%s2161] ss:$2 sm:$0xff]
      %s2163 = scalar_lea.vmem %s2119, 880
      %v2164 = vld [vmem:[%s2163] ss:$2 sm:$0xff]
      %s2165 = scalar_lea.vmem %s2119, 896
      %v2166 = vld [vmem:[%s2165] ss:$2 sm:$0xff]
      %s2167 = scalar_lea.vmem %s2119, 960
      %v2168 = vld [vmem:[%s2167] ss:$2 sm:$0xff]
      %s2169 = scalar_lea.vmem %s2119, 976
      %v2170 = vld [vmem:[%s2169] ss:$2 sm:$0xff]
      %s2171 = scalar_lea.vmem %s2119, 1040
      %v2172 = vld [vmem:[%s2171] ss:$2 sm:$0xff]
      %s2173 = scalar_lea.vmem %s2119, 1056
      %v2174 = vld [vmem:[%s2173] ss:$2 sm:$0xff]
      %s2175 = scalar_lea.vmem %s2119, 1120
      %v2176 = vld [vmem:[%s2175] ss:$2 sm:$0xff]
      %s2177 = scalar_lea.vmem %s2119, 1136
      %v2178 = vld [vmem:[%s2177] ss:$2 sm:$0xff]
      %s2179 = scalar_lea.vmem %s2119, 1200
      %v2180 = vld [vmem:[%s2179] ss:$2 sm:$0xff]
      %s2181 = scalar_lea.vmem %s2119, 1216
      %v2182 = vld [vmem:[%s2181] ss:$2 sm:$0xff]
      %v2183 = vpack.c.bf16 %v2122, %v2120
      %v2184 = vpack.c.bf16 %v2126, %v2124
      %v2185 = vpack.c.bf16 %v2130, %v2128
      %v2186 = vpack.c.bf16 %v2134, %v2132
      %v2187 = vpack.c.bf16 %v2138, %v2136
      %v2188 = vpack.c.bf16 %v2142, %v2140
      %v2189 = vpack.c.bf16 %v2146, %v2144
      %v2190 = vpack.c.bf16 %v2150, %v2148
      %v2191 = vpack.c.bf16 %v2154, %v2152
      %v2192 = vpack.c.bf16 %v2158, %v2156
      %v2193 = vpack.c.bf16 %v2162, %v2160
      %v2194 = vpack.c.bf16 %v2166, %v2164
      %v2195 = vpack.c.bf16 %v2170, %v2168
      %v2196 = vpack.c.bf16 %v2174, %v2172
      %v2197 = vpack.c.bf16 %v2178, %v2176
      %v2198 = vpack.c.bf16 %v2182, %v2180
      %s2199 = scalar_lea.vmem %s1, 12
      %v2200 = vld [vmem:[%s2199] sm:$0x3]
      %v2202 = vsel %vm386, %v2183, 0
      %v2205 = vsel %vm386, %v2184, 0
      %v2208 = vsel %vm386, %v2185, 0
      %v2211 = vsel %vm386, %v2186, 0
      %v2214 = vsel %vm386, %v2187, 0
      %v2217 = vsel %vm386, %v2188, 0
      %v2220 = vsel %vm386, %v2189, 0
      %v2223 = vsel %vm386, %v2190, 0
      %v2226 = vsel %vm386, %v2191, 0
      %v2229 = vsel %vm386, %v2192, 0
      %v2232 = vsel %vm386, %v2193, 0
      %v2235 = vsel %vm386, %v2194, 0
      %v2238 = vsel %vm386, %v2195, 0
      %v2241 = vsel %vm386, %v2196, 0
      %v2244 = vsel %vm386, %v2197, 0
      %v2247 = vsel %vm386, %v2198, 0
      %v2250 = vand.u32 %v2200, %v438
      %2252 = vmatprep.subr.bf16.mxu0 0
      %2253 = vmatpush1.bf16.msra.mxu0 %v2250
      %2254 = vmatprep.subr.bf16.mxu0 0
      %2255 = vmatpush1.bf16.msra.mxu0 0
      %2256 = vmatprep.subr.bf16.mxu0 0
      %2257 = vmatpush1.bf16.msra.mxu0 0
      %2258 = vmatprep.subr.bf16.mxu0 0
      %2259 = vmatpush1.bf16.msra.mxu0 0
      %2260 = vmatprep.subr.bf16.mxu0 0
      %2261 = vmatpush1.bf16.msra.mxu0 0
      %2262 = vmatprep.subr.bf16.mxu0 0
      %2263 = vmatpush1.bf16.msra.mxu0 0
      %2264 = vmatprep.subr.bf16.mxu0 0
      %2265 = vmatpush1.bf16.msra.mxu0 0
      %2266 = vmatprep.subr.bf16.mxu0 0
      %2267 = vmatpush1.bf16.msra.mxu0 0
      %2268 = vmatprep.subr.bf16.mxu0 0
      %2269 = vmatpush1.bf16.msra.mxu0 0
      %2270 = vmatprep.subr.bf16.mxu0 0
      %2271 = vmatpush1.bf16.msra.mxu0 0
      %2272 = vmatprep.subr.bf16.mxu0 0
      %2273 = vmatpush1.bf16.msra.mxu0 0
      %2274 = vmatprep.subr.bf16.mxu0 0
      %2275 = vmatpush1.bf16.msra.mxu0 0
      %2276 = vmatprep.subr.bf16.mxu0 0
      %2277 = vmatpush1.bf16.msra.mxu0 0
      %2278 = vmatprep.subr.bf16.mxu0 0
      %2279 = vmatpush1.bf16.msra.mxu0 0
      %2280 = vmatprep.subr.bf16.mxu0 0
      %2281 = vmatpush1.bf16.msra.mxu0 0
      %2282 = vmatprep.subr.bf16.mxu0 0
      %2283 = vmatpush1.bf16.msra.mxu0 0
      %2284 = vmatprep.mubr.bf16.mxu0 0
      %2285 = vmatmul.mubr.bf16.gmra.mrb[0].mxu0 %v2202
      %v2286 = vpop.f32.mrb[0].mxu0
      %v2287 = vadd.f32 0.0, %v2286
      %v2288 = vpop.f32.mrb[0].mxu0
      %v2289 = vpop.f32.mrb[0].mxu0
      %v2290 = vadd.f32 0.0, %v2289
      %v2291 = vpop.f32.mrb[0].mxu0
      %2292 = vmatprep.mubr.bf16.mxu0 0
      %2293 = vmatmul.mubr.bf16.gmra.mrb[0].mxu0 %v2205
      %v2294 = vpop.f32.mrb[0].mxu0
      %v2295 = vadd.f32 0.0, %v2294
      %v2296 = vpop.f32.mrb[0].mxu0
      %v2297 = vpop.f32.mrb[0].mxu0
      %v2298 = vadd.f32 0.0, %v2297
      %v2299 = vpop.f32.mrb[0].mxu0
      %2300 = vmatprep.mubr.bf16.mxu0 0
      %2301 = vmatmul.mubr.bf16.gmra.mrb[0].mxu0 %v2208
      %v2302 = vpop.f32.mrb[0].mxu0
      %v2303 = vadd.f32 0.0, %v2302
      %v2304 = vpop.f32.mrb[0].mxu0
      %v2305 = vpop.f32.mrb[0].mxu0
      %v2306 = vadd.f32 0.0, %v2305
      %v2307 = vpop.f32.mrb[0].mxu0
      %2308 = vmatprep.mubr.bf16.mxu0 0
      %2309 = vmatmul.mubr.bf16.gmra.mrb[0].mxu0 %v2211
      %v2310 = vpop.f32.mrb[0].mxu0
      %v2311 = vadd.f32 0.0, %v2310
      %v2312 = vpop.f32.mrb[0].mxu0
      %v2313 = vpop.f32.mrb[0].mxu0
      %v2314 = vadd.f32 0.0, %v2313
      %v2315 = vpop.f32.mrb[0].mxu0
      %2316 = vmatprep.mubr.bf16.mxu0 0
      %2317 = vmatmul.mubr.bf16.gmra.mrb[0].mxu0 %v2214
      %v2318 = vpop.f32.mrb[0].mxu0
      %v2319 = vadd.f32 0.0, %v2318
      %v2320 = vpop.f32.mrb[0].mxu0
      %v2321 = vpop.f32.mrb[0].mxu0
      %v2322 = vadd.f32 0.0, %v2321
      %v2323 = vpop.f32.mrb[0].mxu0
      %2324 = vmatprep.mubr.bf16.mxu0 0
      %2325 = vmatmul.mubr.bf16.gmra.mrb[0].mxu0 %v2217
      %v2326 = vpop.f32.mrb[0].mxu0
      %v2327 = vadd.f32 0.0, %v2326
      %v2328 = vpop.f32.mrb[0].mxu0
      %v2329 = vpop.f32.mrb[0].mxu0
      %v2330 = vadd.f32 0.0, %v2329
      %v2331 = vpop.f32.mrb[0].mxu0
      %2332 = vmatprep.mubr.bf16.mxu0 0
      %2333 = vmatmul.mubr.bf16.gmra.mrb[0].mxu0 %v2220
      %v2334 = vpop.f32.mrb[0].mxu0
      %v2335 = vadd.f32 0.0, %v2334
      %v2336 = vpop.f32.mrb[0].mxu0
      %v2337 = vpop.f32.mrb[0].mxu0
      %v2338 = vadd.f32 0.0, %v2337
      %v2339 = vpop.f32.mrb[0].mxu0
      %2340 = vmatprep.mubr.bf16.mxu0 0
      %2341 = vmatmul.mubr.bf16.gmra.mrb[0].mxu0 %v2223
      %v2342 = vpop.f32.mrb[0].mxu0
      %v2343 = vadd.f32 0.0, %v2342
      %v2344 = vpop.f32.mrb[0].mxu0
      %v2345 = vpop.f32.mrb[0].mxu0
      %v2346 = vadd.f32 0.0, %v2345
      %v2347 = vpop.f32.mrb[0].mxu0
      %2348 = vmatprep.mubr.bf16.mxu0 0
      %2349 = vmatmul.mubr.bf16.gmra.mrb[0].mxu0 %v2226
      %v2350 = vpop.f32.mrb[0].mxu0
      %v2351 = vadd.f32 0.0, %v2350
      %v2352 = vpop.f32.mrb[0].mxu0
      %v2353 = vpop.f32.mrb[0].mxu0
      %v2354 = vadd.f32 0.0, %v2353
      %v2355 = vpop.f32.mrb[0].mxu0
      %2356 = vmatprep.mubr.bf16.mxu0 0
      %2357 = vmatmul.mubr.bf16.gmra.mrb[0].mxu0 %v2229
      %v2358 = vpop.f32.mrb[0].mxu0
      %v2359 = vadd.f32 0.0, %v2358
      %v2360 = vpop.f32.mrb[0].mxu0
      %v2361 = vpop.f32.mrb[0].mxu0
      %v2362 = vadd.f32 0.0, %v2361
      %v2363 = vpop.f32.mrb[0].mxu0
      %2364 = vmatprep.mubr.bf16.mxu0 0
      %2365 = vmatmul.mubr.bf16.gmra.mrb[0].mxu0 %v2232
      %v2366 = vpop.f32.mrb[0].mxu0
      %v2367 = vadd.f32 0.0, %v2366
      %v2368 = vpop.f32.mrb[0].mxu0
      %v2369 = vpop.f32.mrb[0].mxu0
      %v2370 = vadd.f32 0.0, %v2369
      %v2371 = vpop.f32.mrb[0].mxu0
      %2372 = vmatprep.mubr.bf16.mxu0 0
      %2373 = vmatmul.mubr.bf16.gmra.mrb[0].mxu0 %v2235
      %v2374 = vpop.f32.mrb[0].mxu0
      %v2375 = vadd.f32 0.0, %v2374
      %v2376 = vpop.f32.mrb[0].mxu0
      %v2377 = vpop.f32.mrb[0].mxu0
      %v2378 = vadd.f32 0.0, %v2377
      %v2379 = vpop.f32.mrb[0].mxu0
      %2380 = vmatprep.mubr.bf16.mxu0 0
      %2381 = vmatmul.mubr.bf16.gmra.mrb[0].mxu0 %v2238
      %v2382 = vpop.f32.mrb[0].mxu0
      %v2383 = vadd.f32 0.0, %v2382
      %v2384 = vpop.f32.mrb[0].mxu0
      %v2385 = vpop.f32.mrb[0].mxu0
      %v2386 = vadd.f32 0.0, %v2385
      %v2387 = vpop.f32.mrb[0].mxu0
      %2388 = vmatprep.mubr.bf16.mxu0 0
      %2389 = vmatmul.mubr.bf16.gmra.mrb[0].mxu0 %v2241
      %v2390 = vpop.f32.mrb[0].mxu0
      %v2391 = vadd.f32 0.0, %v2390
      %v2392 = vpop.f32.mrb[0].mxu0
      %v2393 = vpop.f32.mrb[0].mxu0
      %v2394 = vadd.f32 0.0, %v2393
      %v2395 = vpop.f32.mrb[0].mxu0
      %2396 = vmatprep.mubr.bf16.mxu0 0
      %2397 = vmatmul.mubr.bf16.gmra.mrb[0].mxu0 %v2244
      %v2398 = vpop.f32.mrb[0].mxu0
      %v2399 = vadd.f32 0.0, %v2398
      %v2400 = vpop.f32.mrb[0].mxu0
      %v2401 = vpop.f32.mrb[0].mxu0
      %v2402 = vadd.f32 0.0, %v2401
      %v2403 = vpop.f32.mrb[0].mxu0
      %2404 = vmatprep.mubr.bf16.mxu0 0
      %2405 = vmatmul.mubr.bf16.gmra.mrb[0].mxu0 %v2247
      %v2406 = vpop.f32.mrb[0].mxu0
      %v2407 = vadd.f32 0.0, %v2406
      %v2408 = vpop.f32.mrb[0].mxu0
      %v2409 = vpop.f32.mrb[0].mxu0
      %v2410 = vadd.f32 0.0, %v2409
      %v2411 = vpop.f32.mrb[0].mxu0
      %2412 = vdwg.mxu0
      %v2413 = vadd.f32 %v2087, %v2287
      %v2414 = vadd.f32 %v2088, %v2290
      %v2415 = vadd.f32 %v2089, %v2295
      %v2416 = vadd.f32 %v2090, %v2298
      %v2417 = vadd.f32 %v2091, %v2303
      %v2418 = vadd.f32 %v2092, %v2306
      %v2419 = vadd.f32 %v2093, %v2311
      %v2420 = vadd.f32 %v2094, %v2314
      %v2421 = vadd.f32 %v2095, %v2319
      %v2422 = vadd.f32 %v2096, %v2322
      %v2423 = vadd.f32 %v2097, %v2327
      %v2424 = vadd.f32 %v2098, %v2330
      %v2425 = vadd.f32 %v2099, %v2335
      %v2426 = vadd.f32 %v2100, %v2338
      %v2427 = vadd.f32 %v2101, %v2343
      %v2428 = vadd.f32 %v2102, %v2346
      %v2429 = vadd.f32 %v2103, %v2351
      %v2430 = vadd.f32 %v2104, %v2354
      %v2431 = vadd.f32 %v2105, %v2359
      %v2432 = vadd.f32 %v2106, %v2362
      %v2433 = vadd.f32 %v2107, %v2367
      %v2434 = vadd.f32 %v2108, %v2370
      %v2435 = vadd.f32 %v2109, %v2375
      %v2436 = vadd.f32 %v2110, %v2378
      %v2437 = vadd.f32 %v2111, %v2383
      %v2438 = vadd.f32 %v2112, %v2386
      %v2439 = vadd.f32 %v2113, %v2391
      %v2440 = vadd.f32 %v2114, %v2394
      %v2441 = vadd.f32 %v2115, %v2399
      %v2442 = vadd.f32 %v2116, %v2402
      %v2443 = vadd.f32 %v2117, %v2407
      %v2444 = vadd.f32 %v2118, %v2410
      %s2445 = scalar_lea.vmem %s2119, 1
      %v2446 = vld [vmem:[%s2445] ss:$2 sm:$0xff]
      %s2447 = scalar_lea.vmem %s2119, 17
      %v2448 = vld [vmem:[%s2447] ss:$2 sm:$0xff]
      %s2449 = scalar_lea.vmem %s2119, 81
      %v2450 = vld [vmem:[%s2449] ss:$2 sm:$0xff]
      %s2451 = scalar_lea.vmem %s2119, 97
      %v2452 = vld [vmem:[%s2451] ss:$2 sm:$0xff]
      %s2453 = scalar_lea.vmem %s2119, 161
      %v2454 = vld [vmem:[%s2453] ss:$2 sm:$0xff]
      %s2455 = scalar_lea.vmem %s2119, 177
      %v2456 = vld [vmem:[%s2455] ss:$2 sm:$0xff]
      %s2457 = scalar_lea.vmem %s2119, 241
      %v2458 = vld [vmem:[%s2457] ss:$2 sm:$0xff]
      %s2459 = scalar_lea.vmem %s2119, 257
      %v2460 = vld [vmem:[%s2459] ss:$2 sm:$0xff]
      %s2461 = scalar_lea.vmem %s2119, 321
      %v2462 = vld [vmem:[%s2461] ss:$2 sm:$0xff]
      %s2463 = scalar_lea.vmem %s2119, 337
      %v2464 = vld [vmem:[%s2463] ss:$2 sm:$0xff]
      %s2465 = scalar_lea.vmem %s2119, 401
      %v2466 = vld [vmem:[%s2465] ss:$2 sm:$0xff]
      %s2467 = scalar_lea.vmem %s2119, 417
      %v2468 = vld [vmem:[%s2467] ss:$2 sm:$0xff]
      %s2469 = scalar_lea.vmem %s2119, 481
      %v2470 = vld [vmem:[%s2469] ss:$2 sm:$0xff]
      %s2471 = scalar_lea.vmem %s2119, 497
      %v2472 = vld [vmem:[%s2471] ss:$2 sm:$0xff]
      %s2473 = scalar_lea.vmem %s2119, 561
      %v2474 = vld [vmem:[%s2473] ss:$2 sm:$0xff]
      %s2475 = scalar_lea.vmem %s2119, 577
      %v2476 = vld [vmem:[%s2475] ss:$2 sm:$0xff]
      %s2477 = scalar_lea.vmem %s2119, 641
      %v2478 = vld [vmem:[%s2477] ss:$2 sm:$0xff]
      %s2479 = scalar_lea.vmem %s2119, 657
      %v2480 = vld [vmem:[%s2479] ss:$2 sm:$0xff]
      %s2481 = scalar_lea.vmem %s2119, 721
      %v2482 = vld [vmem:[%s2481] ss:$2 sm:$0xff]
      %s2483 = scalar_lea.vmem %s2119, 737
      %v2484 = vld [vmem:[%s2483] ss:$2 sm:$0xff]
      %s2485 = scalar_lea.vmem %s2119, 801
      %v2486 = vld [vmem:[%s2485] ss:$2 sm:$0xff]
      %s2487 = scalar_lea.vmem %s2119, 817
      %v2488 = vld [vmem:[%s2487] ss:$2 sm:$0xff]
      %s2489 = scalar_lea.vmem %s2119, 881
      %v2490 = vld [vmem:[%s2489] ss:$2 sm:$0xff]
      %s2491 = scalar_lea.vmem %s2119, 897
      %v2492 = vld [vmem:[%s2491] ss:$2 sm:$0xff]
      %s2493 = scalar_lea.vmem %s2119, 961
      %v2494 = vld [vmem:[%s2493] ss:$2 sm:$0xff]
      %s2495 = scalar_lea.vmem %s2119, 977
      %v2496 = vld [vmem:[%s2495] ss:$2 sm:$0xff]
      %s2497 = scalar_lea.vmem %s2119, 1041
      %v2498 = vld [vmem:[%s2497] ss:$2 sm:$0xff]
      %s2499 = scalar_lea.vmem %s2119, 1057
      %v2500 = vld [vmem:[%s2499] ss:$2 sm:$0xff]
      %s2501 = scalar_lea.vmem %s2119, 1121
      %v2502 = vld [vmem:[%s2501] ss:$2 sm:$0xff]
      %s2503 = scalar_lea.vmem %s2119, 1137
      %v2504 = vld [vmem:[%s2503] ss:$2 sm:$0xff]
      %s2505 = scalar_lea.vmem %s2119, 1201
      %v2506 = vld [vmem:[%s2505] ss:$2 sm:$0xff]
      %s2507 = scalar_lea.vmem %s2119, 1217
      %v2508 = vld [vmem:[%s2507] ss:$2 sm:$0xff]
      %v2509 = vpack.c.bf16 %v2448, %v2446
      %v2510 = vpack.c.bf16 %v2452, %v2450
      %v2511 = vpack.c.bf16 %v2456, %v2454
      %v2512 = vpack.c.bf16 %v2460, %v2458
      %v2513 = vpack.c.bf16 %v2464, %v2462
      %v2514 = vpack.c.bf16 %v2468, %v2466
      %v2515 = vpack.c.bf16 %v2472, %v2470
      %v2516 = vpack.c.bf16 %v2476, %v2474
      %v2517 = vpack.c.bf16 %v2480, %v2478
      %v2518 = vpack.c.bf16 %v2484, %v2482
      %v2519 = vpack.c.bf16 %v2488, %v2486
      %v2520 = vpack.c.bf16 %v2492, %v2490
      %v2521 = vpack.c.bf16 %v2496, %v2494
      %v2522 = vpack.c.bf16 %v2500, %v2498
      %v2523 = vpack.c.bf16 %v2504, %v2502
      %v2524 = vpack.c.bf16 %v2508, %v2506
      %s2525 = scalar_lea.vmem %s1, 14
      %v2526 = vld [vmem:[%s2525] sm:$0x3]
      %v2528 = vsel %vm386, %v2509, 0
      %v2531 = vsel %vm386, %v2510, 0
      %v2534 = vsel %vm386, %v2511, 0
      %v2537 = vsel %vm386, %v2512, 0
      %v2540 = vsel %vm386, %v2513, 0
      %v2543 = vsel %vm386, %v2514, 0
      %v2546 = vsel %vm386, %v2515, 0
      %v2549 = vsel %vm386, %v2516, 0
      %v2552 = vsel %vm386, %v2517, 0
      %v2555 = vsel %vm386, %v2518, 0
      %v2558 = vsel %vm386, %v2519, 0
      %v2561 = vsel %vm386, %v2520, 0
      %v2564 = vsel %vm386, %v2521, 0
      %v2567 = vsel %vm386, %v2522, 0
      %v2570 = vsel %vm386, %v2523, 0
      %v2573 = vsel %vm386, %v2524, 0
      %v2576 = vand.u32 %v2526, %v438
      %2578 = vmatprep.subr.bf16.mxu0 0
      %2579 = vmatpush1.bf16.msra.mxu0 %v2576
      %2580 = vmatprep.subr.bf16.mxu0 0
      %2581 = vmatpush1.bf16.msra.mxu0 0
      %2582 = vmatprep.subr.bf16.mxu0 0
      %2583 = vmatpush1.bf16.msra.mxu0 0
      %2584 = vmatprep.subr.bf16.mxu0 0
      %2585 = vmatpush1.bf16.msra.mxu0 0
      %2586 = vmatprep.subr.bf16.mxu0 0
      %2587 = vmatpush1.bf16.msra.mxu0 0
      %2588 = vmatprep.subr.bf16.mxu0 0
      %2589 = vmatpush1.bf16.msra.mxu0 0
      %2590 = vmatprep.subr.bf16.mxu0 0
      %2591 = vmatpush1.bf16.msra.mxu0 0
      %2592 = vmatprep.subr.bf16.mxu0 0
      %2593 = vmatpush1.bf16.msra.mxu0 0
      %2594 = vmatprep.subr.bf16.mxu0 0
      %2595 = vmatpush1.bf16.msra.mxu0 0
      %2596 = vmatprep.subr.bf16.mxu0 0
      %2597 = vmatpush1.bf16.msra.mxu0 0
      %2598 = vmatprep.subr.bf16.mxu0 0
      %2599 = vmatpush1.bf16.msra.mxu0 0
      %2600 = vmatprep.subr.bf16.mxu0 0
      %2601 = vmatpush1.bf16.msra.mxu0 0
      %2602 = vmatprep.subr.bf16.mxu0 0
      %2603 = vmatpush1.bf16.msra.mxu0 0
      %2604 = vmatprep.subr.bf16.mxu0 0
      %2605 = vmatpush1.bf16.msra.mxu0 0
      %2606 = vmatprep.subr.bf16.mxu0 0
      %2607 = vmatpush1.bf16.msra.mxu0 0
      %2608 = vmatprep.subr.bf16.mxu0 0
      %2609 = vmatpush1.bf16.msra.mxu0 0
      %2610 = vmatprep.mubr.bf16.mxu0 0
      %2611 = vmatmul.mubr.bf16.gmra.mrb[0].mxu0 %v2528
      %v2612 = vpop.f32.mrb[0].mxu0
      %v2613 = vadd.f32 0.0, %v2612
      %v2614 = vpop.f32.mrb[0].mxu0
      %v2615 = vpop.f32.mrb[0].mxu0
      %v2616 = vadd.f32 0.0, %v2615
      %v2617 = vpop.f32.mrb[0].mxu0
      %2618 = vmatprep.mubr.bf16.mxu0 0
      %2619 = vmatmul.mubr.bf16.gmra.mrb[0].mxu0 %v2531
      %v2620 = vpop.f32.mrb[0].mxu0
      %v2621 = vadd.f32 0.0, %v2620
      %v2622 = vpop.f32.mrb[0].mxu0
      %v2623 = vpop.f32.mrb[0].mxu0
      %v2624 = vadd.f32 0.0, %v2623
      %v2625 = vpop.f32.mrb[0].mxu0
      %2626 = vmatprep.mubr.bf16.mxu0 0
      %2627 = vmatmul.mubr.bf16.gmra.mrb[0].mxu0 %v2534
      %v2628 = vpop.f32.mrb[0].mxu0
      %v2629 = vadd.f32 0.0, %v2628
      %v2630 = vpop.f32.mrb[0].mxu0
      %v2631 = vpop.f32.mrb[0].mxu0
      %v2632 = vadd.f32 0.0, %v2631
      %v2633 = vpop.f32.mrb[0].mxu0
      %2634 = vmatprep.mubr.bf16.mxu0 0
      %2635 = vmatmul.mubr.bf16.gmra.mrb[0].mxu0 %v2537
      %v2636 = vpop.f32.mrb[0].mxu0
      %v2637 = vadd.f32 0.0, %v2636
      %v2638 = vpop.f32.mrb[0].mxu0
      %v2639 = vpop.f32.mrb[0].mxu0
      %v2640 = vadd.f32 0.0, %v2639
      %v2641 = vpop.f32.mrb[0].mxu0
      %2642 = vmatprep.mubr.bf16.mxu0 0
      %2643 = vmatmul.mubr.bf16.gmra.mrb[0].mxu0 %v2540
      %v2644 = vpop.f32.mrb[0].mxu0
      %v2645 = vadd.f32 0.0, %v2644
      %v2646 = vpop.f32.mrb[0].mxu0
      %v2647 = vpop.f32.mrb[0].mxu0
      %v2648 = vadd.f32 0.0, %v2647
      %v2649 = vpop.f32.mrb[0].mxu0
      %2650 = vmatprep.mubr.bf16.mxu0 0
      %2651 = vmatmul.mubr.bf16.gmra.mrb[0].mxu0 %v2543
      %v2652 = vpop.f32.mrb[0].mxu0
      %v2653 = vadd.f32 0.0, %v2652
      %v2654 = vpop.f32.mrb[0].mxu0
      %v2655 = vpop.f32.mrb[0].mxu0
      %v2656 = vadd.f32 0.0, %v2655
      %v2657 = vpop.f32.mrb[0].mxu0
      %2658 = vmatprep.mubr.bf16.mxu0 0
      %2659 = vmatmul.mubr.bf16.gmra.mrb[0].mxu0 %v2546
      %v2660 = vpop.f32.mrb[0].mxu0
      %v2661 = vadd.f32 0.0, %v2660
      %v2662 = vpop.f32.mrb[0].mxu0
      %v2663 = vpop.f32.mrb[0].mxu0
      %v2664 = vadd.f32 0.0, %v2663
      %v2665 = vpop.f32.mrb[0].mxu0
      %2666 = vmatprep.mubr.bf16.mxu0 0
      %2667 = vmatmul.mubr.bf16.gmra.mrb[0].mxu0 %v2549
      %v2668 = vpop.f32.mrb[0].mxu0
      %v2669 = vadd.f32 0.0, %v2668
      %v2670 = vpop.f32.mrb[0].mxu0
      %v2671 = vpop.f32.mrb[0].mxu0
      %v2672 = vadd.f32 0.0, %v2671
      %v2673 = vpop.f32.mrb[0].mxu0
      %2674 = vmatprep.mubr.bf16.mxu0 0
      %2675 = vmatmul.mubr.bf16.gmra.mrb[0].mxu0 %v2552
      %v2676 = vpop.f32.mrb[0].mxu0
      %v2677 = vadd.f32 0.0, %v2676
      %v2678 = vpop.f32.mrb[0].mxu0
      %v2679 = vpop.f32.mrb[0].mxu0
      %v2680 = vadd.f32 0.0, %v2679
      %v2681 = vpop.f32.mrb[0].mxu0
      %2682 = vmatprep.mubr.bf16.mxu0 0
      %2683 = vmatmul.mubr.bf16.gmra.mrb[0].mxu0 %v2555
      %v2684 = vpop.f32.mrb[0].mxu0
      %v2685 = vadd.f32 0.0, %v2684
      %v2686 = vpop.f32.mrb[0].mxu0
      %v2687 = vpop.f32.mrb[0].mxu0
      %v2688 = vadd.f32 0.0, %v2687
      %v2689 = vpop.f32.mrb[0].mxu0
      %2690 = vmatprep.mubr.bf16.mxu0 0
      %2691 = vmatmul.mubr.bf16.gmra.mrb[0].mxu0 %v2558
      %v2692 = vpop.f32.mrb[0].mxu0
      %v2693 = vadd.f32 0.0, %v2692
      %v2694 = vpop.f32.mrb[0].mxu0
      %v2695 = vpop.f32.mrb[0].mxu0
      %v2696 = vadd.f32 0.0, %v2695
      %v2697 = vpop.f32.mrb[0].mxu0
      %2698 = vmatprep.mubr.bf16.mxu0 0
      %2699 = vmatmul.mubr.bf16.gmra.mrb[0].mxu0 %v2561
      %v2700 = vpop.f32.mrb[0].mxu0
      %v2701 = vadd.f32 0.0, %v2700
      %v2702 = vpop.f32.mrb[0].mxu0
      %v2703 = vpop.f32.mrb[0].mxu0
      %v2704 = vadd.f32 0.0, %v2703
      %v2705 = vpop.f32.mrb[0].mxu0
      %2706 = vmatprep.mubr.bf16.mxu0 0
      %2707 = vmatmul.mubr.bf16.gmra.mrb[0].mxu0 %v2564
      %v2708 = vpop.f32.mrb[0].mxu0
      %v2709 = vadd.f32 0.0, %v2708
      %v2710 = vpop.f32.mrb[0].mxu0
      %v2711 = vpop.f32.mrb[0].mxu0
      %v2712 = vadd.f32 0.0, %v2711
      %v2713 = vpop.f32.mrb[0].mxu0
      %2714 = vmatprep.mubr.bf16.mxu0 0
      %2715 = vmatmul.mubr.bf16.gmra.mrb[0].mxu0 %v2567
      %v2716 = vpop.f32.mrb[0].mxu0
      %v2717 = vadd.f32 0.0, %v2716
      %v2718 = vpop.f32.mrb[0].mxu0
      %v2719 = vpop.f32.mrb[0].mxu0
      %v2720 = vadd.f32 0.0, %v2719
      %v2721 = vpop.f32.mrb[0].mxu0
      %2722 = vmatprep.mubr.bf16.mxu0 0
      %2723 = vmatmul.mubr.bf16.gmra.mrb[0].mxu0 %v2570
      %v2724 = vpop.f32.mrb[0].mxu0
      %v2725 = vadd.f32 0.0, %v2724
      %v2726 = vpop.f32.mrb[0].mxu0
      %v2727 = vpop.f32.mrb[0].mxu0
      %v2728 = vadd.f32 0.0, %v2727
      %v2729 = vpop.f32.mrb[0].mxu0
      %2730 = vmatprep.mubr.bf16.mxu0 0
      %2731 = vmatmul.mubr.bf16.gmra.mrb[0].mxu0 %v2573
      %v2732 = vpop.f32.mrb[0].mxu0
      %v2733 = vadd.f32 0.0, %v2732
      %v2734 = vpop.f32.mrb[0].mxu0
      %v2735 = vpop.f32.mrb[0].mxu0
      %v2736 = vadd.f32 0.0, %v2735
      %v2737 = vpop.f32.mrb[0].mxu0
      %2738 = vdwg.mxu0
      %v2739 = vadd.f32 %v2413, %v2613
      %v2740 = vadd.f32 %v2414, %v2616
      %v2741 = vadd.f32 %v2415, %v2621
      %v2742 = vadd.f32 %v2416, %v2624
      %v2743 = vadd.f32 %v2417, %v2629
      %v2744 = vadd.f32 %v2418, %v2632
      %v2745 = vadd.f32 %v2419, %v2637
      %v2746 = vadd.f32 %v2420, %v2640
      %v2747 = vadd.f32 %v2421, %v2645
      %v2748 = vadd.f32 %v2422, %v2648
      %v2749 = vadd.f32 %v2423, %v2653
      %v2750 = vadd.f32 %v2424, %v2656
      %v2751 = vadd.f32 %v2425, %v2661
      %v2752 = vadd.f32 %v2426, %v2664
      %v2753 = vadd.f32 %v2427, %v2669
      %v2754 = vadd.f32 %v2428, %v2672
      %v2755 = vadd.f32 %v2429, %v2677
      %v2756 = vadd.f32 %v2430, %v2680
      %v2757 = vadd.f32 %v2431, %v2685
      %v2758 = vadd.f32 %v2432, %v2688
      %v2759 = vadd.f32 %v2433, %v2693
      %v2760 = vadd.f32 %v2434, %v2696
      %v2761 = vadd.f32 %v2435, %v2701
      %v2762 = vadd.f32 %v2436, %v2704
      %v2763 = vadd.f32 %v2437, %v2709
      %v2764 = vadd.f32 %v2438, %v2712
      %v2765 = vadd.f32 %v2439, %v2717
      %v2766 = vadd.f32 %v2440, %v2720
      %v2767 = vadd.f32 %v2441, %v2725
      %v2768 = vadd.f32 %v2442, %v2728
      %v2769 = vadd.f32 %v2443, %v2733
      %v2770 = vadd.f32 %v2444, %v2736
      %s2771 = scalar_lea.vmem %s2119, 2
      %v2772 = vld [vmem:[%s2771] ss:$2 sm:$0xff]
      %s2773 = scalar_lea.vmem %s2119, 18
      %v2774 = vld [vmem:[%s2773] ss:$2 sm:$0xff]
      %s2775 = scalar_lea.vmem %s2119, 82
      %v2776 = vld [vmem:[%s2775] ss:$2 sm:$0xff]
      %s2777 = scalar_lea.vmem %s2119, 98
      %v2778 = vld [vmem:[%s2777] ss:$2 sm:$0xff]
      %s2779 = scalar_lea.vmem %s2119, 162
      %v2780 = vld [vmem:[%s2779] ss:$2 sm:$0xff]
      %s2781 = scalar_lea.vmem %s2119, 178
      %v2782 = vld [vmem:[%s2781] ss:$2 sm:$0xff]
      %s2783 = scalar_lea.vmem %s2119, 242
      %v2784 = vld [vmem:[%s2783] ss:$2 sm:$0xff]
      %s2785 = scalar_lea.vmem %s2119, 258
      %v2786 = vld [vmem:[%s2785] ss:$2 sm:$0xff]
      %s2787 = scalar_lea.vmem %s2119, 322
      %v2788 = vld [vmem:[%s2787] ss:$2 sm:$0xff]
      %s2789 = scalar_lea.vmem %s2119, 338
      %v2790 = vld [vmem:[%s2789] ss:$2 sm:$0xff]
      %s2791 = scalar_lea.vmem %s2119, 402
      %v2792 = vld [vmem:[%s2791] ss:$2 sm:$0xff]
      %s2793 = scalar_lea.vmem %s2119, 418
      %v2794 = vld [vmem:[%s2793] ss:$2 sm:$0xff]
      %s2795 = scalar_lea.vmem %s2119, 482
      %v2796 = vld [vmem:[%s2795] ss:$2 sm:$0xff]
      %s2797 = scalar_lea.vmem %s2119, 498
      %v2798 = vld [vmem:[%s2797] ss:$2 sm:$0xff]
      %s2799 = scalar_lea.vmem %s2119, 562
      %v2800 = vld [vmem:[%s2799] ss:$2 sm:$0xff]
      %s2801 = scalar_lea.vmem %s2119, 578
      %v2802 = vld [vmem:[%s2801] ss:$2 sm:$0xff]
      %s2803 = scalar_lea.vmem %s2119, 642
      %v2804 = vld [vmem:[%s2803] ss:$2 sm:$0xff]
      %s2805 = scalar_lea.vmem %s2119, 658
      %v2806 = vld [vmem:[%s2805] ss:$2 sm:$0xff]
      %s2807 = scalar_lea.vmem %s2119, 722
      %v2808 = vld [vmem:[%s2807] ss:$2 sm:$0xff]
      %s2809 = scalar_lea.vmem %s2119, 738
      %v2810 = vld [vmem:[%s2809] ss:$2 sm:$0xff]
      %s2811 = scalar_lea.vmem %s2119, 802
      %v2812 = vld [vmem:[%s2811] ss:$2 sm:$0xff]
      %s2813 = scalar_lea.vmem %s2119, 818
      %v2814 = vld [vmem:[%s2813] ss:$2 sm:$0xff]
      %s2815 = scalar_lea.vmem %s2119, 882
      %v2816 = vld [vmem:[%s2815] ss:$2 sm:$0xff]
      %s2817 = scalar_lea.vmem %s2119, 898
      %v2818 = vld [vmem:[%s2817] ss:$2 sm:$0xff]
      %s2819 = scalar_lea.vmem %s2119, 962
      %v2820 = vld [vmem:[%s2819] ss:$2 sm:$0xff]
      %s2821 = scalar_lea.vmem %s2119, 978
      %v2822 = vld [vmem:[%s2821] ss:$2 sm:$0xff]
      %s2823 = scalar_lea.vmem %s2119, 1042
      %v2824 = vld [vmem:[%s2823] ss:$2 sm:$0xff]
      %s2825 = scalar_lea.vmem %s2119, 1058
      %v2826 = vld [vmem:[%s2825] ss:$2 sm:$0xff]
      %s2827 = scalar_lea.vmem %s2119, 1122
      %v2828 = vld [vmem:[%s2827] ss:$2 sm:$0xff]
      %s2829 = scalar_lea.vmem %s2119, 1138
      %v2830 = vld [vmem:[%s2829] ss:$2 sm:$0xff]
      %s2831 = scalar_lea.vmem %s2119, 1202
      %v2832 = vld [vmem:[%s2831] ss:$2 sm:$0xff]
      %s2833 = scalar_lea.vmem %s2119, 1218
      %v2834 = vld [vmem:[%s2833] ss:$2 sm:$0xff]
      %v2835 = vpack.c.bf16 %v2774, %v2772
      %v2836 = vpack.c.bf16 %v2778, %v2776
      %v2837 = vpack.c.bf16 %v2782, %v2780
      %v2838 = vpack.c.bf16 %v2786, %v2784
      %v2839 = vpack.c.bf16 %v2790, %v2788
      %v2840 = vpack.c.bf16 %v2794, %v2792
      %v2841 = vpack.c.bf16 %v2798, %v2796
      %v2842 = vpack.c.bf16 %v2802, %v2800
      %v2843 = vpack.c.bf16 %v2806, %v2804
      %v2844 = vpack.c.bf16 %v2810, %v2808
      %v2845 = vpack.c.bf16 %v2814, %v2812
      %v2846 = vpack.c.bf16 %v2818, %v2816
      %v2847 = vpack.c.bf16 %v2822, %v2820
      %v2848 = vpack.c.bf16 %v2826, %v2824
      %v2849 = vpack.c.bf16 %v2830, %v2828
      %v2850 = vpack.c.bf16 %v2834, %v2832
      %s2851 = scalar_lea.vmem %s1, 16
      %v2852 = vld [vmem:[%s2851] sm:$0x3]
      %v2854 = vsel %vm386, %v2835, 0
      %v2857 = vsel %vm386, %v2836, 0
      %v2860 = vsel %vm386, %v2837, 0
      %v2863 = vsel %vm386, %v2838, 0
      %v2866 = vsel %vm386, %v2839, 0
      %v2869 = vsel %vm386, %v2840, 0
      %v2872 = vsel %vm386, %v2841, 0
      %v2875 = vsel %vm386, %v2842, 0
      %v2878 = vsel %vm386, %v2843, 0
      %v2881 = vsel %vm386, %v2844, 0
      %v2884 = vsel %vm386, %v2845, 0
      %v2887 = vsel %vm386, %v2846, 0
      %v2890 = vsel %vm386, %v2847, 0
      %v2893 = vsel %vm386, %v2848, 0
      %v2896 = vsel %vm386, %v2849, 0
      %v2899 = vsel %vm386, %v2850, 0
      %v2902 = vand.u32 %v2852, %v438
      %2904 = vmatprep.subr.bf16.mxu0 0
      %2905 = vmatpush1.bf16.msra.mxu0 %v2902
      %2906 = vmatprep.subr.bf16.mxu0 0
      %2907 = vmatpush1.bf16.msra.mxu0 0
      %2908 = vmatprep.subr.bf16.mxu0 0
      %2909 = vmatpush1.bf16.msra.mxu0 0
      %2910 = vmatprep.subr.bf16.mxu0 0
      %2911 = vmatpush1.bf16.msra.mxu0 0
      %2912 = vmatprep.subr.bf16.mxu0 0
      %2913 = vmatpush1.bf16.msra.mxu0 0
      %2914 = vmatprep.subr.bf16.mxu0 0
      %2915 = vmatpush1.bf16.msra.mxu0 0
      %2916 = vmatprep.subr.bf16.mxu0 0
      %2917 = vmatpush1.bf16.msra.mxu0 0
      %2918 = vmatprep.subr.bf16.mxu0 0
      %2919 = vmatpush1.bf16.msra.mxu0 0
      %2920 = vmatprep.subr.bf16.mxu0 0
      %2921 = vmatpush1.bf16.msra.mxu0 0
      %2922 = vmatprep.subr.bf16.mxu0 0
      %2923 = vmatpush1.bf16.msra.mxu0 0
      %2924 = vmatprep.subr.bf16.mxu0 0
      %2925 = vmatpush1.bf16.msra.mxu0 0
      %2926 = vmatprep.subr.bf16.mxu0 0
      %2927 = vmatpush1.bf16.msra.mxu0 0
      %2928 = vmatprep.subr.bf16.mxu0 0
      %2929 = vmatpush1.bf16.msra.mxu0 0
      %2930 = vmatprep.subr.bf16.mxu0 0
      %2931 = vmatpush1.bf16.msra.mxu0 0
      %2932 = vmatprep.subr.bf16.mxu0 0
      %2933 = vmatpush1.bf16.msra.mxu0 0
      %2934 = vmatprep.subr.bf16.mxu0 0
      %2935 = vmatpush1.bf16.msra.mxu0 0
      %2936 = vmatprep.mubr.bf16.mxu0 0
      %2937 = vmatmul.mubr.bf16.gmra.mrb[0].mxu0 %v2854
      %v2938 = vpop.f32.mrb[0].mxu0
      %v2939 = vadd.f32 0.0, %v2938
      %v2940 = vpop.f32.mrb[0].mxu0
      %v2941 = vpop.f32.mrb[0].mxu0
      %v2942 = vadd.f32 0.0, %v2941
      %v2943 = vpop.f32.mrb[0].mxu0
      %2944 = vmatprep.mubr.bf16.mxu0 0
      %2945 = vmatmul.mubr.bf16.gmra.mrb[0].mxu0 %v2857
      %v2946 = vpop.f32.mrb[0].mxu0
      %v2947 = vadd.f32 0.0, %v2946
      %v2948 = vpop.f32.mrb[0].mxu0
      %v2949 = vpop.f32.mrb[0].mxu0
      %v2950 = vadd.f32 0.0, %v2949
      %v2951 = vpop.f32.mrb[0].mxu0
      %2952 = vmatprep.mubr.bf16.mxu0 0
      %2953 = vmatmul.mubr.bf16.gmra.mrb[0].mxu0 %v2860
      %v2954 = vpop.f32.mrb[0].mxu0
      %v2955 = vadd.f32 0.0, %v2954
      %v2956 = vpop.f32.mrb[0].mxu0
      %v2957 = vpop.f32.mrb[0].mxu0
      %v2958 = vadd.f32 0.0, %v2957
      %v2959 = vpop.f32.mrb[0].mxu0
      %2960 = vmatprep.mubr.bf16.mxu0 0
      %2961 = vmatmul.mubr.bf16.gmra.mrb[0].mxu0 %v2863
      %v2962 = vpop.f32.mrb[0].mxu0
      %v2963 = vadd.f32 0.0, %v2962
      %v2964 = vpop.f32.mrb[0].mxu0
      %v2965 = vpop.f32.mrb[0].mxu0
      %v2966 = vadd.f32 0.0, %v2965
      %v2967 = vpop.f32.mrb[0].mxu0
      %2968 = vmatprep.mubr.bf16.mxu0 0
      %2969 = vmatmul.mubr.bf16.gmra.mrb[0].mxu0 %v2866
      %v2970 = vpop.f32.mrb[0].mxu0
      %v2971 = vadd.f32 0.0, %v2970
      %v2972 = vpop.f32.mrb[0].mxu0
      %v2973 = vpop.f32.mrb[0].mxu0
      %v2974 = vadd.f32 0.0, %v2973
      %v2975 = vpop.f32.mrb[0].mxu0
      %2976 = vmatprep.mubr.bf16.mxu0 0
      %2977 = vmatmul.mubr.bf16.gmra.mrb[0].mxu0 %v2869
      %v2978 = vpop.f32.mrb[0].mxu0
      %v2979 = vadd.f32 0.0, %v2978
      %v2980 = vpop.f32.mrb[0].mxu0
      %v2981 = vpop.f32.mrb[0].mxu0
      %v2982 = vadd.f32 0.0, %v2981
      %v2983 = vpop.f32.mrb[0].mxu0
      %2984 = vmatprep.mubr.bf16.mxu0 0
      %2985 = vmatmul.mubr.bf16.gmra.mrb[0].mxu0 %v2872
      %v2986 = vpop.f32.mrb[0].mxu0
      %v2987 = vadd.f32 0.0, %v2986
      %v2988 = vpop.f32.mrb[0].mxu0
      %v2989 = vpop.f32.mrb[0].mxu0
      %v2990 = vadd.f32 0.0, %v2989
      %v2991 = vpop.f32.mrb[0].mxu0
      %2992 = vmatprep.mubr.bf16.mxu0 0
      %2993 = vmatmul.mubr.bf16.gmra.mrb[0].mxu0 %v2875
      %v2994 = vpop.f32.mrb[0].mxu0
      %v2995 = vadd.f32 0.0, %v2994
      %v2996 = vpop.f32.mrb[0].mxu0
      %v2997 = vpop.f32.mrb[0].mxu0
      %v2998 = vadd.f32 0.0, %v2997
      %v2999 = vpop.f32.mrb[0].mxu0
      %3000 = vmatprep.mubr.bf16.mxu0 0
      %3001 = vmatmul.mubr.bf16.gmra.mrb[0].mxu0 %v2878
      %v3002 = vpop.f32.mrb[0].mxu0
      %v3003 = vadd.f32 0.0, %v3002
      %v3004 = vpop.f32.mrb[0].mxu0
      %v3005 = vpop.f32.mrb[0].mxu0
      %v3006 = vadd.f32 0.0, %v3005
      %v3007 = vpop.f32.mrb[0].mxu0
      %3008 = vmatprep.mubr.bf16.mxu0 0
      %3009 = vmatmul.mubr.bf16.gmra.mrb[0].mxu0 %v2881
      %v3010 = vpop.f32.mrb[0].mxu0
      %v3011 = vadd.f32 0.0, %v3010
      %v3012 = vpop.f32.mrb[0].mxu0
      %v3013 = vpop.f32.mrb[0].mxu0
      %v3014 = vadd.f32 0.0, %v3013
      %v3015 = vpop.f32.mrb[0].mxu0
      %3016 = vmatprep.mubr.bf16.mxu0 0
      %3017 = vmatmul.mubr.bf16.gmra.mrb[0].mxu0 %v2884
      %v3018 = vpop.f32.mrb[0].mxu0
      %v3019 = vadd.f32 0.0, %v3018
      %v3020 = vpop.f32.mrb[0].mxu0
      %v3021 = vpop.f32.mrb[0].mxu0
      %v3022 = vadd.f32 0.0, %v3021
      %v3023 = vpop.f32.mrb[0].mxu0
      %3024 = vmatprep.mubr.bf16.mxu0 0
      %3025 = vmatmul.mubr.bf16.gmra.mrb[0].mxu0 %v2887
      %v3026 = vpop.f32.mrb[0].mxu0
      %v3027 = vadd.f32 0.0, %v3026
      %v3028 = vpop.f32.mrb[0].mxu0
      %v3029 = vpop.f32.mrb[0].mxu0
      %v3030 = vadd.f32 0.0, %v3029
      %v3031 = vpop.f32.mrb[0].mxu0
      %3032 = vmatprep.mubr.bf16.mxu0 0
      %3033 = vmatmul.mubr.bf16.gmra.mrb[0].mxu0 %v2890
      %v3034 = vpop.f32.mrb[0].mxu0
      %v3035 = vadd.f32 0.0, %v3034
      %v3036 = vpop.f32.mrb[0].mxu0
      %v3037 = vpop.f32.mrb[0].mxu0
      %v3038 = vadd.f32 0.0, %v3037
      %v3039 = vpop.f32.mrb[0].mxu0
      %3040 = vmatprep.mubr.bf16.mxu0 0
      %3041 = vmatmul.mubr.bf16.gmra.mrb[0].mxu0 %v2893
      %v3042 = vpop.f32.mrb[0].mxu0
      %v3043 = vadd.f32 0.0, %v3042
      %v3044 = vpop.f32.mrb[0].mxu0
      %v3045 = vpop.f32.mrb[0].mxu0
      %v3046 = vadd.f32 0.0, %v3045
      %v3047 = vpop.f32.mrb[0].mxu0
      %3048 = vmatprep.mubr.bf16.mxu0 0
      %3049 = vmatmul.mubr.bf16.gmra.mrb[0].mxu0 %v2896
      %v3050 = vpop.f32.mrb[0].mxu0
      %v3051 = vadd.f32 0.0, %v3050
      %v3052 = vpop.f32.mrb[0].mxu0
      %v3053 = vpop.f32.mrb[0].mxu0
      %v3054 = vadd.f32 0.0, %v3053
      %v3055 = vpop.f32.mrb[0].mxu0
      %3056 = vmatprep.mubr.bf16.mxu0 0
      %3057 = vmatmul.mubr.bf16.gmra.mrb[0].mxu0 %v2899
      %v3058 = vpop.f32.mrb[0].mxu0
      %v3059 = vadd.f32 0.0, %v3058
      %v3060 = vpop.f32.mrb[0].mxu0
      %v3061 = vpop.f32.mrb[0].mxu0
      %v3062 = vadd.f32 0.0, %v3061
      %v3063 = vpop.f32.mrb[0].mxu0
      %3064 = vdwg.mxu0
      %v3065 = vadd.f32 %v2739, %v2939
      %v3066 = vadd.f32 %v2740, %v2942
      %v3067 = vadd.f32 %v2741, %v2947
      %v3068 = vadd.f32 %v2742, %v2950
      %v3069 = vadd.f32 %v2743, %v2955
      %v3070 = vadd.f32 %v2744, %v2958
      %v3071 = vadd.f32 %v2745, %v2963
      %v3072 = vadd.f32 %v2746, %v2966
      %v3073 = vadd.f32 %v2747, %v2971
      %v3074 = vadd.f32 %v2748, %v2974
      %v3075 = vadd.f32 %v2749, %v2979
      %v3076 = vadd.f32 %v2750, %v2982
      %v3077 = vadd.f32 %v2751, %v2987
      %v3078 = vadd.f32 %v2752, %v2990
      %v3079 = vadd.f32 %v2753, %v2995
      %v3080 = vadd.f32 %v2754, %v2998
      %v3081 = vadd.f32 %v2755, %v3003
      %v3082 = vadd.f32 %v2756, %v3006
      %v3083 = vadd.f32 %v2757, %v3011
      %v3084 = vadd.f32 %v2758, %v3014
      %v3085 = vadd.f32 %v2759, %v3019
      %v3086 = vadd.f32 %v2760, %v3022
      %v3087 = vadd.f32 %v2761, %v3027
      %v3088 = vadd.f32 %v2762, %v3030
      %v3089 = vadd.f32 %v2763, %v3035
      %v3090 = vadd.f32 %v2764, %v3038
      %v3091 = vadd.f32 %v2765, %v3043
      %v3092 = vadd.f32 %v2766, %v3046
      %v3093 = vadd.f32 %v2767, %v3051
      %v3094 = vadd.f32 %v2768, %v3054
      %v3095 = vadd.f32 %v2769, %v3059
      %v3096 = vadd.f32 %v2770, %v3062
      %v3097 = vld [vmem:[%s2] sm:$0x1]
      %v3099 = vlaneseq
      %v3100 = vshrl.u32 %v3099, 7
      %v3101 = vsub.s32 0, %v3100
      %v3102 = vrot.slane %v3097, %v3101
      %v3104 = vadd.f32 %v3065, %v3102
      %v3105 = vadd.f32 %v3066, %v3102
      %v3106 = vadd.f32 %v3067, %v3102
      %v3107 = vadd.f32 %v3068, %v3102
      %v3108 = vadd.f32 %v3069, %v3102
      %v3109 = vadd.f32 %v3070, %v3102
      %v3110 = vadd.f32 %v3071, %v3102
      %v3111 = vadd.f32 %v3072, %v3102
      %v3112 = vadd.f32 %v3073, %v3102
      %v3113 = vadd.f32 %v3074, %v3102
      %v3114 = vadd.f32 %v3075, %v3102
      %v3115 = vadd.f32 %v3076, %v3102
      %v3116 = vadd.f32 %v3077, %v3102
      %v3117 = vadd.f32 %v3078, %v3102
      %v3118 = vadd.f32 %v3079, %v3102
      %v3119 = vadd.f32 %v3080, %v3102
      %v3120 = vadd.f32 %v3081, %v3102
      %v3121 = vadd.f32 %v3082, %v3102
      %v3122 = vadd.f32 %v3083, %v3102
      %v3123 = vadd.f32 %v3084, %v3102
      %v3124 = vadd.f32 %v3085, %v3102
      %v3125 = vadd.f32 %v3086, %v3102
      %v3126 = vadd.f32 %v3087, %v3102
      %v3127 = vadd.f32 %v3088, %v3102
      %v3128 = vadd.f32 %v3089, %v3102
      %v3129 = vadd.f32 %v3090, %v3102
      %v3130 = vadd.f32 %v3091, %v3102
      %v3131 = vadd.f32 %v3092, %v3102
      %v3132 = vadd.f32 %v3093, %v3102
      %v3133 = vadd.f32 %v3094, %v3102
      %v3134 = vadd.f32 %v3095, %v3102
      %v3135 = vadd.f32 %v3096, %v3102
      %v3136 = vmax.f32 %v3104, 0.0
      %v3137 = vmax.f32 %v3105, 0.0
      %v3138 = vmax.f32 %v3106, 0.0
      %v3139 = vmax.f32 %v3107, 0.0
      %v3140 = vmax.f32 %v3108, 0.0
      %v3141 = vmax.f32 %v3109, 0.0
      %v3142 = vmax.f32 %v3110, 0.0
      %v3143 = vmax.f32 %v3111, 0.0
      %v3144 = vmax.f32 %v3112, 0.0
      %v3145 = vmax.f32 %v3113, 0.0
      %v3146 = vmax.f32 %v3114, 0.0
      %v3147 = vmax.f32 %v3115, 0.0
      %v3148 = vmax.f32 %v3116, 0.0
      %v3149 = vmax.f32 %v3117, 0.0
      %v3150 = vmax.f32 %v3118, 0.0
      %v3151 = vmax.f32 %v3119, 0.0
      %v3152 = vmax.f32 %v3120, 0.0
      %v3153 = vmax.f32 %v3121, 0.0
      %v3154 = vmax.f32 %v3122, 0.0
      %v3155 = vmax.f32 %v3123, 0.0
      %v3156 = vmax.f32 %v3124, 0.0
      %v3157 = vmax.f32 %v3125, 0.0
      %v3158 = vmax.f32 %v3126, 0.0
      %v3159 = vmax.f32 %v3127, 0.0
      %v3160 = vmax.f32 %v3128, 0.0
      %v3161 = vmax.f32 %v3129, 0.0
      %v3162 = vmax.f32 %v3130, 0.0
      %v3163 = vmax.f32 %v3131, 0.0
      %v3164 = vmax.f32 %v3132, 0.0
      %v3165 = vmax.f32 %v3133, 0.0
      %v3166 = vmax.f32 %v3134, 0.0
      %v3167 = vmax.f32 %v3135, 0.0
      %vm3168 = vcmask 130048
      %3169 = vst.msk [vmem:[#allocation2] sm:$0xff] %vm3168, 0.0
      %3170 = vst.msk [vmem:[#allocation2 + $0x8] sm:$0xff] %vm3168, 0.0
      %vm3171 = vcmask 123904
      %3172 = vst.msk [vmem:[#allocation2 + $0x10] sm:$0x3] %vm3171, 0.0
      %s3173 = scalar_lea.vmem [#allocation2], 408
      %3174 = vst.msk [vmem:[%s3173] sm:$0xff] %vm3168, 0.0
      %3175 = vst.msk [vmem:[%s3173 + $0x8] sm:$0xff] %vm3168, 0.0
      %3176 = vst.msk [vmem:[%s3173 + $0x10] sm:$0x3] %vm3171, 0.0
      %vm3177 = vcmask 122880
      %3178 = vst.msk [vmem:[#allocation2] sm:$0x1] %vm3177, 0.0
      %3179 = vst.msk [vmem:[#allocation2 + $0x18] sm:$0x1] %vm3177, 0.0
      %3180 = vst.msk [vmem:[#allocation2 + $0x30] sm:$0x1] %vm3177, 0.0
      %3181 = vst.msk [vmem:[#allocation2 + $0x48] sm:$0x1] %vm3177, 0.0
      %3182 = vst.msk [vmem:[#allocation2 + $0x60] sm:$0x1] %vm3177, 0.0
      %3183 = vst.msk [vmem:[#allocation2 + $0x78] sm:$0x1] %vm3177, 0.0
      %3184 = vst.msk [vmem:[#allocation2 + $0x90] sm:$0x1] %vm3177, 0.0
      %3185 = vst.msk [vmem:[#allocation2 + $0xa8] sm:$0x1] %vm3177, 0.0
      %3186 = vst.msk [vmem:[#allocation2 + $0xc0] sm:$0x1] %vm3177, 0.0
      %3187 = vst.msk [vmem:[#allocation2 + $0xd8] sm:$0x1] %vm3177, 0.0
      %3188 = vst.msk [vmem:[#allocation2 + $0xf0] sm:$0x1] %vm3177, 0.0
      %3189 = vst.msk [vmem:[#allocation2 + $0x108] sm:$0x1] %vm3177, 0.0
      %3190 = vst.msk [vmem:[#allocation2 + $0x120] sm:$0x1] %vm3177, 0.0
      %3191 = vst.msk [vmem:[#allocation2 + $0x138] sm:$0x1] %vm3177, 0.0
      %3192 = vst.msk [vmem:[#allocation2 + $0x150] sm:$0x1] %vm3177, 0.0
      %3193 = vst.msk [vmem:[#allocation2 + $0x168] sm:$0x1] %vm3177, 0.0
      %3194 = vst.msk [vmem:[#allocation2 + $0x180] sm:$0x1] %vm3177, 0.0
      %3195 = vst.msk [vmem:[#allocation2 + $0x198] sm:$0x1] %vm3177, 0.0
      %3196 = vst.msk [vmem:[#allocation2 + $0x11] sm:$0x1] %vm3177, 0.0
      %3197 = vst.msk [vmem:[#allocation2 + $0x29] sm:$0x1] %vm3177, 0.0
      %3198 = vst.msk [vmem:[#allocation2 + $0x41] sm:$0x1] %vm3177, 0.0
      %3199 = vst.msk [vmem:[#allocation2 + $0x59] sm:$0x1] %vm3177, 0.0
      %3200 = vst.msk [vmem:[#allocation2 + $0x71] sm:$0x1] %vm3177, 0.0
      %3201 = vst.msk [vmem:[#allocation2 + $0x89] sm:$0x1] %vm3177, 0.0
      %3202 = vst.msk [vmem:[#allocation2 + $0xa1] sm:$0x1] %vm3177, 0.0
      %3203 = vst.msk [vmem:[#allocation2 + $0xb9] sm:$0x1] %vm3177, 0.0
      %3204 = vst.msk [vmem:[#allocation2 + $0xd1] sm:$0x1] %vm3177, 0.0
      %3205 = vst.msk [vmem:[#allocation2 + $0xe9] sm:$0x1] %vm3177, 0.0
      %3206 = vst.msk [vmem:[#allocation2 + $0x101] sm:$0x1] %vm3177, 0.0
      %3207 = vst.msk [vmem:[#allocation2 + $0x119] sm:$0x1] %vm3177, 0.0
      %3208 = vst.msk [vmem:[#allocation2 + $0x131] sm:$0x1] %vm3177, 0.0
      %3209 = vst.msk [vmem:[#allocation2 + $0x149] sm:$0x1] %vm3177, 0.0
      %3210 = vst.msk [vmem:[#allocation2 + $0x161] sm:$0x1] %vm3177, 0.0
      %3211 = vst.msk [vmem:[#allocation2 + $0x179] sm:$0x1] %vm3177, 0.0
      %3212 = vst.msk [vmem:[#allocation2 + $0x191] sm:$0x1] %vm3177, 0.0
      %3213 = vst.msk [vmem:[#allocation2 + $0x1a9] sm:$0x1] %vm3177, 0.0
      %s3214 = scalar_lea.vmem [#allocation2], 24
      %3215 = vst.msk [vmem:[%s3214 + $0x1] sm:$0xff] %vm3168, %v3136
      %3216 = vst.msk [vmem:[%s3214 + $0x9] sm:$0xff] %vm3168, %v3137
      %3217 = vst.msk [vmem:[%s3214 + $0x19] sm:$0xff] %vm3168, %v3138
      %3218 = vst.msk [vmem:[%s3214 + $0x21] sm:$0xff] %vm3168, %v3139
      %3219 = vst.msk [vmem:[%s3214 + $0x31] sm:$0xff] %vm3168, %v3140
      %3220 = vst.msk [vmem:[%s3214 + $0x39] sm:$0xff] %vm3168, %v3141
      %3221 = vst.msk [vmem:[%s3214 + $0x49] sm:$0xff] %vm3168, %v3142
      %3222 = vst.msk [vmem:[%s3214 + $0x51] sm:$0xff] %vm3168, %v3143
      %3223 = vst.msk [vmem:[%s3214 + $0x61] sm:$0xff] %vm3168, %v3144
      %3224 = vst.msk [vmem:[%s3214 + $0x69] sm:$0xff] %vm3168, %v3145
      %3225 = vst.msk [vmem:[%s3214 + $0x79] sm:$0xff] %vm3168, %v3146
      %3226 = vst.msk [vmem:[%s3214 + $0x81] sm:$0xff] %vm3168, %v3147
      %3227 = vst.msk [vmem:[%s3214 + $0x91] sm:$0xff] %vm3168, %v3148
      %3228 = vst.msk [vmem:[%s3214 + $0x99] sm:$0xff] %vm3168, %v3149
      %3229 = vst.msk [vmem:[%s3214 + $0xa9] sm:$0xff] %vm3168, %v3150
      %3230 = vst.msk [vmem:[%s3214 + $0xb1] sm:$0xff] %vm3168, %v3151
      %3231 = vst.msk [vmem:[%s3214 + $0xc1] sm:$0xff] %vm3168, %v3152
      %3232 = vst.msk [vmem:[%s3214 + $0xc9] sm:$0xff] %vm3168, %v3153
      %3233 = vst.msk [vmem:[%s3214 + $0xd9] sm:$0xff] %vm3168, %v3154
      %3234 = vst.msk [vmem:[%s3214 + $0xe1] sm:$0xff] %vm3168, %v3155
      %3235 = vst.msk [vmem:[%s3214 + $0xf1] sm:$0xff] %vm3168, %v3156
      %3236 = vst.msk [vmem:[%s3214 + $0xf9] sm:$0xff] %vm3168, %v3157
      %3237 = vst.msk [vmem:[%s3214 + $0x109] sm:$0xff] %vm3168, %v3158
      %3238 = vst.msk [vmem:[%s3214 + $0x111] sm:$0xff] %vm3168, %v3159
      %3239 = vst.msk [vmem:[%s3214 + $0x121] sm:$0xff] %vm3168, %v3160
      %3240 = vst.msk [vmem:[%s3214 + $0x129] sm:$0xff] %vm3168, %v3161
      %3241 = vst.msk [vmem:[%s3214 + $0x139] sm:$0xff] %vm3168, %v3162
      %3242 = vst.msk [vmem:[%s3214 + $0x141] sm:$0xff] %vm3168, %v3163
      %3243 = vst.msk [vmem:[%s3214 + $0x151] sm:$0xff] %vm3168, %v3164
      %3244 = vst.msk [vmem:[%s3214 + $0x159] sm:$0xff] %vm3168, %v3165
      %3245 = vst.msk [vmem:[%s3214 + $0x169] sm:$0xff] %vm3168, %v3166
      %3246 = vst.msk [vmem:[%s3214 + $0x171] sm:$0xff] %vm3168, %v3167
      %v3247 = vld [vmem:[#allocation2] ss:$2 sm:$0xff]
      %s3248 = scalar_lea.vmem [#allocation2], 48
      %v3249 = vld [vmem:[%s3248] ss:$2 sm:$0xff]
      %s3250 = scalar_lea.vmem [#allocation2], 96
      %v3251 = vld [vmem:[%s3250] ss:$2 sm:$0xff]
      %s3252 = scalar_lea.vmem [#allocation2], 144
      %v3253 = vld [vmem:[%s3252] ss:$2 sm:$0xff]
      %s3254 = scalar_lea.vmem [#allocation2], 192
      %v3255 = vld [vmem:[%s3254] ss:$2 sm:$0xff]
      %s3256 = scalar_lea.vmem [#allocation2], 240
      %v3257 = vld [vmem:[%s3256] ss:$2 sm:$0xff]
      %s3258 = scalar_lea.vmem [#allocation2], 288
      %v3259 = vld [vmem:[%s3258] ss:$2 sm:$0xff]
      %s3260 = scalar_lea.vmem [#allocation2], 336
      %v3261 = vld [vmem:[%s3260] ss:$2 sm:$0xff]
      %v3262 = vpack.c.bf16 %v3249, %v3247
      %v3263 = vpack.c.bf16 %v3253, %v3251
      %v3264 = vpack.c.bf16 %v3257, %v3255
      %v3265 = vpack.c.bf16 %v3261, %v3259
      %v3266 = vld [vmem:[%s3] sm:$0xf]
      %v3267 = vld [vmem:[%s3 + $0x4] sm:$0xf]
      %s3268 = scalar_lea.vmem [#allocation2], 1
      %v3269 = vld [vmem:[%s3268] ss:$2 sm:$0xff]
      %s3270 = scalar_lea.vmem [#allocation2], 49
      %v3271 = vld [vmem:[%s3270] ss:$2 sm:$0xff]
      %s3272 = scalar_lea.vmem [#allocation2], 97
      %v3273 = vld [vmem:[%s3272] ss:$2 sm:$0xff]
      %s3274 = scalar_lea.vmem [#allocation2], 145
      %v3275 = vld [vmem:[%s3274] ss:$2 sm:$0xff]
      %s3276 = scalar_lea.vmem [#allocation2], 193
      %v3277 = vld [vmem:[%s3276] ss:$2 sm:$0xff]
      %s3278 = scalar_lea.vmem [#allocation2], 241
      %v3279 = vld [vmem:[%s3278] ss:$2 sm:$0xff]
      %s3280 = scalar_lea.vmem [#allocation2], 289
      %v3281 = vld [vmem:[%s3280] ss:$2 sm:$0xff]
      %s3282 = scalar_lea.vmem [#allocation2], 337
      %v3283 = vld [vmem:[%s3282] ss:$2 sm:$0xff]
      %v3284 = vpack.c.bf16 %v3271, %v3269
      %v3285 = vpack.c.bf16 %v3275, %v3273
      %v3286 = vpack.c.bf16 %v3279, %v3277
      %v3287 = vpack.c.bf16 %v3283, %v3281
      %s3288 = scalar_lea.vmem %s3, 8
      %v3289 = vld [vmem:[%s3288] sm:$0xf]
      %v3290 = vld [vmem:[%s3288 + $0x4] sm:$0xf]
      %v3293 = vunpack.c.l.b16 %v3289
      %v3294 = vunpack.c.l.b16 %v3290
      %v3295 = vpack.c.b16 %v3294, %v3293
      %v3298 = vsel %vm3168, %v3284, 0
      %v3301 = vsel %vm3168, %v3285, 0
      %v3304 = vsel %vm3168, %v3286, 0
      %v3307 = vsel %vm3168, %v3287, 0
      %3309 = vmatprep.subr.bf16.mxu0 0
      %3310 = vmatpush1.bf16.msra.mxu0 %v3295
      %3311 = vmatprep.subr.bf16.mxu0 0
      %3312 = vmatpush1.bf16.msra.mxu0 0
      %3313 = vmatprep.subr.bf16.mxu0 0
      %3314 = vmatpush1.bf16.msra.mxu0 0
      %3315 = vmatprep.subr.bf16.mxu0 0
      %3316 = vmatpush1.bf16.msra.mxu0 0
      %3317 = vmatprep.subr.bf16.mxu0 0
      %3318 = vmatpush1.bf16.msra.mxu0 0
      %3319 = vmatprep.subr.bf16.mxu0 0
      %3320 = vmatpush1.bf16.msra.mxu0 0
      %3321 = vmatprep.subr.bf16.mxu0 0
      %3322 = vmatpush1.bf16.msra.mxu0 0
      %3323 = vmatprep.subr.bf16.mxu0 0
      %3324 = vmatpush1.bf16.msra.mxu0 0
      %3325 = vmatprep.subr.bf16.mxu0 0
      %3326 = vmatpush1.bf16.msra.mxu0 0
      %3327 = vmatprep.subr.bf16.mxu0 0
      %3328 = vmatpush1.bf16.msra.mxu0 0
      %3329 = vmatprep.subr.bf16.mxu0 0
      %3330 = vmatpush1.bf16.msra.mxu0 0
      %3331 = vmatprep.subr.bf16.mxu0 0
      %3332 = vmatpush1.bf16.msra.mxu0 0
      %3333 = vmatprep.subr.bf16.mxu0 0
      %3334 = vmatpush1.bf16.msra.mxu0 0
      %3335 = vmatprep.subr.bf16.mxu0 0
      %3336 = vmatpush1.bf16.msra.mxu0 0
      %3337 = vmatprep.subr.bf16.mxu0 0
      %3338 = vmatpush1.bf16.msra.mxu0 0
      %3339 = vmatprep.subr.bf16.mxu0 0
      %3340 = vmatpush1.bf16.msra.mxu0 0
      %3341 = vmatprep.mubr.bf16.mxu0 0
      %3342 = vmatmul.mubr.bf16.gmra.mrb[0].mxu0 %v3298
      %v3343 = vpop.f32.mrb[0].mxu0
      %v3344 = vadd.f32 0.0, %v3343
      %v3345 = vpop.f32.mrb[0].mxu0
      %v3346 = vpop.f32.mrb[0].mxu0
      %v3347 = vadd.f32 0.0, %v3346
      %v3348 = vpop.f32.mrb[0].mxu0
      %3349 = vmatprep.mubr.bf16.mxu0 0
      %3350 = vmatmul.mubr.bf16.gmra.mrb[0].mxu0 %v3301
      %v3351 = vpop.f32.mrb[0].mxu0
      %v3352 = vadd.f32 0.0, %v3351
      %v3353 = vpop.f32.mrb[0].mxu0
      %v3354 = vpop.f32.mrb[0].mxu0
      %v3355 = vadd.f32 0.0, %v3354
      %v3356 = vpop.f32.mrb[0].mxu0
      %3357 = vmatprep.mubr.bf16.mxu0 0
      %3358 = vmatmul.mubr.bf16.gmra.mrb[0].mxu0 %v3304
      %v3359 = vpop.f32.mrb[0].mxu0
      %v3360 = vadd.f32 0.0, %v3359
      %v3361 = vpop.f32.mrb[0].mxu0
      %v3362 = vpop.f32.mrb[0].mxu0
      %v3363 = vadd.f32 0.0, %v3362
      %v3364 = vpop.f32.mrb[0].mxu0
      %3365 = vmatprep.mubr.bf16.mxu0 0
      %3366 = vmatmul.mubr.bf16.gmra.mrb[0].mxu0 %v3307
      %v3367 = vpop.f32.mrb[0].mxu0
      %v3368 = vadd.f32 0.0, %v3367
      %v3369 = vpop.f32.mrb[0].mxu0
      %v3370 = vpop.f32.mrb[0].mxu0
      %v3371 = vadd.f32 0.0, %v3370
      %v3372 = vpop.f32.mrb[0].mxu0
      %3373 = vdwg.mxu0
      %v3376 = vunpack.c.l.b16 %v3266
      %v3377 = vunpack.c.l.b16 %v3267
      %v3378 = vpack.c.b16 %v3377, %v3376
      %v3381 = vsel %vm3168, %v3262, 0
      %v3384 = vsel %vm3168, %v3263, 0
      %v3387 = vsel %vm3168, %v3264, 0
      %v3390 = vsel %vm3168, %v3265, 0
      %3392 = vmatprep.subr.bf16.mxu0 0
      %3393 = vmatpush1.bf16.msra.mxu0 %v3378
      %3394 = vmatprep.subr.bf16.mxu0 0
      %3395 = vmatpush1.bf16.msra.mxu0 0
      %3396 = vmatprep.subr.bf16.mxu0 0
      %3397 = vmatpush1.bf16.msra.mxu0 0
      %3398 = vmatprep.subr.bf16.mxu0 0
      %3399 = vmatpush1.bf16.msra.mxu0 0
      %3400 = vmatprep.subr.bf16.mxu0 0
      %3401 = vmatpush1.bf16.msra.mxu0 0
      %3402 = vmatprep.subr.bf16.mxu0 0
      %3403 = vmatpush1.bf16.msra.mxu0 0
      %3404 = vmatprep.subr.bf16.mxu0 0
      %3405 = vmatpush1.bf16.msra.mxu0 0
      %3406 = vmatprep.subr.bf16.mxu0 0
      %3407 = vmatpush1.bf16.msra.mxu0 0
      %3408 = vmatprep.subr.bf16.mxu0 0
      %3409 = vmatpush1.bf16.msra.mxu0 0
      %3410 = vmatprep.subr.bf16.mxu0 0
      %3411 = vmatpush1.bf16.msra.mxu0 0
      %3412 = vmatprep.subr.bf16.mxu0 0
      %3413 = vmatpush1.bf16.msra.mxu0 0
      %3414 = vmatprep.subr.bf16.mxu0 0
      %3415 = vmatpush1.bf16.msra.mxu0 0
      %3416 = vmatprep.subr.bf16.mxu0 0
      %3417 = vmatpush1.bf16.msra.mxu0 0
      %3418 = vmatprep.subr.bf16.mxu0 0
      %3419 = vmatpush1.bf16.msra.mxu0 0
      %3420 = vmatprep.subr.bf16.mxu0 0
      %3421 = vmatpush1.bf16.msra.mxu0 0
      %3422 = vmatprep.subr.bf16.mxu0 0
      %3423 = vmatpush1.bf16.msra.mxu0 0
      %3424 = vmatprep.mubr.bf16.mxu0 0
      %3425 = vmatmul.mubr.bf16.gmra.mrb[0].mxu0 %v3381
      %v3426 = vpop.f32.mrb[0].mxu0
      %v3427 = vadd.f32 %v3344, %v3426
      %v3428 = vpop.f32.mrb[0].mxu0
      %v3429 = vpop.f32.mrb[0].mxu0
      %v3430 = vadd.f32 %v3347, %v3429
      %v3431 = vpop.f32.mrb[0].mxu0
      %3432 = vmatprep.mubr.bf16.mxu0 0
      %3433 = vmatmul.mubr.bf16.gmra.mrb[0].mxu0 %v3384
      %v3434 = vpop.f32.mrb[0].mxu0
      %v3435 = vadd.f32 %v3352, %v3434
      %v3436 = vpop.f32.mrb[0].mxu0
      %v3437 = vpop.f32.mrb[0].mxu0
      %v3438 = vadd.f32 %v3355, %v3437
      %v3439 = vpop.f32.mrb[0].mxu0
      %3440 = vmatprep.mubr.bf16.mxu0 0
      %3441 = vmatmul.mubr.bf16.gmra.mrb[0].mxu0 %v3387
      %v3442 = vpop.f32.mrb[0].mxu0
      %v3443 = vadd.f32 %v3360, %v3442
      %v3444 = vpop.f32.mrb[0].mxu0
      %v3445 = vpop.f32.mrb[0].mxu0
      %v3446 = vadd.f32 %v3363, %v3445
      %v3447 = vpop.f32.mrb[0].mxu0
      %3448 = vmatprep.mubr.bf16.mxu0 0
      %3449 = vmatmul.mubr.bf16.gmra.mrb[0].mxu0 %v3390
      %v3450 = vpop.f32.mrb[0].mxu0
      %v3451 = vadd.f32 %v3368, %v3450
      %v3452 = vpop.f32.mrb[0].mxu0
      %v3453 = vpop.f32.mrb[0].mxu0
      %v3454 = vadd.f32 %v3371, %v3453
      %v3455 = vpop.f32.mrb[0].mxu0
      %3456 = vdwg.mxu0
      %s3457 = scalar_lea.vmem [#allocation2], 2
      %v3458 = vld [vmem:[%s3457] ss:$2 sm:$0xff]
      %s3459 = scalar_lea.vmem [#allocation2], 50
      %v3460 = vld [vmem:[%s3459] ss:$2 sm:$0xff]
      %s3461 = scalar_lea.vmem [#allocation2], 98
      %v3462 = vld [vmem:[%s3461] ss:$2 sm:$0xff]
      %s3463 = scalar_lea.vmem [#allocation2], 146
      %v3464 = vld [vmem:[%s3463] ss:$2 sm:$0xff]
      %s3465 = scalar_lea.vmem [#allocation2], 194
      %v3466 = vld [vmem:[%s3465] ss:$2 sm:$0xff]
      %s3467 = scalar_lea.vmem [#allocation2], 242
      %v3468 = vld [vmem:[%s3467] ss:$2 sm:$0xff]
      %s3469 = scalar_lea.vmem [#allocation2], 290
      %v3470 = vld [vmem:[%s3469] ss:$2 sm:$0xff]
      %s3471 = scalar_lea.vmem [#allocation2], 338
      %v3472 = vld [vmem:[%s3471] ss:$2 sm:$0xff]
      %v3473 = vpack.c.bf16 %v3460, %v3458
      %v3474 = vpack.c.bf16 %v3464, %v3462
      %v3475 = vpack.c.bf16 %v3468, %v3466
      %v3476 = vpack.c.bf16 %v3472, %v3470
      %s3477 = scalar_lea.vmem %s3, 16
      %v3478 = vld [vmem:[%s3477] sm:$0xf]
      %v3479 = vld [vmem:[%s3477 + $0x4] sm:$0xf]
      %v3482 = vunpack.c.l.b16 %v3478
      %v3483 = vunpack.c.l.b16 %v3479
      %v3484 = vpack.c.b16 %v3483, %v3482
      %v3487 = vsel %vm3168, %v3473, 0
      %v3490 = vsel %vm3168, %v3474, 0
      %v3493 = vsel %vm3168, %v3475, 0
      %v3496 = vsel %vm3168, %v3476, 0
      %3498 = vmatprep.subr.bf16.mxu0 0
      %3499 = vmatpush1.bf16.msra.mxu0 %v3484
      %3500 = vmatprep.subr.bf16.mxu0 0
      %3501 = vmatpush1.bf16.msra.mxu0 0
      %3502 = vmatprep.subr.bf16.mxu0 0
      %3503 = vmatpush1.bf16.msra.mxu0 0
      %3504 = vmatprep.subr.bf16.mxu0 0
      %3505 = vmatpush1.bf16.msra.mxu0 0
      %3506 = vmatprep.subr.bf16.mxu0 0
      %3507 = vmatpush1.bf16.msra.mxu0 0
      %3508 = vmatprep.subr.bf16.mxu0 0
      %3509 = vmatpush1.bf16.msra.mxu0 0
      %3510 = vmatprep.subr.bf16.mxu0 0
      %3511 = vmatpush1.bf16.msra.mxu0 0
      %3512 = vmatprep.subr.bf16.mxu0 0
      %3513 = vmatpush1.bf16.msra.mxu0 0
      %3514 = vmatprep.subr.bf16.mxu0 0
      %3515 = vmatpush1.bf16.msra.mxu0 0
      %3516 = vmatprep.subr.bf16.mxu0 0
      %3517 = vmatpush1.bf16.msra.mxu0 0
      %3518 = vmatprep.subr.bf16.mxu0 0
      %3519 = vmatpush1.bf16.msra.mxu0 0
      %3520 = vmatprep.subr.bf16.mxu0 0
      %3521 = vmatpush1.bf16.msra.mxu0 0
      %3522 = vmatprep.subr.bf16.mxu0 0
      %3523 = vmatpush1.bf16.msra.mxu0 0
      %3524 = vmatprep.subr.bf16.mxu0 0
      %3525 = vmatpush1.bf16.msra.mxu0 0
      %3526 = vmatprep.subr.bf16.mxu0 0
      %3527 = vmatpush1.bf16.msra.mxu0 0
      %3528 = vmatprep.subr.bf16.mxu0 0
      %3529 = vmatpush1.bf16.msra.mxu0 0
      %3530 = vmatprep.mubr.bf16.mxu0 0
      %3531 = vmatmul.mubr.bf16.gmra.mrb[0].mxu0 %v3487
      %v3532 = vpop.f32.mrb[0].mxu0
      %v3533 = vadd.f32 0.0, %v3532
      %v3534 = vpop.f32.mrb[0].mxu0
      %v3535 = vpop.f32.mrb[0].mxu0
      %v3536 = vadd.f32 0.0, %v3535
      %v3537 = vpop.f32.mrb[0].mxu0
      %3538 = vmatprep.mubr.bf16.mxu0 0
      %3539 = vmatmul.mubr.bf16.gmra.mrb[0].mxu0 %v3490
      %v3540 = vpop.f32.mrb[0].mxu0
      %v3541 = vadd.f32 0.0, %v3540
      %v3542 = vpop.f32.mrb[0].mxu0
      %v3543 = vpop.f32.mrb[0].mxu0
      %v3544 = vadd.f32 0.0, %v3543
      %v3545 = vpop.f32.mrb[0].mxu0
      %3546 = vmatprep.mubr.bf16.mxu0 0
      %3547 = vmatmul.mubr.bf16.gmra.mrb[0].mxu0 %v3493
      %v3548 = vpop.f32.mrb[0].mxu0
      %v3549 = vadd.f32 0.0, %v3548
      %v3550 = vpop.f32.mrb[0].mxu0
      %v3551 = vpop.f32.mrb[0].mxu0
      %v3552 = vadd.f32 0.0, %v3551
      %v3553 = vpop.f32.mrb[0].mxu0
      %3554 = vmatprep.mubr.bf16.mxu0 0
      %3555 = vmatmul.mubr.bf16.gmra.mrb[0].mxu0 %v3496
      %v3556 = vpop.f32.mrb[0].mxu0
      %v3557 = vadd.f32 0.0, %v3556
      %v3558 = vpop.f32.mrb[0].mxu0
      %v3559 = vpop.f32.mrb[0].mxu0
      %v3560 = vadd.f32 0.0, %v3559
      %v3561 = vpop.f32.mrb[0].mxu0
      %3562 = vdwg.mxu0
      %v3563 = vadd.f32 %v3427, %v3533
      %v3564 = vadd.f32 %v3430, %v3536
      %v3565 = vadd.f32 %v3435, %v3541
      %v3566 = vadd.f32 %v3438, %v3544
      %v3567 = vadd.f32 %v3443, %v3549
      %v3568 = vadd.f32 %v3446, %v3552
      %v3569 = vadd.f32 %v3451, %v3557
      %v3570 = vadd.f32 %v3454, %v3560
      %v3571 = vld [vmem:[%s3214] ss:$2 sm:$0xff]
      %s3572 = scalar_lea.vmem %s3214, 48 [#allocation2]
      %v3573 = vld [vmem:[%s3572] ss:$2 sm:$0xff]
      %s3574 = scalar_lea.vmem %s3214, 96 [#allocation2]
      %v3575 = vld [vmem:[%s3574] ss:$2 sm:$0xff]
      %s3576 = scalar_lea.vmem %s3214, 144 [#allocation2]
      %v3577 = vld [vmem:[%s3576] ss:$2 sm:$0xff]
      %s3578 = scalar_lea.vmem %s3214, 192 [#allocation2]
      %v3579 = vld [vmem:[%s3578] ss:$2 sm:$0xff]
      %s3580 = scalar_lea.vmem %s3214, 240 [#allocation2]
      %v3581 = vld [vmem:[%s3580] ss:$2 sm:$0xff]
      %s3582 = scalar_lea.vmem %s3214, 288 [#allocation2]
      %v3583 = vld [vmem:[%s3582] ss:$2 sm:$0xff]
      %s3584 = scalar_lea.vmem %s3214, 336 [#allocation2]
      %v3585 = vld [vmem:[%s3584] ss:$2 sm:$0xff]
      %v3586 = vpack.c.bf16 %v3573, %v3571
      %v3587 = vpack.c.bf16 %v3577, %v3575
      %v3588 = vpack.c.bf16 %v3581, %v3579
      %v3589 = vpack.c.bf16 %v3585, %v3583
      %s3590 = scalar_lea.vmem %s3, 24
      %v3591 = vld [vmem:[%s3590] sm:$0xf]
      %v3592 = vld [vmem:[%s3590 + $0x4] sm:$0xf]
      %v3595 = vunpack.c.l.b16 %v3591
      %v3596 = vunpack.c.l.b16 %v3592
      %v3597 = vpack.c.b16 %v3596, %v3595
      %v3600 = vsel %vm3168, %v3586, 0
      %v3603 = vsel %vm3168, %v3587, 0
      %v3606 = vsel %vm3168, %v3588, 0
      %v3609 = vsel %vm3168, %v3589, 0
      %3611 = vmatprep.subr.bf16.mxu0 0
      %3612 = vmatpush1.bf16.msra.mxu0 %v3597
      %3613 = vmatprep.subr.bf16.mxu0 0
      %3614 = vmatpush1.bf16.msra.mxu0 0
      %3615 = vmatprep.subr.bf16.mxu0 0
      %3616 = vmatpush1.bf16.msra.mxu0 0
      %3617 = vmatprep.subr.bf16.mxu0 0
      %3618 = vmatpush1.bf16.msra.mxu0 0
      %3619 = vmatprep.subr.bf16.mxu0 0
      %3620 = vmatpush1.bf16.msra.mxu0 0
      %3621 = vmatprep.subr.bf16.mxu0 0
      %3622 = vmatpush1.bf16.msra.mxu0 0
      %3623 = vmatprep.subr.bf16.mxu0 0
      %3624 = vmatpush1.bf16.msra.mxu0 0
      %3625 = vmatprep.subr.bf16.mxu0 0
      %3626 = vmatpush1.bf16.msra.mxu0 0
      %3627 = vmatprep.subr.bf16.mxu0 0
      %3628 = vmatpush1.bf16.msra.mxu0 0
      %3629 = vmatprep.subr.bf16.mxu0 0
      %3630 = vmatpush1.bf16.msra.mxu0 0
      %3631 = vmatprep.subr.bf16.mxu0 0
      %3632 = vmatpush1.bf16.msra.mxu0 0
      %3633 = vmatprep.subr.bf16.mxu0 0
      %3634 = vmatpush1.bf16.msra.mxu0 0
      %3635 = vmatprep.subr.bf16.mxu0 0
      %3636 = vmatpush1.bf16.msra.mxu0 0
      %3637 = vmatprep.subr.bf16.mxu0 0
      %3638 = vmatpush1.bf16.msra.mxu0 0
      %3639 = vmatprep.subr.bf16.mxu0 0
      %3640 = vmatpush1.bf16.msra.mxu0 0
      %3641 = vmatprep.subr.bf16.mxu0 0
      %3642 = vmatpush1.bf16.msra.mxu0 0
      %3643 = vmatprep.mubr.bf16.mxu0 0
      %3644 = vmatmul.mubr.bf16.gmra.mrb[0].mxu0 %v3600
      %v3645 = vpop.f32.mrb[0].mxu0
      %v3646 = vadd.f32 0.0, %v3645
      %v3647 = vpop.f32.mrb[0].mxu0
      %v3648 = vpop.f32.mrb[0].mxu0
      %v3649 = vadd.f32 0.0, %v3648
      %v3650 = vpop.f32.mrb[0].mxu0
      %3651 = vmatprep.mubr.bf16.mxu0 0
      %3652 = vmatmul.mubr.bf16.gmra.mrb[0].mxu0 %v3603
      %v3653 = vpop.f32.mrb[0].mxu0
      %v3654 = vadd.f32 0.0, %v3653
      %v3655 = vpop.f32.mrb[0].mxu0
      %v3656 = vpop.f32.mrb[0].mxu0
      %v3657 = vadd.f32 0.0, %v3656
      %v3658 = vpop.f32.mrb[0].mxu0
      %3659 = vmatprep.mubr.bf16.mxu0 0
      %3660 = vmatmul.mubr.bf16.gmra.mrb[0].mxu0 %v3606
      %v3661 = vpop.f32.mrb[0].mxu0
      %v3662 = vadd.f32 0.0, %v3661
      %v3663 = vpop.f32.mrb[0].mxu0
      %v3664 = vpop.f32.mrb[0].mxu0
      %v3665 = vadd.f32 0.0, %v3664
      %v3666 = vpop.f32.mrb[0].mxu0
      %3667 = vmatprep.mubr.bf16.mxu0 0
      %3668 = vmatmul.mubr.bf16.gmra.mrb[0].mxu0 %v3609
      %v3669 = vpop.f32.mrb[0].mxu0
      %v3670 = vadd.f32 0.0, %v3669
      %v3671 = vpop.f32.mrb[0].mxu0
      %v3672 = vpop.f32.mrb[0].mxu0
      %v3673 = vadd.f32 0.0, %v3672
      %v3674 = vpop.f32.mrb[0].mxu0
      %3675 = vdwg.mxu0
      %v3676 = vadd.f32 %v3563, %v3646
      %v3677 = vadd.f32 %v3564, %v3649
      %v3678 = vadd.f32 %v3565, %v3654
      %v3679 = vadd.f32 %v3566, %v3657
      %v3680 = vadd.f32 %v3567, %v3662
      %v3681 = vadd.f32 %v3568, %v3665
      %v3682 = vadd.f32 %v3569, %v3670
      %v3683 = vadd.f32 %v3570, %v3673
      %s3684 = scalar_lea.vmem %s3214, 1 [#allocation2]
      %v3685 = vld [vmem:[%s3684] ss:$2 sm:$0xff]
      %s3686 = scalar_lea.vmem %s3214, 49 [#allocation2]
      %v3687 = vld [vmem:[%s3686] ss:$2 sm:$0xff]
      %s3688 = scalar_lea.vmem %s3214, 97 [#allocation2]
      %v3689 = vld [vmem:[%s3688] ss:$2 sm:$0xff]
      %s3690 = scalar_lea.vmem %s3214, 145 [#allocation2]
      %v3691 = vld [vmem:[%s3690] ss:$2 sm:$0xff]
      %s3692 = scalar_lea.vmem %s3214, 193 [#allocation2]
      %v3693 = vld [vmem:[%s3692] ss:$2 sm:$0xff]
      %s3694 = scalar_lea.vmem %s3214, 241 [#allocation2]
      %v3695 = vld [vmem:[%s3694] ss:$2 sm:$0xff]
      %s3696 = scalar_lea.vmem %s3214, 289 [#allocation2]
      %v3697 = vld [vmem:[%s3696] ss:$2 sm:$0xff]
      %s3698 = scalar_lea.vmem %s3214, 337 [#allocation2]
      %v3699 = vld [vmem:[%s3698] ss:$2 sm:$0xff]
      %v3700 = vpack.c.bf16 %v3687, %v3685
      %v3701 = vpack.c.bf16 %v3691, %v3689
      %v3702 = vpack.c.bf16 %v3695, %v3693
      %v3703 = vpack.c.bf16 %v3699, %v3697
      %s3704 = scalar_lea.vmem %s3, 32
      %v3705 = vld [vmem:[%s3704] sm:$0xf]
      %v3706 = vld [vmem:[%s3704 + $0x4] sm:$0xf]
      %v3709 = vunpack.c.l.b16 %v3705
      %v3710 = vunpack.c.l.b16 %v3706
      %v3711 = vpack.c.b16 %v3710, %v3709
      %v3714 = vsel %vm3168, %v3700, 0
      %v3717 = vsel %vm3168, %v3701, 0
      %v3720 = vsel %vm3168, %v3702, 0
      %v3723 = vsel %vm3168, %v3703, 0
      %3725 = vmatprep.subr.bf16.mxu0 0
      %3726 = vmatpush1.bf16.msra.mxu0 %v3711
      %3727 = vmatprep.subr.bf16.mxu0 0
      %3728 = vmatpush1.bf16.msra.mxu0 0
      %3729 = vmatprep.subr.bf16.mxu0 0
      %3730 = vmatpush1.bf16.msra.mxu0 0
      %3731 = vmatprep.subr.bf16.mxu0 0
      %3732 = vmatpush1.bf16.msra.mxu0 0
      %3733 = vmatprep.subr.bf16.mxu0 0
      %3734 = vmatpush1.bf16.msra.mxu0 0
      %3735 = vmatprep.subr.bf16.mxu0 0
      %3736 = vmatpush1.bf16.msra.mxu0 0
      %3737 = vmatprep.subr.bf16.mxu0 0
      %3738 = vmatpush1.bf16.msra.mxu0 0
      %3739 = vmatprep.subr.bf16.mxu0 0
      %3740 = vmatpush1.bf16.msra.mxu0 0
      %3741 = vmatprep.subr.bf16.mxu0 0
      %3742 = vmatpush1.bf16.msra.mxu0 0
      %3743 = vmatprep.subr.bf16.mxu0 0
      %3744 = vmatpush1.bf16.msra.mxu0 0
      %3745 = vmatprep.subr.bf16.mxu0 0
      %3746 = vmatpush1.bf16.msra.mxu0 0
      %3747 = vmatprep.subr.bf16.mxu0 0
      %3748 = vmatpush1.bf16.msra.mxu0 0
      %3749 = vmatprep.subr.bf16.mxu0 0
      %3750 = vmatpush1.bf16.msra.mxu0 0
      %3751 = vmatprep.subr.bf16.mxu0 0
      %3752 = vmatpush1.bf16.msra.mxu0 0
      %3753 = vmatprep.subr.bf16.mxu0 0
      %3754 = vmatpush1.bf16.msra.mxu0 0
      %3755 = vmatprep.subr.bf16.mxu0 0
      %3756 = vmatpush1.bf16.msra.mxu0 0
      %3757 = vmatprep.mubr.bf16.mxu0 0
      %3758 = vmatmul.mubr.bf16.gmra.mrb[0].mxu0 %v3714
      %v3759 = vpop.f32.mrb[0].mxu0
      %v3760 = vadd.f32 0.0, %v3759
      %v3761 = vpop.f32.mrb[0].mxu0
      %v3762 = vpop.f32.mrb[0].mxu0
      %v3763 = vadd.f32 0.0, %v3762
      %v3764 = vpop.f32.mrb[0].mxu0
      %3765 = vmatprep.mubr.bf16.mxu0 0
      %3766 = vmatmul.mubr.bf16.gmra.mrb[0].mxu0 %v3717
      %v3767 = vpop.f32.mrb[0].mxu0
      %v3768 = vadd.f32 0.0, %v3767
      %v3769 = vpop.f32.mrb[0].mxu0
      %v3770 = vpop.f32.mrb[0].mxu0
      %v3771 = vadd.f32 0.0, %v3770
      %v3772 = vpop.f32.mrb[0].mxu0
      %3773 = vmatprep.mubr.bf16.mxu0 0
      %3774 = vmatmul.mubr.bf16.gmra.mrb[0].mxu0 %v3720
      %v3775 = vpop.f32.mrb[0].mxu0
      %v3776 = vadd.f32 0.0, %v3775
      %v3777 = vpop.f32.mrb[0].mxu0
      %v3778 = vpop.f32.mrb[0].mxu0
      %v3779 = vadd.f32 0.0, %v3778
      %v3780 = vpop.f32.mrb[0].mxu0
      %3781 = vmatprep.mubr.bf16.mxu0 0
      %3782 = vmatmul.mubr.bf16.gmra.mrb[0].mxu0 %v3723
      %v3783 = vpop.f32.mrb[0].mxu0
      %v3784 = vadd.f32 0.0, %v3783
      %v3785 = vpop.f32.mrb[0].mxu0
      %v3786 = vpop.f32.mrb[0].mxu0
      %v3787 = vadd.f32 0.0, %v3786
      %v3788 = vpop.f32.mrb[0].mxu0
      %3789 = vdwg.mxu0
      %v3790 = vadd.f32 %v3676, %v3760
      %v3791 = vadd.f32 %v3677, %v3763
      %v3792 = vadd.f32 %v3678, %v3768
      %v3793 = vadd.f32 %v3679, %v3771
      %v3794 = vadd.f32 %v3680, %v3776
      %v3795 = vadd.f32 %v3681, %v3779
      %v3796 = vadd.f32 %v3682, %v3784
      %v3797 = vadd.f32 %v3683, %v3787
      %s3798 = scalar_lea.vmem %s3214, 2 [#allocation2]
      %v3799 = vld [vmem:[%s3798] ss:$2 sm:$0xff]
      %s3800 = scalar_lea.vmem %s3214, 50 [#allocation2]
      %v3801 = vld [vmem:[%s3800] ss:$2 sm:$0xff]
      %s3802 = scalar_lea.vmem %s3214, 98 [#allocation2]
      %v3803 = vld [vmem:[%s3802] ss:$2 sm:$0xff]
      %s3804 = scalar_lea.vmem %s3214, 146 [#allocation2]
      %v3805 = vld [vmem:[%s3804] ss:$2 sm:$0xff]
      %s3806 = scalar_lea.vmem %s3214, 194 [#allocation2]
      %v3807 = vld [vmem:[%s3806] ss:$2 sm:$0xff]
      %s3808 = scalar_lea.vmem %s3214, 242 [#allocation2]
      %v3809 = vld [vmem:[%s3808] ss:$2 sm:$0xff]
      %s3810 = scalar_lea.vmem %s3214, 290 [#allocation2]
      %v3811 = vld [vmem:[%s3810] ss:$2 sm:$0xff]
      %s3812 = scalar_lea.vmem %s3214, 338 [#allocation2]
      %v3813 = vld [vmem:[%s3812] ss:$2 sm:$0xff]
      %v3814 = vpack.c.bf16 %v3801, %v3799
      %v3815 = vpack.c.bf16 %v3805, %v3803
      %v3816 = vpack.c.bf16 %v3809, %v3807
      %v3817 = vpack.c.bf16 %v3813, %v3811
      %s3818 = scalar_lea.vmem %s3, 40
      %v3819 = vld [vmem:[%s3818] sm:$0xf]
      %v3820 = vld [vmem:[%s3818 + $0x4] sm:$0xf]
      %v3823 = vunpack.c.l.b16 %v3819
      %v3824 = vunpack.c.l.b16 %v3820
      %v3825 = vpack.c.b16 %v3824, %v3823
      %v3828 = vsel %vm3168, %v3814, 0
      %v3831 = vsel %vm3168, %v3815, 0
      %v3834 = vsel %vm3168, %v3816, 0
      %v3837 = vsel %vm3168, %v3817, 0
      %3839 = vmatprep.subr.bf16.mxu0 0
      %3840 = vmatpush1.bf16.msra.mxu0 %v3825
      %3841 = vmatprep.subr.bf16.mxu0 0
      %3842 = vmatpush1.bf16.msra.mxu0 0
      %3843 = vmatprep.subr.bf16.mxu0 0
      %3844 = vmatpush1.bf16.msra.mxu0 0
      %3845 = vmatprep.subr.bf16.mxu0 0
      %3846 = vmatpush1.bf16.msra.mxu0 0
      %3847 = vmatprep.subr.bf16.mxu0 0
      %3848 = vmatpush1.bf16.msra.mxu0 0
      %3849 = vmatprep.subr.bf16.mxu0 0
      %3850 = vmatpush1.bf16.msra.mxu0 0
      %3851 = vmatprep.subr.bf16.mxu0 0
      %3852 = vmatpush1.bf16.msra.mxu0 0
      %3853 = vmatprep.subr.bf16.mxu0 0
      %3854 = vmatpush1.bf16.msra.mxu0 0
      %3855 = vmatprep.subr.bf16.mxu0 0
      %3856 = vmatpush1.bf16.msra.mxu0 0
      %3857 = vmatprep.subr.bf16.mxu0 0
      %3858 = vmatpush1.bf16.msra.mxu0 0
      %3859 = vmatprep.subr.bf16.mxu0 0
      %3860 = vmatpush1.bf16.msra.mxu0 0
      %3861 = vmatprep.subr.bf16.mxu0 0
      %3862 = vmatpush1.bf16.msra.mxu0 0
      %3863 = vmatprep.subr.bf16.mxu0 0
      %3864 = vmatpush1.bf16.msra.mxu0 0
      %3865 = vmatprep.subr.bf16.mxu0 0
      %3866 = vmatpush1.bf16.msra.mxu0 0
      %3867 = vmatprep.subr.bf16.mxu0 0
      %3868 = vmatpush1.bf16.msra.mxu0 0
      %3869 = vmatprep.subr.bf16.mxu0 0
      %3870 = vmatpush1.bf16.msra.mxu0 0
      %3871 = vmatprep.mubr.bf16.mxu0 0
      %3872 = vmatmul.mubr.bf16.gmra.mrb[0].mxu0 %v3828
      %v3873 = vpop.f32.mrb[0].mxu0
      %v3874 = vadd.f32 0.0, %v3873
      %v3875 = vpop.f32.mrb[0].mxu0
      %v3876 = vpop.f32.mrb[0].mxu0
      %v3877 = vadd.f32 0.0, %v3876
      %v3878 = vpop.f32.mrb[0].mxu0
      %3879 = vmatprep.mubr.bf16.mxu0 0
      %3880 = vmatmul.mubr.bf16.gmra.mrb[0].mxu0 %v3831
      %v3881 = vpop.f32.mrb[0].mxu0
      %v3882 = vadd.f32 0.0, %v3881
      %v3883 = vpop.f32.mrb[0].mxu0
      %v3884 = vpop.f32.mrb[0].mxu0
      %v3885 = vadd.f32 0.0, %v3884
      %v3886 = vpop.f32.mrb[0].mxu0
      %3887 = vmatprep.mubr.bf16.mxu0 0
      %3888 = vmatmul.mubr.bf16.gmra.mrb[0].mxu0 %v3834
      %v3889 = vpop.f32.mrb[0].mxu0
      %v3890 = vadd.f32 0.0, %v3889
      %v3891 = vpop.f32.mrb[0].mxu0
      %v3892 = vpop.f32.mrb[0].mxu0
      %v3893 = vadd.f32 0.0, %v3892
      %v3894 = vpop.f32.mrb[0].mxu0
      %3895 = vmatprep.mubr.bf16.mxu0 0
      %3896 = vmatmul.mubr.bf16.gmra.mrb[0].mxu0 %v3837
      %v3897 = vpop.f32.mrb[0].mxu0
      %v3898 = vadd.f32 0.0, %v3897
      %v3899 = vpop.f32.mrb[0].mxu0
      %v3900 = vpop.f32.mrb[0].mxu0
      %v3901 = vadd.f32 0.0, %v3900
      %v3902 = vpop.f32.mrb[0].mxu0
      %3903 = vdwg.mxu0
      %v3904 = vadd.f32 %v3790, %v3874
      %v3905 = vadd.f32 %v3791, %v3877
      %v3906 = vadd.f32 %v3792, %v3882
      %v3907 = vadd.f32 %v3793, %v3885
      %v3908 = vadd.f32 %v3794, %v3890
      %v3909 = vadd.f32 %v3795, %v3893
      %v3910 = vadd.f32 %v3796, %v3898
      %v3911 = vadd.f32 %v3797, %v3901
      %s3912 = scalar_lea.vmem [#allocation2], 48
      %v3913 = vld [vmem:[%s3912] ss:$2 sm:$0xff]
      %s3914 = scalar_lea.vmem %s3912, 48 [#allocation2]
      %v3915 = vld [vmem:[%s3914] ss:$2 sm:$0xff]
      %s3916 = scalar_lea.vmem %s3912, 96 [#allocation2]
      %v3917 = vld [vmem:[%s3916] ss:$2 sm:$0xff]
      %s3918 = scalar_lea.vmem %s3912, 144 [#allocation2]
      %v3919 = vld [vmem:[%s3918] ss:$2 sm:$0xff]
      %s3920 = scalar_lea.vmem %s3912, 192 [#allocation2]
      %v3921 = vld [vmem:[%s3920] ss:$2 sm:$0xff]
      %s3922 = scalar_lea.vmem %s3912, 240 [#allocation2]
      %v3923 = vld [vmem:[%s3922] ss:$2 sm:$0xff]
      %s3924 = scalar_lea.vmem %s3912, 288 [#allocation2]
      %v3925 = vld [vmem:[%s3924] ss:$2 sm:$0xff]
      %s3926 = scalar_lea.vmem %s3912, 336 [#allocation2]
      %v3927 = vld [vmem:[%s3926] ss:$2 sm:$0xff]
      %v3928 = vpack.c.bf16 %v3915, %v3913
      %v3929 = vpack.c.bf16 %v3919, %v3917
      %v3930 = vpack.c.bf16 %v3923, %v3921
      %v3931 = vpack.c.bf16 %v3927, %v3925
      %s3932 = scalar_lea.vmem %s3, 48
      %v3933 = vld [vmem:[%s3932] sm:$0xf]
      %v3934 = vld [vmem:[%s3932 + $0x4] sm:$0xf]
      %v3937 = vunpack.c.l.b16 %v3933
      %v3938 = vunpack.c.l.b16 %v3934
      %v3939 = vpack.c.b16 %v3938, %v3937
      %v3942 = vsel %vm3168, %v3928, 0
      %v3945 = vsel %vm3168, %v3929, 0
      %v3948 = vsel %vm3168, %v3930, 0
      %v3951 = vsel %vm3168, %v3931, 0
      %3953 = vmatprep.subr.bf16.mxu0 0
      %3954 = vmatpush1.bf16.msra.mxu0 %v3939
      %3955 = vmatprep.subr.bf16.mxu0 0
      %3956 = vmatpush1.bf16.msra.mxu0 0
      %3957 = vmatprep.subr.bf16.mxu0 0
      %3958 = vmatpush1.bf16.msra.mxu0 0
      %3959 = vmatprep.subr.bf16.mxu0 0
      %3960 = vmatpush1.bf16.msra.mxu0 0
      %3961 = vmatprep.subr.bf16.mxu0 0
      %3962 = vmatpush1.bf16.msra.mxu0 0
      %3963 = vmatprep.subr.bf16.mxu0 0
      %3964 = vmatpush1.bf16.msra.mxu0 0
      %3965 = vmatprep.subr.bf16.mxu0 0
      %3966 = vmatpush1.bf16.msra.mxu0 0
      %3967 = vmatprep.subr.bf16.mxu0 0
      %3968 = vmatpush1.bf16.msra.mxu0 0
      %3969 = vmatprep.subr.bf16.mxu0 0
      %3970 = vmatpush1.bf16.msra.mxu0 0
      %3971 = vmatprep.subr.bf16.mxu0 0
      %3972 = vmatpush1.bf16.msra.mxu0 0
      %3973 = vmatprep.subr.bf16.mxu0 0
      %3974 = vmatpush1.bf16.msra.mxu0 0
      %3975 = vmatprep.subr.bf16.mxu0 0
      %3976 = vmatpush1.bf16.msra.mxu0 0
      %3977 = vmatprep.subr.bf16.mxu0 0
      %3978 = vmatpush1.bf16.msra.mxu0 0
      %3979 = vmatprep.subr.bf16.mxu0 0
      %3980 = vmatpush1.bf16.msra.mxu0 0
      %3981 = vmatprep.subr.bf16.mxu0 0
      %3982 = vmatpush1.bf16.msra.mxu0 0
      %3983 = vmatprep.subr.bf16.mxu0 0
      %3984 = vmatpush1.bf16.msra.mxu0 0
      %3985 = vmatprep.mubr.bf16.mxu0 0
      %3986 = vmatmul.mubr.bf16.gmra.mrb[0].mxu0 %v3942
      %v3987 = vpop.f32.mrb[0].mxu0
      %v3988 = vadd.f32 0.0, %v3987
      %v3989 = vpop.f32.mrb[0].mxu0
      %v3990 = vpop.f32.mrb[0].mxu0
      %v3991 = vadd.f32 0.0, %v3990
      %v3992 = vpop.f32.mrb[0].mxu0
      %3993 = vmatprep.mubr.bf16.mxu0 0
      %3994 = vmatmul.mubr.bf16.gmra.mrb[0].mxu0 %v3945
      %v3995 = vpop.f32.mrb[0].mxu0
      %v3996 = vadd.f32 0.0, %v3995
      %v3997 = vpop.f32.mrb[0].mxu0
      %v3998 = vpop.f32.mrb[0].mxu0
      %v3999 = vadd.f32 0.0, %v3998
      %v4000 = vpop.f32.mrb[0].mxu0
      %4001 = vmatprep.mubr.bf16.mxu0 0
      %4002 = vmatmul.mubr.bf16.gmra.mrb[0].mxu0 %v3948
      %v4003 = vpop.f32.mrb[0].mxu0
      %v4004 = vadd.f32 0.0, %v4003
      %v4005 = vpop.f32.mrb[0].mxu0
      %v4006 = vpop.f32.mrb[0].mxu0
      %v4007 = vadd.f32 0.0, %v4006
      %v4008 = vpop.f32.mrb[0].mxu0
      %4009 = vmatprep.mubr.bf16.mxu0 0
      %4010 = vmatmul.mubr.bf16.gmra.mrb[0].mxu0 %v3951
      %v4011 = vpop.f32.mrb[0].mxu0
      %v4012 = vadd.f32 0.0, %v4011
      %v4013 = vpop.f32.mrb[0].mxu0
      %v4014 = vpop.f32.mrb[0].mxu0
      %v4015 = vadd.f32 0.0, %v4014
      %v4016 = vpop.f32.mrb[0].mxu0
      %4017 = vdwg.mxu0
      %v4018 = vadd.f32 %v3904, %v3988
      %v4019 = vadd.f32 %v3905, %v3991
      %v4020 = vadd.f32 %v3906, %v3996
      %v4021 = vadd.f32 %v3907, %v3999
      %v4022 = vadd.f32 %v3908, %v4004
      %v4023 = vadd.f32 %v3909, %v4007
      %v4024 = vadd.f32 %v3910, %v4012
      %v4025 = vadd.f32 %v3911, %v4015
      %s4026 = scalar_lea.vmem %s3912, 1 [#allocation2]
      %v4027 = vld [vmem:[%s4026] ss:$2 sm:$0xff]
      %s4028 = scalar_lea.vmem %s3912, 49 [#allocation2]
      %v4029 = vld [vmem:[%s4028] ss:$2 sm:$0xff]
      %s4030 = scalar_lea.vmem %s3912, 97 [#allocation2]
      %v4031 = vld [vmem:[%s4030] ss:$2 sm:$0xff]
      %s4032 = scalar_lea.vmem %s3912, 145 [#allocation2]
      %v4033 = vld [vmem:[%s4032] ss:$2 sm:$0xff]
      %s4034 = scalar_lea.vmem %s3912, 193 [#allocation2]
      %v4035 = vld [vmem:[%s4034] ss:$2 sm:$0xff]
      %s4036 = scalar_lea.vmem %s3912, 241 [#allocation2]
      %v4037 = vld [vmem:[%s4036] ss:$2 sm:$0xff]
      %s4038 = scalar_lea.vmem %s3912, 289 [#allocation2]
      %v4039 = vld [vmem:[%s4038] ss:$2 sm:$0xff]
      %s4040 = scalar_lea.vmem %s3912, 337 [#allocation2]
      %v4041 = vld [vmem:[%s4040] ss:$2 sm:$0xff]
      %v4042 = vpack.c.bf16 %v4029, %v4027
      %v4043 = vpack.c.bf16 %v4033, %v4031
      %v4044 = vpack.c.bf16 %v4037, %v4035
      %v4045 = vpack.c.bf16 %v4041, %v4039
      %s4046 = scalar_lea.vmem %s3, 56
      %v4047 = vld [vmem:[%s4046] sm:$0xf]
      %v4048 = vld [vmem:[%s4046 + $0x4] sm:$0xf]
      %v4051 = vunpack.c.l.b16 %v4047
      %v4052 = vunpack.c.l.b16 %v4048
      %v4053 = vpack.c.b16 %v4052, %v4051
      %v4056 = vsel %vm3168, %v4042, 0
      %v4059 = vsel %vm3168, %v4043, 0
      %v4062 = vsel %vm3168, %v4044, 0
      %v4065 = vsel %vm3168, %v4045, 0
      %4067 = vmatprep.subr.bf16.mxu0 0
      %4068 = vmatpush1.bf16.msra.mxu0 %v4053
      %4069 = vmatprep.subr.bf16.mxu0 0
      %4070 = vmatpush1.bf16.msra.mxu0 0
      %4071 = vmatprep.subr.bf16.mxu0 0
      %4072 = vmatpush1.bf16.msra.mxu0 0
      %4073 = vmatprep.subr.bf16.mxu0 0
      %4074 = vmatpush1.bf16.msra.mxu0 0
      %4075 = vmatprep.subr.bf16.mxu0 0
      %4076 = vmatpush1.bf16.msra.mxu0 0
      %4077 = vmatprep.subr.bf16.mxu0 0
      %4078 = vmatpush1.bf16.msra.mxu0 0
      %4079 = vmatprep.subr.bf16.mxu0 0
      %4080 = vmatpush1.bf16.msra.mxu0 0
      %4081 = vmatprep.subr.bf16.mxu0 0
      %4082 = vmatpush1.bf16.msra.mxu0 0
      %4083 = vmatprep.subr.bf16.mxu0 0
      %4084 = vmatpush1.bf16.msra.mxu0 0
      %4085 = vmatprep.subr.bf16.mxu0 0
      %4086 = vmatpush1.bf16.msra.mxu0 0
      %4087 = vmatprep.subr.bf16.mxu0 0
      %4088 = vmatpush1.bf16.msra.mxu0 0
      %4089 = vmatprep.subr.bf16.mxu0 0
      %4090 = vmatpush1.bf16.msra.mxu0 0
      %4091 = vmatprep.subr.bf16.mxu0 0
      %4092 = vmatpush1.bf16.msra.mxu0 0
      %4093 = vmatprep.subr.bf16.mxu0 0
      %4094 = vmatpush1.bf16.msra.mxu0 0
      %4095 = vmatprep.subr.bf16.mxu0 0
      %4096 = vmatpush1.bf16.msra.mxu0 0
      %4097 = vmatprep.subr.bf16.mxu0 0
      %4098 = vmatpush1.bf16.msra.mxu0 0
      %4099 = vmatprep.mubr.bf16.mxu0 0
      %4100 = vmatmul.mubr.bf16.gmra.mrb[0].mxu0 %v4056
      %v4101 = vpop.f32.mrb[0].mxu0
      %v4102 = vadd.f32 0.0, %v4101
      %v4103 = vpop.f32.mrb[0].mxu0
      %v4104 = vpop.f32.mrb[0].mxu0
      %v4105 = vadd.f32 0.0, %v4104
      %v4106 = vpop.f32.mrb[0].mxu0
      %4107 = vmatprep.mubr.bf16.mxu0 0
      %4108 = vmatmul.mubr.bf16.gmra.mrb[0].mxu0 %v4059
      %v4109 = vpop.f32.mrb[0].mxu0
      %v4110 = vadd.f32 0.0, %v4109
      %v4111 = vpop.f32.mrb[0].mxu0
      %v4112 = vpop.f32.mrb[0].mxu0
      %v4113 = vadd.f32 0.0, %v4112
      %v4114 = vpop.f32.mrb[0].mxu0
      %4115 = vmatprep.mubr.bf16.mxu0 0
      %4116 = vmatmul.mubr.bf16.gmra.mrb[0].mxu0 %v4062
      %v4117 = vpop.f32.mrb[0].mxu0
      %v4118 = vadd.f32 0.0, %v4117
      %v4119 = vpop.f32.mrb[0].mxu0
      %v4120 = vpop.f32.mrb[0].mxu0
      %v4121 = vadd.f32 0.0, %v4120
      %v4122 = vpop.f32.mrb[0].mxu0
      %4123 = vmatprep.mubr.bf16.mxu0 0
      %4124 = vmatmul.mubr.bf16.gmra.mrb[0].mxu0 %v4065
      %v4125 = vpop.f32.mrb[0].mxu0
      %v4126 = vadd.f32 0.0, %v4125
      %v4127 = vpop.f32.mrb[0].mxu0
      %v4128 = vpop.f32.mrb[0].mxu0
      %v4129 = vadd.f32 0.0, %v4128
      %v4130 = vpop.f32.mrb[0].mxu0
      %4131 = vdwg.mxu0
      %v4132 = vadd.f32 %v4018, %v4102
      %v4133 = vadd.f32 %v4019, %v4105
      %v4134 = vadd.f32 %v4020, %v4110
      %v4135 = vadd.f32 %v4021, %v4113
      %v4136 = vadd.f32 %v4022, %v4118
      %v4137 = vadd.f32 %v4023, %v4121
      %v4138 = vadd.f32 %v4024, %v4126
      %v4139 = vadd.f32 %v4025, %v4129
      %s4140 = scalar_lea.vmem %s3912, 2 [#allocation2]
      %v4141 = vld [vmem:[%s4140] ss:$2 sm:$0xff]
      %s4142 = scalar_lea.vmem %s3912, 50 [#allocation2]
      %v4143 = vld [vmem:[%s4142] ss:$2 sm:$0xff]
      %s4144 = scalar_lea.vmem %s3912, 98 [#allocation2]
      %v4145 = vld [vmem:[%s4144] ss:$2 sm:$0xff]
      %s4146 = scalar_lea.vmem %s3912, 146 [#allocation2]
      %v4147 = vld [vmem:[%s4146] ss:$2 sm:$0xff]
      %s4148 = scalar_lea.vmem %s3912, 194 [#allocation2]
      %v4149 = vld [vmem:[%s4148] ss:$2 sm:$0xff]
      %s4150 = scalar_lea.vmem %s3912, 242 [#allocation2]
      %v4151 = vld [vmem:[%s4150] ss:$2 sm:$0xff]
      %s4152 = scalar_lea.vmem %s3912, 290 [#allocation2]
      %v4153 = vld [vmem:[%s4152] ss:$2 sm:$0xff]
      %s4154 = scalar_lea.vmem %s3912, 338 [#allocation2]
      %v4155 = vld [vmem:[%s4154] ss:$2 sm:$0xff]
      %v4156 = vpack.c.bf16 %v4143, %v4141
      %v4157 = vpack.c.bf16 %v4147, %v4145
      %v4158 = vpack.c.bf16 %v4151, %v4149
      %v4159 = vpack.c.bf16 %v4155, %v4153
      %s4160 = scalar_lea.vmem %s3, 64
      %v4161 = vld [vmem:[%s4160] sm:$0xf]
      %v4162 = vld [vmem:[%s4160 + $0x4] sm:$0xf]
      %v4165 = vunpack.c.l.b16 %v4161
      %v4166 = vunpack.c.l.b16 %v4162
      %v4167 = vpack.c.b16 %v4166, %v4165
      %v4170 = vsel %vm3168, %v4156, 0
      %v4173 = vsel %vm3168, %v4157, 0
      %v4176 = vsel %vm3168, %v4158, 0
      %v4179 = vsel %vm3168, %v4159, 0
      %4181 = vmatprep.subr.bf16.mxu0 0
      %4182 = vmatpush1.bf16.msra.mxu0 %v4167
      %4183 = vmatprep.subr.bf16.mxu0 0
      %4184 = vmatpush1.bf16.msra.mxu0 0
      %4185 = vmatprep.subr.bf16.mxu0 0
      %4186 = vmatpush1.bf16.msra.mxu0 0
      %4187 = vmatprep.subr.bf16.mxu0 0
      %4188 = vmatpush1.bf16.msra.mxu0 0
      %4189 = vmatprep.subr.bf16.mxu0 0
      %4190 = vmatpush1.bf16.msra.mxu0 0
      %4191 = vmatprep.subr.bf16.mxu0 0
      %4192 = vmatpush1.bf16.msra.mxu0 0
      %4193 = vmatprep.subr.bf16.mxu0 0
      %4194 = vmatpush1.bf16.msra.mxu0 0
      %4195 = vmatprep.subr.bf16.mxu0 0
      %4196 = vmatpush1.bf16.msra.mxu0 0
      %4197 = vmatprep.subr.bf16.mxu0 0
      %4198 = vmatpush1.bf16.msra.mxu0 0
      %4199 = vmatprep.subr.bf16.mxu0 0
      %4200 = vmatpush1.bf16.msra.mxu0 0
      %4201 = vmatprep.subr.bf16.mxu0 0
      %4202 = vmatpush1.bf16.msra.mxu0 0
      %4203 = vmatprep.subr.bf16.mxu0 0
      %4204 = vmatpush1.bf16.msra.mxu0 0
      %4205 = vmatprep.subr.bf16.mxu0 0
      %4206 = vmatpush1.bf16.msra.mxu0 0
      %4207 = vmatprep.subr.bf16.mxu0 0
      %4208 = vmatpush1.bf16.msra.mxu0 0
      %4209 = vmatprep.subr.bf16.mxu0 0
      %4210 = vmatpush1.bf16.msra.mxu0 0
      %4211 = vmatprep.subr.bf16.mxu0 0
      %4212 = vmatpush1.bf16.msra.mxu0 0
      %4213 = vmatprep.mubr.bf16.mxu0 0
      %4214 = vmatmul.mubr.bf16.gmra.mrb[0].mxu0 %v4170
      %v4215 = vpop.f32.mrb[0].mxu0
      %v4216 = vadd.f32 0.0, %v4215
      %v4217 = vpop.f32.mrb[0].mxu0
      %v4218 = vpop.f32.mrb[0].mxu0
      %v4219 = vadd.f32 0.0, %v4218
      %v4220 = vpop.f32.mrb[0].mxu0
      %4221 = vmatprep.mubr.bf16.mxu0 0
      %4222 = vmatmul.mubr.bf16.gmra.mrb[0].mxu0 %v4173
      %v4223 = vpop.f32.mrb[0].mxu0
      %v4224 = vadd.f32 0.0, %v4223
      %v4225 = vpop.f32.mrb[0].mxu0
      %v4226 = vpop.f32.mrb[0].mxu0
      %v4227 = vadd.f32 0.0, %v4226
      %v4228 = vpop.f32.mrb[0].mxu0
      %4229 = vmatprep.mubr.bf16.mxu0 0
      %4230 = vmatmul.mubr.bf16.gmra.mrb[0].mxu0 %v4176
      %v4231 = vpop.f32.mrb[0].mxu0
      %v4232 = vadd.f32 0.0, %v4231
      %v4233 = vpop.f32.mrb[0].mxu0
      %v4234 = vpop.f32.mrb[0].mxu0
      %v4235 = vadd.f32 0.0, %v4234
      %v4236 = vpop.f32.mrb[0].mxu0
      %4237 = vmatprep.mubr.bf16.mxu0 0
      %4238 = vmatmul.mubr.bf16.gmra.mrb[0].mxu0 %v4179
      %v4239 = vpop.f32.mrb[0].mxu0
      %v4240 = vadd.f32 0.0, %v4239
      %v4241 = vpop.f32.mrb[0].mxu0
      %v4242 = vpop.f32.mrb[0].mxu0
      %v4243 = vadd.f32 0.0, %v4242
      %v4244 = vpop.f32.mrb[0].mxu0
      %4245 = vdwg.mxu0
      %v4246 = vadd.f32 %v4132, %v4216
      %v4247 = vadd.f32 %v4133, %v4219
      %v4248 = vadd.f32 %v4134, %v4224
      %v4249 = vadd.f32 %v4135, %v4227
      %v4250 = vadd.f32 %v4136, %v4232
      %v4251 = vadd.f32 %v4137, %v4235
      %v4252 = vadd.f32 %v4138, %v4240
      %v4253 = vadd.f32 %v4139, %v4243
      %v4254 = vld [vmem:[%s4] sm:$0x1]
      %v4256 = vlaneseq
      %v4257 = vshrl.u32 %v4256, 7
      %v4258 = vsub.s32 0, %v4257
      %v4259 = vrot.slane %v4254, %v4258
      %v4261 = vadd.f32 %v4246, %v4259
      %v4262 = vadd.f32 %v4247, %v4259
      %v4263 = vadd.f32 %v4248, %v4259
      %v4264 = vadd.f32 %v4249, %v4259
      %v4265 = vadd.f32 %v4250, %v4259
      %v4266 = vadd.f32 %v4251, %v4259
      %v4267 = vadd.f32 %v4252, %v4259
      %v4268 = vadd.f32 %v4253, %v4259
      %v4269 = vsub.f32 0.0, %v4261
      %v4270 = vsub.f32 0.0, %v4262
      %v4271 = vsub.f32 0.0, %v4263
      %v4272 = vsub.f32 0.0, %v4264
      %v4273 = vsub.f32 0.0, %v4265
      %v4274 = vsub.f32 0.0, %v4266
      %v4275 = vsub.f32 0.0, %v4267
      %v4276 = vsub.f32 0.0, %v4268
      %v4277 = vmul.f32 %v4269, 1.442695
      %v4278 = vpow.pop %v4277
      %v4279 = vmul.f32 %v4270, 1.442695
      %v4280 = vpow.pop %v4279
      %v4281 = vmul.f32 %v4271, 1.442695
      %v4282 = vpow.pop %v4281
      %v4283 = vmul.f32 %v4272, 1.442695
      %v4284 = vpow.pop %v4283
      %v4285 = vmul.f32 %v4273, 1.442695
      %v4286 = vpow.pop %v4285
      %v4287 = vmul.f32 %v4274, 1.442695
      %v4288 = vpow.pop %v4287
      %v4289 = vmul.f32 %v4275, 1.442695
      %v4290 = vpow.pop %v4289
      %v4291 = vmul.f32 %v4276, 1.442695
      %v4292 = vpow.pop %v4291
      %v4293 = vadd.f32 %v4278, 1.0
      %v4294 = vadd.f32 %v4280, 1.0
      %v4295 = vadd.f32 %v4282, 1.0
      %v4296 = vadd.f32 %v4284, 1.0
      %v4297 = vadd.f32 %v4286, 1.0
      %v4298 = vadd.f32 %v4288, 1.0
      %v4299 = vadd.f32 %v4290, 1.0
      %v4300 = vadd.f32 %v4292, 1.0
      %v4301 = vrcp.pop %v4293
      %v4302 = vrcp.pop %v4294
      %v4303 = vrcp.pop %v4295
      %v4304 = vrcp.pop %v4296
      %v4305 = vrcp.pop %v4297
      %v4306 = vrcp.pop %v4298
      %v4307 = vrcp.pop %v4299
      %v4308 = vrcp.pop %v4300
      %4309 = vxpose.xlu0.b32.start [1/16] %v4301, 128
      %4310 = vxpose.xlu0.b32.cont [2/16] %v4302, 128
      %4311 = vxpose.xlu0.b32.cont [3/16] %v4303, 128
      %4312 = vxpose.xlu0.b32.cont [4/16] %v4304, 128
      %4313 = vxpose.xlu0.b32.cont [5/16] %v4305, 128
      %4314 = vxpose.xlu0.b32.cont [6/16] %v4306, 128
      %4315 = vxpose.xlu0.b32.cont [7/16] %v4307, 128
      %4316 = vxpose.xlu0.b32.cont [8/16] %v4308, 128
      %4317 = vxpose.xlu0.b32.cont [9/16] 0.0, 128
      %4318 = vxpose.xlu0.b32.cont [10/16] 0.0, 128
      %4319 = vxpose.xlu0.b32.cont [11/16] 0.0, 128
      %4320 = vxpose.xlu0.b32.cont [12/16] 0.0, 128
      %4321 = vxpose.xlu0.b32.cont [13/16] 0.0, 128
      %4322 = vxpose.xlu0.b32.cont [14/16] 0.0, 128
      %4323 = vxpose.xlu0.b32.cont [15/16] 0.0, 128
      %4324 = vxpose.xlu0.b32.end [16/16] 0.0, 128
      %v4325 = vpop.trf.xlu0
      %v4326 = vpop.trf.xlu0
      %v4327 = vpop.trf.xlu0
      %v4328 = vpop.trf.xlu0
      %v4329 = vpop.trf.xlu0
      %v4330 = vpop.trf.xlu0
      %v4331 = vpop.trf.xlu0
      %v4332 = vpop.trf.xlu0
      %v4333 = vpop.trf.xlu0
      %v4334 = vpop.trf.xlu0
      %v4335 = vpop.trf.xlu0
      %v4336 = vpop.trf.xlu0
      %v4337 = vpop.trf.xlu0
      %v4338 = vpop.trf.xlu0
      %v4339 = vpop.trf.xlu0
      %v4340 = vpop.trf.xlu0
      %vm4341 = vcmask 523264
      %4342 = vst.msk [vmem:[%s222] sm:$0xff] %vm4341, %v4325
      %p4343 = scmp.lt.s32.totalorder %s16, 1
      %s4344 = scalar_select %p4343, %s16, 1
      %s4345 = smul.addr %s4344, 8
      %s4346 = scalar_lea.vmem %s5, %s4345
      // Predicated region
      $region41: #{color_encoder_forward.1} parent=39 // pred_check
        %p4347 = pneg %p144
      $region42: #{color_encoder_forward.1} parent=39 // pred_check_branch
        %4349 = sbr.rel (%p4347) target = $region44
      $region43: #{color_encoder_forward.1} parent=39 // pred_region
        _
      $region44: #{color_encoder_forward.1} parent=39 // pred_fallthru
        _
    $region40: #{color_encoder_forward.1} parent=5 // pred_fallthru
      _
    %p4350 = scmp.le.s32.totalorder 2, %s11
    // Predicated region
    $region45: #{color_encoder_forward.1} parent=5 // pred_check
      %p4351 = pneg %p4350
    $region46: #{color_encoder_forward.1} parent=5 // pred_check_branch
      %4353 = sbr.rel (%p4351) target = $region48
    $region47: #{color_encoder_forward.1} parent=5 // pred_region
      %s4354 = ssub.s32 %s11, 2
      // Predicated region
      $region49: #{color_encoder_forward.1} parent=47 // pred_check
        %p4355 = pneg %p150
      $region50: #{color_encoder_forward.1} parent=47 // pred_check_branch
        %4357 = sbr.rel (%p4355) target = $region52
      $region51: #{color_encoder_forward.1} parent=47 // pred_region
        %p4358 = scmp.lt.s32.totalorder %s17, 1
        %s4359 = scalar_select %p4358, %s17, 1
        %s4360 = smul.addr %s4359, 8
        %s4361 = scalar_lea.vmem %s5, %s4360
      $region52: #{color_encoder_forward.1} parent=47 // pred_fallthru
        _
    $region48: #{color_encoder_forward.1} parent=5 // pred_fallthru
      _
  $region6: #{color_encoder_forward.1} parent=0 // loop_footer
    %s15 = sadd.s32 1, %s11
  $region7: #{color_encoder_forward.1} parent=0 // loop_footer_branch
    %10 = sbr.rel target = $region3
  $region8: #{color_encoder_forward.1} parent=0 // loop_exit
    _

</llo_original>
